<compile_context>
chip_gen: v7x
topology: tpu7x:2x2x1
jax: 0.10.0
libtpu: 0.0.40
codegen_flags: <defaults>
</compile_context>

<pallas_src>
import math

import jax
import jax.numpy as jnp
from jax.experimental import pallas as pl
from jax.experimental.pallas import tpu as pltpu

# ----------------------------- model constants ------------------------------
NUM_ROI = 16          # args.num_roi (small for the demo)
HIDDEN = 256          # hidden_dim (hard-coded in the module)
NODE_DIM = 8          # node_dim for pooling == 'concat'
FC_OUT = 2
BATCH = 2
LEAKY_SLOPE = 0.2
BN_EPS = 1e-5


# --------------------------------- kernel ------------------------------------
def _braingb_kernel(
    x_ref, a_ref, deg_ref,
    # block 1: MPGCNConv + Linear(H,H) + LeakyReLU + BatchNorm1d(H)
    wg1_ref, wi1_ref, wj1_ref, be1_ref, wl1_ref, bl1_ref, g1_ref, b1_ref,
    # block 2: MPGCNConv + Linear(H,64) + LeakyReLU + Linear(64,8) + LeakyReLU + BN(8)
    wg2_ref, wi2_ref, wj2_ref, be2_ref, wl2a_ref, bl2a_ref, wl2b_ref, bl2b_ref,
    g2_ref, b2_ref,
    # fcn head: Linear(N*8,256) + LeakyReLU + Linear(256,32) + LeakyReLU + Linear(32,2)
    wf1n_ref, bf1_ref, wf2_ref, bf2_ref, wf3_ref, bf3_ref,
    # outputs
    logits_ref, feats_ref,
):
    f32 = jnp.float32
    bf16 = jnp.bfloat16
    B, N, ND = feats_ref.shape
    BN = B * N

    a_blk = a_ref[...]                                   # [BN, BN] bf16 block-diag A^T (0/1)
    # deg broadcast hoisted once (JAX does not CSE broadcast_in_dim) and reused by
    # both MPGCN layers; both GCNConv outputs are HIDDEN wide.
    deg_b = jnp.broadcast_to(deg_ref[...], (BN, HIDDEN))  # [BN, H] f32

    def dot(v, w_ref):
        # bf16 x bf16 on the MXU, f32 accumulation.
        return jnp.dot(v.astype(bf16), w_ref[...], preferred_element_type=f32)

    def leaky(v):
        # 2 VPU ops/elem instead of cmp+mul+select.
        return jnp.maximum(v, LEAKY_SLOPE * v)

    def batchnorm(v, g_ref, b_ref):
        # training-mode batch stats over all B*N node rows, f32 math; gamma folded
        # into the per-feature scale before the [BN, C] broadcast.
        mu = jnp.mean(v, axis=0, keepdims=True)
        var = jnp.mean(jnp.square(v - mu), axis=0, keepdims=True)
        scale = g_ref[...] * jax.lax.rsqrt(var + BN_EPS)
        return (v - mu) * scale + b_ref[...]

    def mpgcn(z, wg_ref, wi_ref, wj_ref, be_ref):
        h = dot(z, wg_ref)                               # GCNConv.lin          [BN, H] f32
        hb = h.astype(bf16)
        nbr = jnp.dot(a_blk, hb, preferred_element_type=f32)   # neighbor sum   [BN, H] f32
        # sum_j edge_lin([h_i, h_j]) = deg_i*(h_i@Wi + b_e) + (sum_j h_j)@Wj
        self_term = jnp.dot(hb, wi_ref[...], preferred_element_type=f32) + be_ref[...]
        nbr_term = dot(nbr, wj_ref)
        return deg_b * self_term + nbr_term

    # ---- conv block 1 ----
    z = mpgcn(x_ref[...], wg1_ref, wi1_ref, wj1_ref, be1_ref)
    z = batchnorm(leaky(dot(z, wl1_ref) + bl1_ref[...]), g1_ref, b1_ref)

    # ---- conv block 2 (pooling == 'concat' head block) ----
    z = mpgcn(z, wg2_ref, wi2_ref, wj2_ref, be2_ref)
    z = leaky(dot(z, wl2a_ref) + bl2a_ref[...])
    z = leaky(dot(z, wl2b_ref) + bl2b_ref[...])
    z = batchnorm(z, g2_ref, b2_ref)                     # [BN, ND]

    # ---- concat pooling: one store, no read-back (no serialized vst.msk chain) ----
    z3 = z.reshape(B, N, ND)                             # leading-dim reshape only
    feats_ref[...] = z3                                  # [B, N, ND]; wrapper flattens for free

    # ---- fcn head, fused; consumes z3 directly so no in-kernel lane relayout ----
    # feats @ Wf1 == sum_i z3[:, i, :] @ Wf1[i*ND:(i+1)*ND, :]; Wf1 pre-grouped per node.
    h1 = bf1_ref[...]                                    # [1, 256] f32, broadcast on first add
    for i in range(N):                                   # static unroll, independent tiny matmuls
        zi = z3[:, i, :].astype(bf16)                    # [B, ND]
        h1 = h1 + jnp.dot(zi, wf1n_ref[i], preferred_element_type=f32)
    h1 = leaky(h1)
    h2 = leaky(dot(h1, wf2_ref) + bf2_ref[...])
    logits_ref[...] = dot(h2, wf3_ref) + bf3_ref[...]


# ------------------------------- parameters ---------------------------------
def _uniform(key, shape, fan_in):
    bound = 1.0 / math.sqrt(fan_in)
    return jax.random.uniform(key, shape, jnp.float32, -bound, bound)


def init_params(key):
    ks = iter(jax.random.split(key, 32))
    bf16 = jnp.bfloat16
    p = {}

    # --- block 1: MPGCNConv(NUM_ROI -> HIDDEN), Linear(H,H), BN(H) ---
    p["wg1"] = _uniform(next(ks), (NUM_ROI, HIDDEN), NUM_ROI).astype(bf16)   # GCNConv.lin^T
    p["wi1"] = _uniform(next(ks), (HIDDEN, HIDDEN), 2 * HIDDEN).astype(bf16)  # edge_lin x_i half^T
    p["wj1"] = _uniform(next(ks), (HIDDEN, HIDDEN), 2 * HIDDEN).astype(bf16)  # edge_lin x_j half^T
    p["be1"] = _uniform(next(ks), (1, HIDDEN), 2 * HIDDEN)
    p["wl1"] = _uniform(next(ks), (HIDDEN, HIDDEN), HIDDEN).astype(bf16)
    p["bl1"] = _uniform(next(ks), (1, HIDDEN), HIDDEN)
    p["g1"] = jnp.ones((1, HIDDEN), jnp.float32)
    p["b1"] = jnp.zeros((1, HIDDEN), jnp.float32)

    # --- block 2: MPGCNConv(H -> H), Linear(H,64), Linear(64,8), BN(8) ---
    p["wg2"] = _uniform(next(ks), (HIDDEN, HIDDEN), HIDDEN).astype(bf16)
    p["wi2"] = _uniform(next(ks), (HIDDEN, HIDDEN), 2 * HIDDEN).astype(bf16)
    p["wj2"] = _uniform(next(ks), (HIDDEN, HIDDEN), 2 * HIDDEN).astype(bf16)
    p["be2"] = _uniform(next(ks), (1, HIDDEN), 2 * HIDDEN)
    p["wl2a"] = _uniform(next(ks), (HIDDEN, 64), HIDDEN).astype(bf16)
    p["bl2a"] = _uniform(next(ks), (1, 64), HIDDEN)
    p["wl2b"] = _uniform(next(ks), (64, NODE_DIM), 64).astype(bf16)
    p["bl2b"] = _uniform(next(ks), (1, NODE_DIM), 64)
    p["g2"] = jnp.ones((1, NODE_DIM), jnp.float32)
    p["b2"] = jnp.zeros((1, NODE_DIM), jnp.float32)

    # --- fcn: Linear(N*8, 256) -> Linear(256, 32) -> Linear(32, 2) ---
    in_dim = NODE_DIM * NUM_ROI
    p["wf1"] = _uniform(next(ks), (in_dim, 256), in_dim).astype(bf16)
    p["bf1"] = _uniform(next(ks), (1, 256), in_dim)
    p["wf2"] = _uniform(next(ks), (256, 32), 256).astype(bf16)
    p["bf2"] = _uniform(next(ks), (1, 32), 256)
    p["wf3"] = _uniform(next(ks), (32, FC_OUT), 32).astype(bf16)
    p["bf3"] = _uniform(next(ks), (1, FC_OUT), 32)
    return p


# ------------------------------- forward ------------------------------------
def braingb_forward(m, corr, p):
    """m: [B, N, N] sparse_connection, corr: [B, N, N] node features."""
    B, N, _ = m.shape
    BN = B * N
    H = HIDDEN
    ND = NODE_DIM

    # transform_data: x = corr flattened over graphs.
    x = corr.reshape(BN, N).astype(jnp.float32)

    # gcn_norm topology (pure jnp, no scatter): off-diagonal nonzeros of m plus exactly
    # one self loop per node; transpose to [tgt, src].  |edge_attr| never enters the
    # node_concate message so it is not materialized.
    eye_n = jnp.eye(N, dtype=bool)
    at = jnp.swapaxes(jnp.where(eye_n, 1.0, (m != 0).astype(jnp.float32)), 1, 2)  # [B, tgt, src]
    # Block-diagonal [BN, BN] adjacency so the in-kernel aggregation is one MXU matmul.
    at_blk = jnp.einsum("bts,bc->btcs", at, jnp.eye(B, dtype=jnp.float32)).reshape(BN, BN)
    deg = jnp.sum(at_blk, axis=1, keepdims=True)          # [BN, 1] in-degree incl. self loop
    at_blk16 = at_blk.astype(jnp.bfloat16)                # exact 0/1

    # fcn first-layer weight grouped per node: feats @ Wf1 == sum_i z3[:, i, :] @ wf1n[i].
    wf1n = p["wf1"].reshape(N, ND, 256)

    vmem = pl.BlockSpec(memory_space=pltpu.MemorySpace.VMEM)

    inputs = (
        x, at_blk16, deg,
        p["wg1"], p["wi1"], p["wj1"], p["be1"], p["wl1"], p["bl1"], p["g1"], p["b1"],
        p["wg2"], p["wi2"], p["wj2"], p["be2"], p["wl2a"], p["bl2a"], p["wl2b"], p["bl2b"],
        p["g2"], p["b2"],
        wf1n, p["bf1"], p["wf2"], p["bf2"], p["wf3"], p["bf3"],
    )

    # Advisory cost estimate so XLA schedules the custom call sensibly.
    flops = 2 * BN * (N * H + BN * H + 2 * H * H + H * H)                     # block 1
    flops += 2 * BN * (H * H + BN * H + 2 * H * H + H * 64 + 64 * ND)         # block 2
    flops += 2 * B * (N * ND * 256 + 256 * 32 + 32 * FC_OUT)                  # fcn head
    bytes_accessed = sum(int(a.size) * a.dtype.itemsize for a in inputs)
    bytes_accessed += (B * FC_OUT + B * N * ND) * 4

    logits, feats3 = pl.pallas_call(
        _braingb_kernel,
        out_shape=(
            jax.ShapeDtypeStruct((B, FC_OUT), jnp.float32),
            jax.ShapeDtypeStruct((B, N, ND), jnp.float32),
        ),
        in_specs=[vmem] * len(inputs),
        out_specs=(vmem, vmem),
        cost_estimate=pl.CostEstimate(
            flops=flops, transcendentals=0, bytes_accessed=bytes_accessed),
    )(*inputs)

    # Contiguous (metadata-only) reshape to the module's [B, N*8] feature layout.
    feats = feats3.reshape(B, N * ND)
    return logits, feats


# --------------------------------- main --------------------------------------
if __name__ == "__main__":
    key = jax.random.PRNGKey(0)
    k_param, k_corr, k_m = jax.random.split(key, 3)

    params = init_params(k_param)

    corr = jax.random.normal(k_corr, (BATCH, NUM_ROI, NUM_ROI), jnp.float32)
    m_dense = jax.random.normal(k_m, (BATCH, NUM_ROI, NUM_ROI), jnp.float32)
    # sparse connectivity: keep ~40% of entries
    sparse_connection = jnp.where(jnp.abs(m_dense) > 0.8, m_dense, 0.0)

    fwd = jax.jit(braingb_forward)
    logits, feats = fwd(sparse_connection, corr, params)
    jax.block_until_ready((logits, feats))

    assert logits.shape == (BATCH, FC_OUT)
    assert feats.shape == (BATCH, NUM_ROI * NODE_DIM)
    assert bool(jnp.all(jnp.isfinite(logits)))
    assert bool(jnp.all(jnp.isfinite(feats)))
    print("KERNEL_OK")
</pallas_src>

<mosaic_0001>
module attributes {stable_mosaic.version = 11 : i64} {
  func.func @_braingb_kernel(%arg0: memref<32x16xf32, #tpu.memory_space<vmem>>, %arg1: memref<32x32xbf16, #tpu.memory_space<vmem>>, %arg2: memref<32x1xf32, #tpu.memory_space<vmem>>, %arg3: memref<16x256xbf16, #tpu.memory_space<vmem>>, %arg4: memref<256x256xbf16, #tpu.memory_space<vmem>>, %arg5: memref<256x256xbf16, #tpu.memory_space<vmem>>, %arg6: memref<1x256xf32, #tpu.memory_space<vmem>>, %arg7: memref<256x256xbf16, #tpu.memory_space<vmem>>, %arg8: memref<1x256xf32, #tpu.memory_space<vmem>>, %arg9: memref<1x256xf32, #tpu.memory_space<vmem>>, %arg10: memref<1x256xf32, #tpu.memory_space<vmem>>, %arg11: memref<256x256xbf16, #tpu.memory_space<vmem>>, %arg12: memref<256x256xbf16, #tpu.memory_space<vmem>>, %arg13: memref<256x256xbf16, #tpu.memory_space<vmem>>, %arg14: memref<1x256xf32, #tpu.memory_space<vmem>>, %arg15: memref<256x64xbf16, #tpu.memory_space<vmem>>, %arg16: memref<1x64xf32, #tpu.memory_space<vmem>>, %arg17: memref<64x8xbf16, #tpu.memory_space<vmem>>, %arg18: memref<1x8xf32, #tpu.memory_space<vmem>>, %arg19: memref<1x8xf32, #tpu.memory_space<vmem>>, %arg20: memref<1x8xf32, #tpu.memory_space<vmem>>, %arg21: memref<16x8x256xbf16, #tpu.memory_space<vmem>>, %arg22: memref<1x256xf32, #tpu.memory_space<vmem>>, %arg23: memref<256x32xbf16, #tpu.memory_space<vmem>>, %arg24: memref<1x32xf32, #tpu.memory_space<vmem>>, %arg25: memref<32x2xbf16, #tpu.memory_space<vmem>>, %arg26: memref<1x2xf32, #tpu.memory_space<vmem>>, %arg27: memref<2x2xf32, #tpu.memory_space<vmem>>, %arg28: memref<2x16x8xf32, #tpu.memory_space<vmem>>) attributes {dimension_semantics = [], scalar_prefetch = 0 : i64, scratch_operands = 0 : i64, tpu.core_type = #tpu.core_type<tc>} {
    %c0 = arith.constant 0 : index
    %c0_0 = arith.constant 0 : index
    %0 = vector.load %arg1[%c0, %c0_0] : memref<32x32xbf16, #tpu.memory_space<vmem>>, vector<32x32xbf16>
    %c0_1 = arith.constant 0 : index
    %c0_2 = arith.constant 0 : index
    %1 = vector.load %arg2[%c0_1, %c0_2] : memref<32x1xf32, #tpu.memory_space<vmem>>, vector<32x1xf32>
    %2 = vector.shape_cast %1 : vector<32x1xf32> to vector<32x1xf32>
    %3 = vector.broadcast %2 : vector<32x1xf32> to vector<32x256xf32>
    %c0_3 = arith.constant 0 : index
    %c0_4 = arith.constant 0 : index
    %4 = vector.load %arg0[%c0_3, %c0_4] : memref<32x16xf32, #tpu.memory_space<vmem>>, vector<32x16xf32>
    %5 = arith.truncf %4 : vector<32x16xf32> to vector<32x16xbf16>
    %c0_5 = arith.constant 0 : index
    %c0_6 = arith.constant 0 : index
    %6 = vector.load %arg3[%c0_5, %c0_6] : memref<16x256xbf16, #tpu.memory_space<vmem>>, vector<16x256xbf16>
    %cst = arith.constant dense<0.000000e+00> : vector<32x256xf32>
    %7 = tpu.matmul %5, %6, %cst {dimension_numbers = #tpu.dot_dimension_numbers<[1], [0], [0], [1], [0, 0, 1, 1], [], []>} : vector<32x16xbf16>, vector<16x256xbf16>, vector<32x256xf32> -> vector<32x256xf32>
    %8 = arith.truncf %7 : vector<32x256xf32> to vector<32x256xbf16>
    %cst_7 = arith.constant dense<0.000000e+00> : vector<32x256xf32>
    %9 = tpu.matmul %0, %8, %cst_7 {dimension_numbers = #tpu.dot_dimension_numbers<[1], [0], [0], [1], [0, 0, 1, 1], [], []>} : vector<32x32xbf16>, vector<32x256xbf16>, vector<32x256xf32> -> vector<32x256xf32>
    %c0_8 = arith.constant 0 : index
    %c0_9 = arith.constant 0 : index
    %10 = vector.load %arg4[%c0_8, %c0_9] : memref<256x256xbf16, #tpu.memory_space<vmem>>, vector<256x256xbf16>
    %cst_10 = arith.constant dense<0.000000e+00> : vector<32x256xf32>
    %11 = tpu.matmul %8, %10, %cst_10 {dimension_numbers = #tpu.dot_dimension_numbers<[1], [0], [0], [1], [0, 0, 1, 1], [], []>} : vector<32x256xbf16>, vector<256x256xbf16>, vector<32x256xf32> -> vector<32x256xf32>
    %c0_11 = arith.constant 0 : index
    %c0_12 = arith.constant 0 : index
    %12 = vector.load %arg6[%c0_11, %c0_12] : memref<1x256xf32, #tpu.memory_space<vmem>>, vector<1x256xf32>
    %13 = vector.broadcast %12 : vector<1x256xf32> to vector<32x256xf32>
    %14 = arith.addf %11, %13 : vector<32x256xf32>
    %15 = arith.truncf %9 : vector<32x256xf32> to vector<32x256xbf16>
    %c0_13 = arith.constant 0 : index
    %c0_14 = arith.constant 0 : index
    %16 = vector.load %arg5[%c0_13, %c0_14] : memref<256x256xbf16, #tpu.memory_space<vmem>>, vector<256x256xbf16>
    %cst_15 = arith.constant dense<0.000000e+00> : vector<32x256xf32>
    %17 = tpu.matmul %15, %16, %cst_15 {dimension_numbers = #tpu.dot_dimension_numbers<[1], [0], [0], [1], [0, 0, 1, 1], [], []>} : vector<32x256xbf16>, vector<256x256xbf16>, vector<32x256xf32> -> vector<32x256xf32>
    %18 = arith.mulf %3, %14 : vector<32x256xf32>
    %19 = arith.addf %18, %17 : vector<32x256xf32>
    %20 = arith.truncf %19 : vector<32x256xf32> to vector<32x256xbf16>
    %c0_16 = arith.constant 0 : index
    %c0_17 = arith.constant 0 : index
    %21 = vector.load %arg7[%c0_16, %c0_17] : memref<256x256xbf16, #tpu.memory_space<vmem>>, vector<256x256xbf16>
    %cst_18 = arith.constant dense<0.000000e+00> : vector<32x256xf32>
    %22 = tpu.matmul %20, %21, %cst_18 {dimension_numbers = #tpu.dot_dimension_numbers<[1], [0], [0], [1], [0, 0, 1, 1], [], []>} : vector<32x256xbf16>, vector<256x256xbf16>, vector<32x256xf32> -> vector<32x256xf32>
    %c0_19 = arith.constant 0 : index
    %c0_20 = arith.constant 0 : index
    %23 = vector.load %arg8[%c0_19, %c0_20] : memref<1x256xf32, #tpu.memory_space<vmem>>, vector<1x256xf32>
    %24 = vector.broadcast %23 : vector<1x256xf32> to vector<32x256xf32>
    %25 = arith.addf %22, %24 : vector<32x256xf32>
    %cst_21 = arith.constant 2.000000e-01 : f32
    %26 = vector.broadcast %cst_21 : f32 to vector<32x256xf32>
    %27 = arith.mulf %26, %25 : vector<32x256xf32>
    %28 = arith.maximumf %25, %27 : vector<32x256xf32>
    %cst_22 = arith.constant dense<0.000000e+00> : vector<256xf32>
    %29 = vector.multi_reduction <add>, %28, %cst_22 [0] : vector<32x256xf32> to vector<256xf32>
    %30 = vector.shape_cast %29 : vector<256xf32> to vector<1x256xf32>
    %cst_23 = arith.constant 3.200000e+01 : f32
    %31 = vector.broadcast %cst_23 : f32 to vector<1x256xf32>
    %32 = arith.divf %30, %31 : vector<1x256xf32>
    %33 = vector.broadcast %32 : vector<1x256xf32> to vector<32x256xf32>
    %34 = arith.subf %28, %33 : vector<32x256xf32>
    %35 = arith.mulf %34, %34 : vector<32x256xf32>
    %cst_24 = arith.constant dense<0.000000e+00> : vector<256xf32>
    %36 = vector.multi_reduction <add>, %35, %cst_24 [0] : vector<32x256xf32> to vector<256xf32>
    %37 = vector.shape_cast %36 : vector<256xf32> to vector<1x256xf32>
    %cst_25 = arith.constant 3.200000e+01 : f32
    %38 = vector.broadcast %cst_25 : f32 to vector<1x256xf32>
    %39 = arith.divf %37, %38 : vector<1x256xf32>
    %c0_26 = arith.constant 0 : index
    %c0_27 = arith.constant 0 : index
    %40 = vector.load %arg9[%c0_26, %c0_27] : memref<1x256xf32, #tpu.memory_space<vmem>>, vector<1x256xf32>
    %cst_28 = arith.constant 9.99999974E-6 : f32
    %41 = vector.broadcast %cst_28 : f32 to vector<1x256xf32>
    %42 = arith.addf %39, %41 : vector<1x256xf32>
    %43 = math.rsqrt %42 : vector<1x256xf32>
    %44 = arith.mulf %40, %43 : vector<1x256xf32>
    %45 = vector.broadcast %32 : vector<1x256xf32> to vector<32x256xf32>
    %46 = arith.subf %28, %45 : vector<32x256xf32>
    %47 = vector.broadcast %44 : vector<1x256xf32> to vector<32x256xf32>
    %48 = arith.mulf %46, %47 : vector<32x256xf32>
    %c0_29 = arith.constant 0 : index
    %c0_30 = arith.constant 0 : index
    %49 = vector.load %arg10[%c0_29, %c0_30] : memref<1x256xf32, #tpu.memory_space<vmem>>, vector<1x256xf32>
    %50 = vector.broadcast %49 : vector<1x256xf32> to vector<32x256xf32>
    %51 = arith.addf %48, %50 : vector<32x256xf32>
    %52 = arith.truncf %51 : vector<32x256xf32> to vector<32x256xbf16>
    %c0_31 = arith.constant 0 : index
    %c0_32 = arith.constant 0 : index
    %53 = vector.load %arg11[%c0_31, %c0_32] : memref<256x256xbf16, #tpu.memory_space<vmem>>, vector<256x256xbf16>
    %cst_33 = arith.constant dense<0.000000e+00> : vector<32x256xf32>
    %54 = tpu.matmul %52, %53, %cst_33 {dimension_numbers = #tpu.dot_dimension_numbers<[1], [0], [0], [1], [0, 0, 1, 1], [], []>} : vector<32x256xbf16>, vector<256x256xbf16>, vector<32x256xf32> -> vector<32x256xf32>
    %55 = arith.truncf %54 : vector<32x256xf32> to vector<32x256xbf16>
    %cst_34 = arith.constant dense<0.000000e+00> : vector<32x256xf32>
    %56 = tpu.matmul %0, %55, %cst_34 {dimension_numbers = #tpu.dot_dimension_numbers<[1], [0], [0], [1], [0, 0, 1, 1], [], []>} : vector<32x32xbf16>, vector<32x256xbf16>, vector<32x256xf32> -> vector<32x256xf32>
    %c0_35 = arith.constant 0 : index
    %c0_36 = arith.constant 0 : index
    %57 = vector.load %arg12[%c0_35, %c0_36] : memref<256x256xbf16, #tpu.memory_space<vmem>>, vector<256x256xbf16>
    %cst_37 = arith.constant dense<0.000000e+00> : vector<32x256xf32>
    %58 = tpu.matmul %55, %57, %cst_37 {dimension_numbers = #tpu.dot_dimension_numbers<[1], [0], [0], [1], [0, 0, 1, 1], [], []>} : vector<32x256xbf16>, vector<256x256xbf16>, vector<32x256xf32> -> vector<32x256xf32>
    %c0_38 = arith.constant 0 : index
    %c0_39 = arith.constant 0 : index
    %59 = vector.load %arg14[%c0_38, %c0_39] : memref<1x256xf32, #tpu.memory_space<vmem>>, vector<1x256xf32>
    %60 = vector.broadcast %59 : vector<1x256xf32> to vector<32x256xf32>
    %61 = arith.addf %58, %60 : vector<32x256xf32>
    %62 = arith.truncf %56 : vector<32x256xf32> to vector<32x256xbf16>
    %c0_40 = arith.constant 0 : index
    %c0_41 = arith.constant 0 : index
    %63 = vector.load %arg13[%c0_40, %c0_41] : memref<256x256xbf16, #tpu.memory_space<vmem>>, vector<256x256xbf16>
    %cst_42 = arith.constant dense<0.000000e+00> : vector<32x256xf32>
    %64 = tpu.matmul %62, %63, %cst_42 {dimension_numbers = #tpu.dot_dimension_numbers<[1], [0], [0], [1], [0, 0, 1, 1], [], []>} : vector<32x256xbf16>, vector<256x256xbf16>, vector<32x256xf32> -> vector<32x256xf32>
    %65 = arith.mulf %3, %61 : vector<32x256xf32>
    %66 = arith.addf %65, %64 : vector<32x256xf32>
    %67 = arith.truncf %66 : vector<32x256xf32> to vector<32x256xbf16>
    %c0_43 = arith.constant 0 : index
    %c0_44 = arith.constant 0 : index
    %68 = vector.load %arg15[%c0_43, %c0_44] : memref<256x64xbf16, #tpu.memory_space<vmem>>, vector<256x64xbf16>
    %cst_45 = arith.constant dense<0.000000e+00> : vector<32x64xf32>
    %69 = tpu.matmul %67, %68, %cst_45 {dimension_numbers = #tpu.dot_dimension_numbers<[1], [0], [0], [1], [0, 0, 1, 1], [], []>} : vector<32x256xbf16>, vector<256x64xbf16>, vector<32x64xf32> -> vector<32x64xf32>
    %c0_46 = arith.constant 0 : index
    %c0_47 = arith.constant 0 : index
    %70 = vector.load %arg16[%c0_46, %c0_47] : memref<1x64xf32, #tpu.memory_space<vmem>>, vector<1x64xf32>
    %71 = vector.broadcast %70 : vector<1x64xf32> to vector<32x64xf32>
    %72 = arith.addf %69, %71 : vector<32x64xf32>
    %cst_48 = arith.constant 2.000000e-01 : f32
    %73 = vector.broadcast %cst_48 : f32 to vector<32x64xf32>
    %74 = arith.mulf %73, %72 : vector<32x64xf32>
    %75 = arith.maximumf %72, %74 : vector<32x64xf32>
    %76 = arith.truncf %75 : vector<32x64xf32> to vector<32x64xbf16>
    %c0_49 = arith.constant 0 : index
    %c0_50 = arith.constant 0 : index
    %77 = vector.load %arg17[%c0_49, %c0_50] : memref<64x8xbf16, #tpu.memory_space<vmem>>, vector<64x8xbf16>
    %cst_51 = arith.constant dense<0.000000e+00> : vector<32x8xf32>
    %78 = tpu.matmul %76, %77, %cst_51 {dimension_numbers = #tpu.dot_dimension_numbers<[1], [0], [0], [1], [0, 0, 1, 1], [], []>} : vector<32x64xbf16>, vector<64x8xbf16>, vector<32x8xf32> -> vector<32x8xf32>
    %c0_52 = arith.constant 0 : index
    %c0_53 = arith.constant 0 : index
    %79 = vector.load %arg18[%c0_52, %c0_53] : memref<1x8xf32, #tpu.memory_space<vmem>>, vector<1x8xf32>
    %80 = vector.broadcast %79 : vector<1x8xf32> to vector<32x8xf32>
    %81 = arith.addf %78, %80 : vector<32x8xf32>
    %cst_54 = arith.constant 2.000000e-01 : f32
    %82 = vector.broadcast %cst_54 : f32 to vector<32x8xf32>
    %83 = arith.mulf %82, %81 : vector<32x8xf32>
    %84 = arith.maximumf %81, %83 : vector<32x8xf32>
    %cst_55 = arith.constant dense<0.000000e+00> : vector<8xf32>
    %85 = vector.multi_reduction <add>, %84, %cst_55 [0] : vector<32x8xf32> to vector<8xf32>
    %86 = vector.shape_cast %85 : vector<8xf32> to vector<1x8xf32>
    %cst_56 = arith.constant 3.200000e+01 : f32
    %87 = vector.broadcast %cst_56 : f32 to vector<1x8xf32>
    %88 = arith.divf %86, %87 : vector<1x8xf32>
    %89 = vector.broadcast %88 : vector<1x8xf32> to vector<32x8xf32>
    %90 = arith.subf %84, %89 : vector<32x8xf32>
    %91 = arith.mulf %90, %90 : vector<32x8xf32>
    %cst_57 = arith.constant dense<0.000000e+00> : vector<8xf32>
    %92 = vector.multi_reduction <add>, %91, %cst_57 [0] : vector<32x8xf32> to vector<8xf32>
    %93 = vector.shape_cast %92 : vector<8xf32> to vector<1x8xf32>
    %cst_58 = arith.constant 3.200000e+01 : f32
    %94 = vector.broadcast %cst_58 : f32 to vector<1x8xf32>
    %95 = arith.divf %93, %94 : vector<1x8xf32>
    %c0_59 = arith.constant 0 : index
    %c0_60 = arith.constant 0 : index
    %96 = vector.load %arg19[%c0_59, %c0_60] : memref<1x8xf32, #tpu.memory_space<vmem>>, vector<1x8xf32>
    %cst_61 = arith.constant 9.99999974E-6 : f32
    %97 = vector.broadcast %cst_61 : f32 to vector<1x8xf32>
    %98 = arith.addf %95, %97 : vector<1x8xf32>
    %99 = math.rsqrt %98 : vector<1x8xf32>
    %100 = arith.mulf %96, %99 : vector<1x8xf32>
    %101 = vector.broadcast %88 : vector<1x8xf32> to vector<32x8xf32>
    %102 = arith.subf %84, %101 : vector<32x8xf32>
    %103 = vector.broadcast %100 : vector<1x8xf32> to vector<32x8xf32>
    %104 = arith.mulf %102, %103 : vector<32x8xf32>
    %c0_62 = arith.constant 0 : index
    %c0_63 = arith.constant 0 : index
    %105 = vector.load %arg20[%c0_62, %c0_63] : memref<1x8xf32, #tpu.memory_space<vmem>>, vector<1x8xf32>
    %106 = vector.broadcast %105 : vector<1x8xf32> to vector<32x8xf32>
    %107 = arith.addf %104, %106 : vector<32x8xf32>
    %108 = vector.shape_cast %107 : vector<32x8xf32> to vector<2x16x8xf32>
    %c0_64 = arith.constant 0 : index
    %c0_65 = arith.constant 0 : index
    %c0_66 = arith.constant 0 : index
    %109 = vector.load %arg28[%c0_64, %c0_65, %c0_66] : memref<2x16x8xf32, #tpu.memory_space<vmem>>, vector<2x16x8xf32>
    tpu.vector_store %arg28[%c0_64, %c0_65, %c0_66], %108 {strides = array<i32>} : memref<2x16x8xf32, #tpu.memory_space<vmem>>, vector<2x16x8xf32>,
    %c0_67 = arith.constant 0 : index
    %c0_68 = arith.constant 0 : index
    %110 = vector.load %arg22[%c0_67, %c0_68] : memref<1x256xf32, #tpu.memory_space<vmem>>, vector<1x256xf32>
    %111 = vector.extract_strided_slice %108 {offsets = [0, 0, 0], sizes = [2, 1, 8], strides = [1, 1, 1]} : vector<2x16x8xf32> to vector<2x1x8xf32>
    %112 = vector.shape_cast %111 : vector<2x1x8xf32> to vector<2x8xf32>
    %113 = arith.truncf %112 : vector<2x8xf32> to vector<2x8xbf16>
    %c0_69 = arith.constant 0 : index
    %c0_70 = arith.constant 0 : index
    %c0_71 = arith.constant 0 : index
    %114 = vector.load %arg21[%c0_69, %c0_70, %c0_71] : memref<16x8x256xbf16, #tpu.memory_space<vmem>>, vector<1x8x256xbf16>
    %115 = vector.shape_cast %114 : vector<1x8x256xbf16> to vector<8x256xbf16>
    %cst_72 = arith.constant dense<0.000000e+00> : vector<2x256xf32>
    %116 = tpu.matmul %113, %115, %cst_72 {dimension_numbers = #tpu.dot_dimension_numbers<[1], [0], [0], [1], [0, 0, 1, 1], [], []>} : vector<2x8xbf16>, vector<8x256xbf16>, vector<2x256xf32> -> vector<2x256xf32>
    %117 = vector.broadcast %110 : vector<1x256xf32> to vector<2x256xf32>
    %118 = arith.addf %117, %116 : vector<2x256xf32>
    %119 = vector.extract_strided_slice %108 {offsets = [0, 1, 0], sizes = [2, 1, 8], strides = [1, 1, 1]} : vector<2x16x8xf32> to vector<2x1x8xf32>
    %120 = vector.shape_cast %119 : vector<2x1x8xf32> to vector<2x8xf32>
    %121 = arith.truncf %120 : vector<2x8xf32> to vector<2x8xbf16>
    %c1 = arith.constant 1 : index
    %c0_73 = arith.constant 0 : index
    %c0_74 = arith.constant 0 : index
    %122 = vector.load %arg21[%c1, %c0_73, %c0_74] : memref<16x8x256xbf16, #tpu.memory_space<vmem>>, vector<1x8x256xbf16>
    %123 = vector.shape_cast %122 : vector<1x8x256xbf16> to vector<8x256xbf16>
    %cst_75 = arith.constant dense<0.000000e+00> : vector<2x256xf32>
    %124 = tpu.matmul %121, %123, %cst_75 {dimension_numbers = #tpu.dot_dimension_numbers<[1], [0], [0], [1], [0, 0, 1, 1], [], []>} : vector<2x8xbf16>, vector<8x256xbf16>, vector<2x256xf32> -> vector<2x256xf32>
    %125 = arith.addf %118, %124 : vector<2x256xf32>
    %126 = vector.extract_strided_slice %108 {offsets = [0, 2, 0], sizes = [2, 1, 8], strides = [1, 1, 1]} : vector<2x16x8xf32> to vector<2x1x8xf32>
    %127 = vector.shape_cast %126 : vector<2x1x8xf32> to vector<2x8xf32>
    %128 = arith.truncf %127 : vector<2x8xf32> to vector<2x8xbf16>
    %c2 = arith.constant 2 : index
    %c0_76 = arith.constant 0 : index
    %c0_77 = arith.constant 0 : index
    %129 = vector.load %arg21[%c2, %c0_76, %c0_77] : memref<16x8x256xbf16, #tpu.memory_space<vmem>>, vector<1x8x256xbf16>
    %130 = vector.shape_cast %129 : vector<1x8x256xbf16> to vector<8x256xbf16>
    %cst_78 = arith.constant dense<0.000000e+00> : vector<2x256xf32>
    %131 = tpu.matmul %128, %130, %cst_78 {dimension_numbers = #tpu.dot_dimension_numbers<[1], [0], [0], [1], [0, 0, 1, 1], [], []>} : vector<2x8xbf16>, vector<8x256xbf16>, vector<2x256xf32> -> vector<2x256xf32>
    %132 = arith.addf %125, %131 : vector<2x256xf32>
    %133 = vector.extract_strided_slice %108 {offsets = [0, 3, 0], sizes = [2, 1, 8], strides = [1, 1, 1]} : vector<2x16x8xf32> to vector<2x1x8xf32>
    %134 = vector.shape_cast %133 : vector<2x1x8xf32> to vector<2x8xf32>
    %135 = arith.truncf %134 : vector<2x8xf32> to vector<2x8xbf16>
    %c3 = arith.constant 3 : index
    %c0_79 = arith.constant 0 : index
    %c0_80 = arith.constant 0 : index
    %136 = vector.load %arg21[%c3, %c0_79, %c0_80] : memref<16x8x256xbf16, #tpu.memory_space<vmem>>, vector<1x8x256xbf16>
    %137 = vector.shape_cast %136 : vector<1x8x256xbf16> to vector<8x256xbf16>
    %cst_81 = arith.constant dense<0.000000e+00> : vector<2x256xf32>
    %138 = tpu.matmul %135, %137, %cst_81 {dimension_numbers = #tpu.dot_dimension_numbers<[1], [0], [0], [1], [0, 0, 1, 1], [], []>} : vector<2x8xbf16>, vector<8x256xbf16>, vector<2x256xf32> -> vector<2x256xf32>
    %139 = arith.addf %132, %138 : vector<2x256xf32>
    %140 = vector.extract_strided_slice %108 {offsets = [0, 4, 0], sizes = [2, 1, 8], strides = [1, 1, 1]} : vector<2x16x8xf32> to vector<2x1x8xf32>
    %141 = vector.shape_cast %140 : vector<2x1x8xf32> to vector<2x8xf32>
    %142 = arith.truncf %141 : vector<2x8xf32> to vector<2x8xbf16>
    %c4 = arith.constant 4 : index
    %c0_82 = arith.constant 0 : index
    %c0_83 = arith.constant 0 : index
    %143 = vector.load %arg21[%c4, %c0_82, %c0_83] : memref<16x8x256xbf16, #tpu.memory_space<vmem>>, vector<1x8x256xbf16>
    %144 = vector.shape_cast %143 : vector<1x8x256xbf16> to vector<8x256xbf16>
    %cst_84 = arith.constant dense<0.000000e+00> : vector<2x256xf32>
    %145 = tpu.matmul %142, %144, %cst_84 {dimension_numbers = #tpu.dot_dimension_numbers<[1], [0], [0], [1], [0, 0, 1, 1], [], []>} : vector<2x8xbf16>, vector<8x256xbf16>, vector<2x256xf32> -> vector<2x256xf32>
    %146 = arith.addf %139, %145 : vector<2x256xf32>
    %147 = vector.extract_strided_slice %108 {offsets = [0, 5, 0], sizes = [2, 1, 8], strides = [1, 1, 1]} : vector<2x16x8xf32> to vector<2x1x8xf32>
    %148 = vector.shape_cast %147 : vector<2x1x8xf32> to vector<2x8xf32>
    %149 = arith.truncf %148 : vector<2x8xf32> to vector<2x8xbf16>
    %c5 = arith.constant 5 : index
    %c0_85 = arith.constant 0 : index
    %c0_86 = arith.constant 0 : index
    %150 = vector.load %arg21[%c5, %c0_85, %c0_86] : memref<16x8x256xbf16, #tpu.memory_space<vmem>>, vector<1x8x256xbf16>
    %151 = vector.shape_cast %150 : vector<1x8x256xbf16> to vector<8x256xbf16>
    %cst_87 = arith.constant dense<0.000000e+00> : vector<2x256xf32>
    %152 = tpu.matmul %149, %151, %cst_87 {dimension_numbers = #tpu.dot_dimension_numbers<[1], [0], [0], [1], [0, 0, 1, 1], [], []>} : vector<2x8xbf16>, vector<8x256xbf16>, vector<2x256xf32> -> vector<2x256xf32>
    %153 = arith.addf %146, %152 : vector<2x256xf32>
    %154 = vector.extract_strided_slice %108 {offsets = [0, 6, 0], sizes = [2, 1, 8], strides = [1, 1, 1]} : vector<2x16x8xf32> to vector<2x1x8xf32>
    %155 = vector.shape_cast %154 : vector<2x1x8xf32> to vector<2x8xf32>
    %156 = arith.truncf %155 : vector<2x8xf32> to vector<2x8xbf16>
    %c6 = arith.constant 6 : index
    %c0_88 = arith.constant 0 : index
    %c0_89 = arith.constant 0 : index
    %157 = vector.load %arg21[%c6, %c0_88, %c0_89] : memref<16x8x256xbf16, #tpu.memory_space<vmem>>, vector<1x8x256xbf16>
    %158 = vector.shape_cast %157 : vector<1x8x256xbf16> to vector<8x256xbf16>
    %cst_90 = arith.constant dense<0.000000e+00> : vector<2x256xf32>
    %159 = tpu.matmul %156, %158, %cst_90 {dimension_numbers = #tpu.dot_dimension_numbers<[1], [0], [0], [1], [0, 0, 1, 1], [], []>} : vector<2x8xbf16>, vector<8x256xbf16>, vector<2x256xf32> -> vector<2x256xf32>
    %160 = arith.addf %153, %159 : vector<2x256xf32>
    %161 = vector.extract_strided_slice %108 {offsets = [0, 7, 0], sizes = [2, 1, 8], strides = [1, 1, 1]} : vector<2x16x8xf32> to vector<2x1x8xf32>
    %162 = vector.shape_cast %161 : vector<2x1x8xf32> to vector<2x8xf32>
    %163 = arith.truncf %162 : vector<2x8xf32> to vector<2x8xbf16>
    %c7 = arith.constant 7 : index
    %c0_91 = arith.constant 0 : index
    %c0_92 = arith.constant 0 : index
    %164 = vector.load %arg21[%c7, %c0_91, %c0_92] : memref<16x8x256xbf16, #tpu.memory_space<vmem>>, vector<1x8x256xbf16>
    %165 = vector.shape_cast %164 : vector<1x8x256xbf16> to vector<8x256xbf16>
    %cst_93 = arith.constant dense<0.000000e+00> : vector<2x256xf32>
    %166 = tpu.matmul %163, %165, %cst_93 {dimension_numbers = #tpu.dot_dimension_numbers<[1], [0], [0], [1], [0, 0, 1, 1], [], []>} : vector<2x8xbf16>, vector<8x256xbf16>, vector<2x256xf32> -> vector<2x256xf32>
    %167 = arith.addf %160, %166 : vector<2x256xf32>
    %168 = vector.extract_strided_slice %108 {offsets = [0, 8, 0], sizes = [2, 1, 8], strides = [1, 1, 1]} : vector<2x16x8xf32> to vector<2x1x8xf32>
    %169 = vector.shape_cast %168 : vector<2x1x8xf32> to vector<2x8xf32>
    %170 = arith.truncf %169 : vector<2x8xf32> to vector<2x8xbf16>
    %c8 = arith.constant 8 : index
    %c0_94 = arith.constant 0 : index
    %c0_95 = arith.constant 0 : index
    %171 = vector.load %arg21[%c8, %c0_94, %c0_95] : memref<16x8x256xbf16, #tpu.memory_space<vmem>>, vector<1x8x256xbf16>
    %172 = vector.shape_cast %171 : vector<1x8x256xbf16> to vector<8x256xbf16>
    %cst_96 = arith.constant dense<0.000000e+00> : vector<2x256xf32>
    %173 = tpu.matmul %170, %172, %cst_96 {dimension_numbers = #tpu.dot_dimension_numbers<[1], [0], [0], [1], [0, 0, 1, 1], [], []>} : vector<2x8xbf16>, vector<8x256xbf16>, vector<2x256xf32> -> vector<2x256xf32>
    %174 = arith.addf %167, %173 : vector<2x256xf32>
    %175 = vector.extract_strided_slice %108 {offsets = [0, 9, 0], sizes = [2, 1, 8], strides = [1, 1, 1]} : vector<2x16x8xf32> to vector<2x1x8xf32>
    %176 = vector.shape_cast %175 : vector<2x1x8xf32> to vector<2x8xf32>
    %177 = arith.truncf %176 : vector<2x8xf32> to vector<2x8xbf16>
    %c9 = arith.constant 9 : index
    %c0_97 = arith.constant 0 : index
    %c0_98 = arith.constant 0 : index
    %178 = vector.load %arg21[%c9, %c0_97, %c0_98] : memref<16x8x256xbf16, #tpu.memory_space<vmem>>, vector<1x8x256xbf16>
    %179 = vector.shape_cast %178 : vector<1x8x256xbf16> to vector<8x256xbf16>
    %cst_99 = arith.constant dense<0.000000e+00> : vector<2x256xf32>
    %180 = tpu.matmul %177, %179, %cst_99 {dimension_numbers = #tpu.dot_dimension_numbers<[1], [0], [0], [1], [0, 0, 1, 1], [], []>} : vector<2x8xbf16>, vector<8x256xbf16>, vector<2x256xf32> -> vector<2x256xf32>
    %181 = arith.addf %174, %180 : vector<2x256xf32>
    %182 = vector.extract_strided_slice %108 {offsets = [0, 10, 0], sizes = [2, 1, 8], strides = [1, 1, 1]} : vector<2x16x8xf32> to vector<2x1x8xf32>
    %183 = vector.shape_cast %182 : vector<2x1x8xf32> to vector<2x8xf32>
    %184 = arith.truncf %183 : vector<2x8xf32> to vector<2x8xbf16>
    %c10 = arith.constant 10 : index
    %c0_100 = arith.constant 0 : index
    %c0_101 = arith.constant 0 : index
    %185 = vector.load %arg21[%c10, %c0_100, %c0_101] : memref<16x8x256xbf16, #tpu.memory_space<vmem>>, vector<1x8x256xbf16>
    %186 = vector.shape_cast %185 : vector<1x8x256xbf16> to vector<8x256xbf16>
    %cst_102 = arith.constant dense<0.000000e+00> : vector<2x256xf32>
    %187 = tpu.matmul %184, %186, %cst_102 {dimension_numbers = #tpu.dot_dimension_numbers<[1], [0], [0], [1], [0, 0, 1, 1], [], []>} : vector<2x8xbf16>, vector<8x256xbf16>, vector<2x256xf32> -> vector<2x256xf32>
    %188 = arith.addf %181, %187 : vector<2x256xf32>
    %189 = vector.extract_strided_slice %108 {offsets = [0, 11, 0], sizes = [2, 1, 8], strides = [1, 1, 1]} : vector<2x16x8xf32> to vector<2x1x8xf32>
    %190 = vector.shape_cast %189 : vector<2x1x8xf32> to vector<2x8xf32>
    %191 = arith.truncf %190 : vector<2x8xf32> to vector<2x8xbf16>
    %c11 = arith.constant 11 : index
    %c0_103 = arith.constant 0 : index
    %c0_104 = arith.constant 0 : index
    %192 = vector.load %arg21[%c11, %c0_103, %c0_104] : memref<16x8x256xbf16, #tpu.memory_space<vmem>>, vector<1x8x256xbf16>
    %193 = vector.shape_cast %192 : vector<1x8x256xbf16> to vector<8x256xbf16>
    %cst_105 = arith.constant dense<0.000000e+00> : vector<2x256xf32>
    %194 = tpu.matmul %191, %193, %cst_105 {dimension_numbers = #tpu.dot_dimension_numbers<[1], [0], [0], [1], [0, 0, 1, 1], [], []>} : vector<2x8xbf16>, vector<8x256xbf16>, vector<2x256xf32> -> vector<2x256xf32>
    %195 = arith.addf %188, %194 : vector<2x256xf32>
    %196 = vector.extract_strided_slice %108 {offsets = [0, 12, 0], sizes = [2, 1, 8], strides = [1, 1, 1]} : vector<2x16x8xf32> to vector<2x1x8xf32>
    %197 = vector.shape_cast %196 : vector<2x1x8xf32> to vector<2x8xf32>
    %198 = arith.truncf %197 : vector<2x8xf32> to vector<2x8xbf16>
    %c12 = arith.constant 12 : index
    %c0_106 = arith.constant 0 : index
    %c0_107 = arith.constant 0 : index
    %199 = vector.load %arg21[%c12, %c0_106, %c0_107] : memref<16x8x256xbf16, #tpu.memory_space<vmem>>, vector<1x8x256xbf16>
    %200 = vector.shape_cast %199 : vector<1x8x256xbf16> to vector<8x256xbf16>
    %cst_108 = arith.constant dense<0.000000e+00> : vector<2x256xf32>
    %201 = tpu.matmul %198, %200, %cst_108 {dimension_numbers = #tpu.dot_dimension_numbers<[1], [0], [0], [1], [0, 0, 1, 1], [], []>} : vector<2x8xbf16>, vector<8x256xbf16>, vector<2x256xf32> -> vector<2x256xf32>
    %202 = arith.addf %195, %201 : vector<2x256xf32>
    %203 = vector.extract_strided_slice %108 {offsets = [0, 13, 0], sizes = [2, 1, 8], strides = [1, 1, 1]} : vector<2x16x8xf32> to vector<2x1x8xf32>
    %204 = vector.shape_cast %203 : vector<2x1x8xf32> to vector<2x8xf32>
    %205 = arith.truncf %204 : vector<2x8xf32> to vector<2x8xbf16>
    %c13 = arith.constant 13 : index
    %c0_109 = arith.constant 0 : index
    %c0_110 = arith.constant 0 : index
    %206 = vector.load %arg21[%c13, %c0_109, %c0_110] : memref<16x8x256xbf16, #tpu.memory_space<vmem>>, vector<1x8x256xbf16>
    %207 = vector.shape_cast %206 : vector<1x8x256xbf16> to vector<8x256xbf16>
    %cst_111 = arith.constant dense<0.000000e+00> : vector<2x256xf32>
    %208 = tpu.matmul %205, %207, %cst_111 {dimension_numbers = #tpu.dot_dimension_numbers<[1], [0], [0], [1], [0, 0, 1, 1], [], []>} : vector<2x8xbf16>, vector<8x256xbf16>, vector<2x256xf32> -> vector<2x256xf32>
    %209 = arith.addf %202, %208 : vector<2x256xf32>
    %210 = vector.extract_strided_slice %108 {offsets = [0, 14, 0], sizes = [2, 1, 8], strides = [1, 1, 1]} : vector<2x16x8xf32> to vector<2x1x8xf32>
    %211 = vector.shape_cast %210 : vector<2x1x8xf32> to vector<2x8xf32>
    %212 = arith.truncf %211 : vector<2x8xf32> to vector<2x8xbf16>
    %c14 = arith.constant 14 : index
    %c0_112 = arith.constant 0 : index
    %c0_113 = arith.constant 0 : index
    %213 = vector.load %arg21[%c14, %c0_112, %c0_113] : memref<16x8x256xbf16, #tpu.memory_space<vmem>>, vector<1x8x256xbf16>
    %214 = vector.shape_cast %213 : vector<1x8x256xbf16> to vector<8x256xbf16>
    %cst_114 = arith.constant dense<0.000000e+00> : vector<2x256xf32>
    %215 = tpu.matmul %212, %214, %cst_114 {dimension_numbers = #tpu.dot_dimension_numbers<[1], [0], [0], [1], [0, 0, 1, 1], [], []>} : vector<2x8xbf16>, vector<8x256xbf16>, vector<2x256xf32> -> vector<2x256xf32>
    %216 = arith.addf %209, %215 : vector<2x256xf32>
    %217 = vector.extract_strided_slice %108 {offsets = [0, 15, 0], sizes = [2, 1, 8], strides = [1, 1, 1]} : vector<2x16x8xf32> to vector<2x1x8xf32>
    %218 = vector.shape_cast %217 : vector<2x1x8xf32> to vector<2x8xf32>
    %219 = arith.truncf %218 : vector<2x8xf32> to vector<2x8xbf16>
    %c15 = arith.constant 15 : index
    %c0_115 = arith.constant 0 : index
    %c0_116 = arith.constant 0 : index
    %220 = vector.load %arg21[%c15, %c0_115, %c0_116] : memref<16x8x256xbf16, #tpu.memory_space<vmem>>, vector<1x8x256xbf16>
    %221 = vector.shape_cast %220 : vector<1x8x256xbf16> to vector<8x256xbf16>
    %cst_117 = arith.constant dense<0.000000e+00> : vector<2x256xf32>
    %222 = tpu.matmul %219, %221, %cst_117 {dimension_numbers = #tpu.dot_dimension_numbers<[1], [0], [0], [1], [0, 0, 1, 1], [], []>} : vector<2x8xbf16>, vector<8x256xbf16>, vector<2x256xf32> -> vector<2x256xf32>
    %223 = arith.addf %216, %222 : vector<2x256xf32>
    %cst_118 = arith.constant 2.000000e-01 : f32
    %224 = vector.broadcast %cst_118 : f32 to vector<2x256xf32>
    %225 = arith.mulf %224, %223 : vector<2x256xf32>
    %226 = arith.maximumf %223, %225 : vector<2x256xf32>
    %227 = arith.truncf %226 : vector<2x256xf32> to vector<2x256xbf16>
    %c0_119 = arith.constant 0 : index
    %c0_120 = arith.constant 0 : index
    %228 = vector.load %arg23[%c0_119, %c0_120] : memref<256x32xbf16, #tpu.memory_space<vmem>>, vector<256x32xbf16>
    %cst_121 = arith.constant dense<0.000000e+00> : vector<2x32xf32>
    %229 = tpu.matmul %227, %228, %cst_121 {dimension_numbers = #tpu.dot_dimension_numbers<[1], [0], [0], [1], [0, 0, 1, 1], [], []>} : vector<2x256xbf16>, vector<256x32xbf16>, vector<2x32xf32> -> vector<2x32xf32>
    %c0_122 = arith.constant 0 : index
    %c0_123 = arith.constant 0 : index
    %230 = vector.load %arg24[%c0_122, %c0_123] : memref<1x32xf32, #tpu.memory_space<vmem>>, vector<1x32xf32>
    %231 = vector.broadcast %230 : vector<1x32xf32> to vector<2x32xf32>
    %232 = arith.addf %229, %231 : vector<2x32xf32>
    %cst_124 = arith.constant 2.000000e-01 : f32
    %233 = vector.broadcast %cst_124 : f32 to vector<2x32xf32>
    %234 = arith.mulf %233, %232 : vector<2x32xf32>
    %235 = arith.maximumf %232, %234 : vector<2x32xf32>
    %236 = arith.truncf %235 : vector<2x32xf32> to vector<2x32xbf16>
    %c0_125 = arith.constant 0 : index
    %c0_126 = arith.constant 0 : index
    %237 = vector.load %arg25[%c0_125, %c0_126] : memref<32x2xbf16, #tpu.memory_space<vmem>>, vector<32x2xbf16>
    %cst_127 = arith.constant dense<0.000000e+00> : vector<2x2xf32>
    %238 = tpu.matmul %236, %237, %cst_127 {dimension_numbers = #tpu.dot_dimension_numbers<[1], [0], [0], [1], [0, 0, 1, 1], [], []>} : vector<2x32xbf16>, vector<32x2xbf16>, vector<2x2xf32> -> vector<2x2xf32>
    %c0_128 = arith.constant 0 : index
    %c0_129 = arith.constant 0 : index
    %239 = vector.load %arg26[%c0_128, %c0_129] : memref<1x2xf32, #tpu.memory_space<vmem>>, vector<1x2xf32>
    %240 = vector.broadcast %239 : vector<1x2xf32> to vector<2x2xf32>
    %241 = arith.addf %238, %240 : vector<2x2xf32>
    %c0_130 = arith.constant 0 : index
    %c0_131 = arith.constant 0 : index
    %242 = vector.load %arg27[%c0_130, %c0_131] : memref<2x2xf32, #tpu.memory_space<vmem>>, vector<2x2xf32>
    tpu.vector_store %arg27[%c0_130, %c0_131], %241 {strides = array<i32>} : memref<2x2xf32, #tpu.memory_space<vmem>>, vector<2x2xf32>,
    return
  }
}

</mosaic_0001>

<llo_original>
// kernel: braingb_forward.1
$region0: #{braingb_forward.1}
  #allocation0 [shape = 'u32[]', space=smem, size = 0x4, offset = 0x4, fixed_abs, tag = 'smem constant byte address 0x4 - core index']
  #allocation1 [shape = 'u32[144,128]{1,0:T(1,128)}', space=vmem, size = 0x12000, scoped, tag = 'internal scratch']
  %s0 = inlined_call_operand.hbm [shape: f32[32,16], index: 0, kind: input, shape index: {}]
  %s1 = inlined_call_operand.vmem [shape: bf16[32,32], index: 1, kind: input, shape index: {}]
  %s2 = inlined_call_operand.vmem [shape: f32[32,1], index: 2, kind: input, shape index: {}]
  %s3 = inlined_call_operand.vmem [shape: bf16[16,256], index: 3, kind: input, shape index: {}]
  %s4 = inlined_call_operand.vmem [shape: bf16[256,256], index: 4, kind: input, shape index: {}]
  %s5 = inlined_call_operand.vmem [shape: bf16[256,256], index: 5, kind: input, shape index: {}]
  %s6 = inlined_call_operand.hbm [shape: f32[1,256], index: 6, kind: input, shape index: {}]
  %s7 = inlined_call_operand.vmem [shape: bf16[256,256], index: 7, kind: input, shape index: {}]
  %s8 = inlined_call_operand.hbm [shape: f32[1,256], index: 8, kind: input, shape index: {}]
  %s9 = inlined_call_operand.hbm [shape: f32[1,256], index: 9, kind: input, shape index: {}]
  %s10 = inlined_call_operand.hbm [shape: f32[1,256], index: 10, kind: input, shape index: {}]
  %s11 = inlined_call_operand.hbm [shape: bf16[256,256], index: 11, kind: input, shape index: {}]
  %s12 = inlined_call_operand.hbm [shape: bf16[256,256], index: 12, kind: input, shape index: {}]
  %s13 = inlined_call_operand.hbm [shape: bf16[256,256], index: 13, kind: input, shape index: {}]
  %s14 = inlined_call_operand.hbm [shape: f32[1,256], index: 14, kind: input, shape index: {}]
  %s15 = inlined_call_operand.vmem [shape: bf16[256,64], index: 15, kind: input, shape index: {}]
  %s16 = inlined_call_operand.vmem [shape: f32[1,64], index: 16, kind: input, shape index: {}]
  %s17 = inlined_call_operand.vmem [shape: bf16[64,8], index: 17, kind: input, shape index: {}]
  %s18 = inlined_call_operand.hbm [shape: f32[1,8], index: 18, kind: input, shape index: {}]
  %s19 = inlined_call_operand.hbm [shape: f32[1,8], index: 19, kind: input, shape index: {}]
  %s20 = inlined_call_operand.hbm [shape: f32[1,8], index: 20, kind: input, shape index: {}]
  %s21 = inlined_call_operand.hbm [shape: bf16[16,8,256], index: 21, kind: input, shape index: {}]
  %s22 = inlined_call_operand.hbm [shape: f32[1,256], index: 22, kind: input, shape index: {}]
  %s23 = inlined_call_operand.vmem [shape: bf16[256,32], index: 23, kind: input, shape index: {}]
  %s24 = inlined_call_operand.hbm [shape: f32[1,32], index: 24, kind: input, shape index: {}]
  %s25 = inlined_call_operand.vmem [shape: bf16[32,2], index: 25, kind: input, shape index: {}]
  %s26 = inlined_call_operand.hbm [shape: f32[1,2], index: 26, kind: input, shape index: {}]
  %s27 = inlined_call_operand.hbm [shape: f32[2,2], index: 27, kind: output, shape index: {0}]
  %s28 = inlined_call_operand.vmem [shape: f32[2,16,8], index: 28, kind: output, shape index: {1}]
  %29 = xla_tuple %s27, %s28
  %s30 = sld [smem:[#allocation0]]
  $region190: #{braingb_forward.1} parent=0
    _
  %s32 = ssub.s32 1, %s30
  %s33 = scalar_select 0, %s32, %s30
  $region1: #{braingb_forward.1} parent=0
    #allocation2 [shape = 'u8[16384]{0}', space=vmem, size = 0x4000, scoped, tag = 'input window, operand 0, single buffered']
    #allocation3 [shape = 's32[1]{0}', space=sflag, size = 0x4, scoped, tag = 'scoped memory for braingb_forward.1']
    #allocation4 [shape = 's32[1]{0}', space=sflag, size = 0x4, scoped, tag = 'scoped memory for braingb_forward.1']
    #allocation5 [shape = 'u8[1024]{0}', space=vmem, size = 0x400, scoped, tag = 'input window, operand 6, single buffered']
    #allocation6 [shape = 's32[1]{0}', space=sflag, size = 0x4, scoped, tag = 'scoped memory for braingb_forward.1']
    #allocation7 [shape = 'u8[1024]{0}', space=vmem, size = 0x400, scoped, tag = 'input window, operand 8, single buffered']
    #allocation8 [shape = 'u8[1024]{0}', space=vmem, size = 0x400, scoped, tag = 'input window, operand 9, single buffered']
    #allocation9 [shape = 's32[1]{0}', space=sflag, size = 0x4, scoped, tag = 'scoped memory for braingb_forward.1']
    #allocation10 [shape = 'u8[1024]{0}', space=vmem, size = 0x400, scoped, tag = 'input window, operand 10, single buffered']
    #allocation11 [shape = 'u8[131072]{0}', space=vmem, size = 0x20000, scoped, tag = 'input window, operand 11, single buffered']
    #allocation12 [shape = 's32[1]{0}', space=sflag, size = 0x4, scoped, tag = 'scoped memory for braingb_forward.1']
    #allocation13 [shape = 'u8[131072]{0}', space=vmem, size = 0x20000, scoped, tag = 'input window, operand 12, single buffered']
    #allocation14 [shape = 'u8[131072]{0}', space=vmem, size = 0x20000, scoped, tag = 'input window, operand 13, single buffered']
    #allocation15 [shape = 's32[1]{0}', space=sflag, size = 0x4, scoped, tag = 'scoped memory for braingb_forward.1']
    #allocation16 [shape = 'u8[1024]{0}', space=vmem, size = 0x400, scoped, tag = 'input window, operand 14, single buffered']
    #allocation17 [shape = 'u8[512]{0}', space=vmem, size = 0x400, scoped, tag = 'input window, operand 18, single buffered']
    #allocation18 [shape = 's32[1]{0}', space=sflag, size = 0x4, scoped, tag = 'scoped memory for braingb_forward.1']
    #allocation19 [shape = 'u8[512]{0}', space=vmem, size = 0x400, scoped, tag = 'input window, operand 19, single buffered']
    #allocation20 [shape = 'u8[512]{0}', space=vmem, size = 0x400, scoped, tag = 'input window, operand 20, single buffered']
    #allocation21 [shape = 's32[1]{0}', space=sflag, size = 0x4, scoped, tag = 'scoped memory for braingb_forward.1']
    #allocation22 [shape = 'u8[65536]{0}', space=vmem, size = 0x10000, scoped, tag = 'input window, operand 21, single buffered']
    #allocation23 [shape = 'u8[1024]{0}', space=vmem, size = 0x400, scoped, tag = 'input window, operand 22, single buffered']
    #allocation24 [shape = 's32[1]{0}', space=sflag, size = 0x4, scoped, tag = 'scoped memory for braingb_forward.1']
    #allocation25 [shape = 'u8[512]{0}', space=vmem, size = 0x400, scoped, tag = 'input window, operand 24, single buffered']
    #allocation26 [shape = 'u8[512]{0}', space=vmem, size = 0x400, scoped, tag = 'input window, operand 26, single buffered']
    #allocation27 [shape = 's32[1]{0}', space=sflag, size = 0x4, scoped, tag = 'scoped memory for braingb_forward.1']
    #allocation28 [shape = 'u8[1024]{0}', space=vmem, size = 0x400, scoped, tag = 'output window, operand 0, single buffered']
    %34 = vsyncpa [#allocation3], 0
    %35 = vsyncpa [#allocation6], 0
    %36 = vsyncpa [#allocation9], 0
    %37 = vsyncpa [#allocation12], 0
    %38 = vsyncpa [#allocation15], 0
    %39 = vsyncpa [#allocation18], 0
    %40 = vsyncpa [#allocation21], 0
    %41 = vsyncpa [#allocation24], 0
    %42 = vsyncpa [#allocation27], 0
    %43 = vsyncpa [#allocation4], 0
    // Predicated region
    $region2: #{braingb_forward.1} parent=1 // pred_check
      _
    $region3: #{braingb_forward.1} parent=1 // pred_check_branch
      %45 = sbr.rel (0) target = $region5
    $region4: #{braingb_forward.1} parent=1 // pred_region
      %s47 = ssub.s32 512, 512
      %48 = vsyncadd [#allocation3], %s47
      %s49 = sshll.u32 [#allocation2], 4
      %s50 = int_to_ptr.vmem [resolvable:$true] %s49
      %55 = dma.hbm_to_vmem [thread:$0]  %s0, 512, %s50, [#allocation3], 128, 128, 8
    $region5: #{braingb_forward.1} parent=1 // pred_fallthru
      _
    // Predicated region
    $region6: #{braingb_forward.1} parent=1 // pred_check
      _
    $region7: #{braingb_forward.1} parent=1 // pred_check_branch
      %57 = sbr.rel (0) target = $region9
    $region8: #{braingb_forward.1} parent=1 // pred_region
      _
    $region9: #{braingb_forward.1} parent=1 // pred_fallthru
      _
    // Predicated region
    $region10: #{braingb_forward.1} parent=1 // pred_check
      _
    $region11: #{braingb_forward.1} parent=1 // pred_check_branch
      %59 = sbr.rel (0) target = $region13
    $region12: #{braingb_forward.1} parent=1 // pred_region
      _
    $region13: #{braingb_forward.1} parent=1 // pred_fallthru
      _
    // Predicated region
    $region14: #{braingb_forward.1} parent=1 // pred_check
      _
    $region15: #{braingb_forward.1} parent=1 // pred_check_branch
      %61 = sbr.rel (0) target = $region17
    $region16: #{braingb_forward.1} parent=1 // pred_region
      _
    $region17: #{braingb_forward.1} parent=1 // pred_fallthru
      _
    // Predicated region
    $region18: #{braingb_forward.1} parent=1 // pred_check
      _
    $region19: #{braingb_forward.1} parent=1 // pred_check_branch
      %63 = sbr.rel (0) target = $region21
    $region20: #{braingb_forward.1} parent=1 // pred_region
      _
    $region21: #{braingb_forward.1} parent=1 // pred_fallthru
      _
    // Predicated region
    $region22: #{braingb_forward.1} parent=1 // pred_check
      _
    $region23: #{braingb_forward.1} parent=1 // pred_check_branch
      %65 = sbr.rel (0) target = $region25
    $region24: #{braingb_forward.1} parent=1 // pred_region
      _
    $region25: #{braingb_forward.1} parent=1 // pred_fallthru
      _
    // Predicated region
    $region26: #{braingb_forward.1} parent=1 // pred_check
      _
    $region27: #{braingb_forward.1} parent=1 // pred_check_branch
      %67 = sbr.rel (0) target = $region29
    $region28: #{braingb_forward.1} parent=1 // pred_region
      %s69 = ssub.s32 32, 32
      %70 = vsyncadd [#allocation6], %s69
      %s72 = sshll.u32 [#allocation5], 4
      %s73 = int_to_ptr.vmem [resolvable:$true] %s72
      %75 = dma.hbm_to_vmem [thread:$0]  %s6, 32, %s73, [#allocation6]
    $region29: #{braingb_forward.1} parent=1 // pred_fallthru
      _
    // Predicated region
    $region30: #{braingb_forward.1} parent=1 // pred_check
      _
    $region31: #{braingb_forward.1} parent=1 // pred_check_branch
      %77 = sbr.rel (0) target = $region33
    $region32: #{braingb_forward.1} parent=1 // pred_region
      _
    $region33: #{braingb_forward.1} parent=1 // pred_fallthru
      _
    // Predicated region
    $region34: #{braingb_forward.1} parent=1 // pred_check
      _
    $region35: #{braingb_forward.1} parent=1 // pred_check_branch
      %79 = sbr.rel (0) target = $region37
    $region36: #{braingb_forward.1} parent=1 // pred_region
      %s81 = ssub.s32 32, 32
      %82 = vsyncadd [#allocation6], %s81
      %s84 = sshll.u32 [#allocation7], 4
      %s85 = int_to_ptr.vmem [resolvable:$true] %s84
      %87 = dma.hbm_to_vmem [thread:$0]  %s8, 32, %s85, [#allocation6]
    $region37: #{braingb_forward.1} parent=1 // pred_fallthru
      _
    // Predicated region
    $region38: #{braingb_forward.1} parent=1 // pred_check
      _
    $region39: #{braingb_forward.1} parent=1 // pred_check_branch
      %89 = sbr.rel (0) target = $region41
    $region40: #{braingb_forward.1} parent=1 // pred_region
      %s91 = ssub.s32 32, 32
      %92 = vsyncadd [#allocation9], %s91
      %s94 = sshll.u32 [#allocation8], 4
      %s95 = int_to_ptr.vmem [resolvable:$true] %s94
      %97 = dma.hbm_to_vmem [thread:$0]  %s9, 32, %s95, [#allocation9]
    $region41: #{braingb_forward.1} parent=1 // pred_fallthru
      _
    // Predicated region
    $region42: #{braingb_forward.1} parent=1 // pred_check
      _
    $region43: #{braingb_forward.1} parent=1 // pred_check_branch
      %99 = sbr.rel (0) target = $region45
    $region44: #{braingb_forward.1} parent=1 // pred_region
      %s101 = ssub.s32 32, 32
      %102 = vsyncadd [#allocation9], %s101
      %s104 = sshll.u32 [#allocation10], 4
      %s105 = int_to_ptr.vmem [resolvable:$true] %s104
      %107 = dma.hbm_to_vmem [thread:$0]  %s10, 32, %s105, [#allocation9]
    $region45: #{braingb_forward.1} parent=1 // pred_fallthru
      _
    // Predicated region
    $region46: #{braingb_forward.1} parent=1 // pred_check
      _
    $region47: #{braingb_forward.1} parent=1 // pred_check_branch
      %109 = sbr.rel (0) target = $region49
    $region48: #{braingb_forward.1} parent=1 // pred_region
      %s111 = ssub.s32 4096, 4096
      %112 = vsyncadd [#allocation12], %s111
      %s113 = sshll.u32 [#allocation11], 4
      %s114 = int_to_ptr.vmem [resolvable:$true] %s113
      %119 = dma.hbm_to_vmem [thread:$0]  %s11, 4096, %s114, [#allocation12], 128, 128, 8
    $region49: #{braingb_forward.1} parent=1 // pred_fallthru
      _
    // Predicated region
    $region50: #{braingb_forward.1} parent=1 // pred_check
      _
    $region51: #{braingb_forward.1} parent=1 // pred_check_branch
      %121 = sbr.rel (0) target = $region53
    $region52: #{braingb_forward.1} parent=1 // pred_region
      %s123 = ssub.s32 4096, 4096
      %124 = vsyncadd [#allocation12], %s123
      %s125 = sshll.u32 [#allocation13], 4
      %s126 = int_to_ptr.vmem [resolvable:$true] %s125
      %131 = dma.hbm_to_vmem [thread:$0]  %s12, 4096, %s126, [#allocation12], 128, 128, 8
    $region53: #{braingb_forward.1} parent=1 // pred_fallthru
      _
    // Predicated region
    $region54: #{braingb_forward.1} parent=1 // pred_check
      _
    $region55: #{braingb_forward.1} parent=1 // pred_check_branch
      %133 = sbr.rel (0) target = $region57
    $region56: #{braingb_forward.1} parent=1 // pred_region
      %s135 = ssub.s32 4096, 4096
      %136 = vsyncadd [#allocation15], %s135
      %s137 = sshll.u32 [#allocation14], 4
      %s138 = int_to_ptr.vmem [resolvable:$true] %s137
      %143 = dma.hbm_to_vmem [thread:$0]  %s13, 4096, %s138, [#allocation15], 128, 128, 8
    $region57: #{braingb_forward.1} parent=1 // pred_fallthru
      _
    // Predicated region
    $region58: #{braingb_forward.1} parent=1 // pred_check
      _
    $region59: #{braingb_forward.1} parent=1 // pred_check_branch
      %145 = sbr.rel (0) target = $region61
    $region60: #{braingb_forward.1} parent=1 // pred_region
      %s147 = ssub.s32 32, 32
      %148 = vsyncadd [#allocation15], %s147
      %s150 = sshll.u32 [#allocation16], 4
      %s151 = int_to_ptr.vmem [resolvable:$true] %s150
      %153 = dma.hbm_to_vmem [thread:$0]  %s14, 32, %s151, [#allocation15]
    $region61: #{braingb_forward.1} parent=1 // pred_fallthru
      _
    // Predicated region
    $region62: #{braingb_forward.1} parent=1 // pred_check
      _
    $region63: #{braingb_forward.1} parent=1 // pred_check_branch
      %155 = sbr.rel (0) target = $region65
    $region64: #{braingb_forward.1} parent=1 // pred_region
      _
    $region65: #{braingb_forward.1} parent=1 // pred_fallthru
      _
    // Predicated region
    $region66: #{braingb_forward.1} parent=1 // pred_check
      _
    $region67: #{braingb_forward.1} parent=1 // pred_check_branch
      %157 = sbr.rel (0) target = $region69
    $region68: #{braingb_forward.1} parent=1 // pred_region
      _
    $region69: #{braingb_forward.1} parent=1 // pred_fallthru
      _
    // Predicated region
    $region70: #{braingb_forward.1} parent=1 // pred_check
      _
    $region71: #{braingb_forward.1} parent=1 // pred_check_branch
      %159 = sbr.rel (0) target = $region73
    $region72: #{braingb_forward.1} parent=1 // pred_region
      _
    $region73: #{braingb_forward.1} parent=1 // pred_fallthru
      _
    // Predicated region
    $region74: #{braingb_forward.1} parent=1 // pred_check
      _
    $region75: #{braingb_forward.1} parent=1 // pred_check_branch
      %161 = sbr.rel (0) target = $region77
    $region76: #{braingb_forward.1} parent=1 // pred_region
      %s163 = ssub.s32 16, 16
      %164 = vsyncadd [#allocation18], %s163
      %s166 = sshll.u32 [#allocation17], 4
      %s167 = int_to_ptr.vmem [resolvable:$true] %s166
      %169 = dma.hbm_to_vmem [thread:$0]  %s18, 16, %s167, [#allocation18]
    $region77: #{braingb_forward.1} parent=1 // pred_fallthru
      _
    // Predicated region
    $region78: #{braingb_forward.1} parent=1 // pred_check
      _
    $region79: #{braingb_forward.1} parent=1 // pred_check_branch
      %171 = sbr.rel (0) target = $region81
    $region80: #{braingb_forward.1} parent=1 // pred_region
      %s173 = ssub.s32 16, 16
      %174 = vsyncadd [#allocation18], %s173
      %s176 = sshll.u32 [#allocation19], 4
      %s177 = int_to_ptr.vmem [resolvable:$true] %s176
      %179 = dma.hbm_to_vmem [thread:$0]  %s19, 16, %s177, [#allocation18]
    $region81: #{braingb_forward.1} parent=1 // pred_fallthru
      _
    // Predicated region
    $region82: #{braingb_forward.1} parent=1 // pred_check
      _
    $region83: #{braingb_forward.1} parent=1 // pred_check_branch
      %181 = sbr.rel (0) target = $region85
    $region84: #{braingb_forward.1} parent=1 // pred_region
      %s183 = ssub.s32 16, 16
      %184 = vsyncadd [#allocation21], %s183
      %s186 = sshll.u32 [#allocation20], 4
      %s187 = int_to_ptr.vmem [resolvable:$true] %s186
      %189 = dma.hbm_to_vmem [thread:$0]  %s20, 16, %s187, [#allocation21]
    $region85: #{braingb_forward.1} parent=1 // pred_fallthru
      _
    // Predicated region
    $region86: #{braingb_forward.1} parent=1 // pred_check
      _
    $region87: #{braingb_forward.1} parent=1 // pred_check_branch
      %191 = sbr.rel (0) target = $region89
    $region88: #{braingb_forward.1} parent=1 // pred_region
      %s193 = ssub.s32 2048, 2048
      %194 = vsyncadd [#allocation21], %s193
      %s195 = sshll.u32 [#allocation22], 4
      %s196 = int_to_ptr.vmem [resolvable:$true] %s195
      %201 = dma.hbm_to_vmem [thread:$0]  %s21, 2048, %s196, [#allocation21], 128, 128, 8
    $region89: #{braingb_forward.1} parent=1 // pred_fallthru
      _
    // Predicated region
    $region90: #{braingb_forward.1} parent=1 // pred_check
      _
    $region91: #{braingb_forward.1} parent=1 // pred_check_branch
      %203 = sbr.rel (0) target = $region93
    $region92: #{braingb_forward.1} parent=1 // pred_region
      %s205 = ssub.s32 32, 32
      %206 = vsyncadd [#allocation24], %s205
      %s208 = sshll.u32 [#allocation23], 4
      %s209 = int_to_ptr.vmem [resolvable:$true] %s208
      %211 = dma.hbm_to_vmem [thread:$0]  %s22, 32, %s209, [#allocation24]
    $region93: #{braingb_forward.1} parent=1 // pred_fallthru
      _
    // Predicated region
    $region94: #{braingb_forward.1} parent=1 // pred_check
      _
    $region95: #{braingb_forward.1} parent=1 // pred_check_branch
      %213 = sbr.rel (0) target = $region97
    $region96: #{braingb_forward.1} parent=1 // pred_region
      _
    $region97: #{braingb_forward.1} parent=1 // pred_fallthru
      _
    // Predicated region
    $region98: #{braingb_forward.1} parent=1 // pred_check
      _
    $region99: #{braingb_forward.1} parent=1 // pred_check_branch
      %215 = sbr.rel (0) target = $region101
    $region100: #{braingb_forward.1} parent=1 // pred_region
      %s217 = ssub.s32 16, 16
      %218 = vsyncadd [#allocation24], %s217
      %s220 = sshll.u32 [#allocation25], 4
      %s221 = int_to_ptr.vmem [resolvable:$true] %s220
      %223 = dma.hbm_to_vmem [thread:$0]  %s24, 16, %s221, [#allocation24]
    $region101: #{braingb_forward.1} parent=1 // pred_fallthru
      _
    // Predicated region
    $region102: #{braingb_forward.1} parent=1 // pred_check
      _
    $region103: #{braingb_forward.1} parent=1 // pred_check_branch
      %225 = sbr.rel (0) target = $region105
    $region104: #{braingb_forward.1} parent=1 // pred_region
      _
    $region105: #{braingb_forward.1} parent=1 // pred_fallthru
      _
    // Predicated region
    $region106: #{braingb_forward.1} parent=1 // pred_check
      _
    $region107: #{braingb_forward.1} parent=1 // pred_check_branch
      %227 = sbr.rel (0) target = $region109
    $region108: #{braingb_forward.1} parent=1 // pred_region
      %s229 = ssub.s32 16, 16
      %230 = vsyncadd [#allocation27], %s229
      %s232 = sshll.u32 [#allocation26], 4
      %s233 = int_to_ptr.vmem [resolvable:$true] %s232
      %235 = dma.hbm_to_vmem [thread:$0]  %s26, 16, %s233, [#allocation27]
    $region109: #{braingb_forward.1} parent=1 // pred_fallthru
      _
    // Predicated region
    $region110: #{braingb_forward.1} parent=1 // pred_check
      _
    $region111: #{braingb_forward.1} parent=1 // pred_check_branch
      %237 = sbr.rel (0) target = $region113
    $region112: #{braingb_forward.1} parent=1 // pred_region
      %238 = dma.done [#allocation3], 512
    $region113: #{braingb_forward.1} parent=1 // pred_fallthru
      _
    // Predicated region
    $region114: #{braingb_forward.1} parent=1 // pred_check
      _
    $region115: #{braingb_forward.1} parent=1 // pred_check_branch
      %240 = sbr.rel (0) target = $region117
    $region116: #{braingb_forward.1} parent=1 // pred_region
      %241 = dma.done [#allocation6], 32
    $region117: #{braingb_forward.1} parent=1 // pred_fallthru
      _
    // Predicated region
    $region118: #{braingb_forward.1} parent=1 // pred_check
      _
    $region119: #{braingb_forward.1} parent=1 // pred_check_branch
      %243 = sbr.rel (0) target = $region121
    $region120: #{braingb_forward.1} parent=1 // pred_region
      %244 = dma.done [#allocation6], 32
    $region121: #{braingb_forward.1} parent=1 // pred_fallthru
      _
    // Predicated region
    $region122: #{braingb_forward.1} parent=1 // pred_check
      _
    $region123: #{braingb_forward.1} parent=1 // pred_check_branch
      %246 = sbr.rel (0) target = $region125
    $region124: #{braingb_forward.1} parent=1 // pred_region
      %247 = dma.done [#allocation9], 32
    $region125: #{braingb_forward.1} parent=1 // pred_fallthru
      _
    // Predicated region
    $region126: #{braingb_forward.1} parent=1 // pred_check
      _
    $region127: #{braingb_forward.1} parent=1 // pred_check_branch
      %249 = sbr.rel (0) target = $region129
    $region128: #{braingb_forward.1} parent=1 // pred_region
      %250 = dma.done [#allocation9], 32
    $region129: #{braingb_forward.1} parent=1 // pred_fallthru
      _
    // Predicated region
    $region130: #{braingb_forward.1} parent=1 // pred_check
      _
    $region131: #{braingb_forward.1} parent=1 // pred_check_branch
      %252 = sbr.rel (0) target = $region133
    $region132: #{braingb_forward.1} parent=1 // pred_region
      %253 = dma.done [#allocation12], 4096
    $region133: #{braingb_forward.1} parent=1 // pred_fallthru
      _
    // Predicated region
    $region134: #{braingb_forward.1} parent=1 // pred_check
      _
    $region135: #{braingb_forward.1} parent=1 // pred_check_branch
      %255 = sbr.rel (0) target = $region137
    $region136: #{braingb_forward.1} parent=1 // pred_region
      %256 = dma.done [#allocation12], 4096
    $region137: #{braingb_forward.1} parent=1 // pred_fallthru
      _
    // Predicated region
    $region138: #{braingb_forward.1} parent=1 // pred_check
      _
    $region139: #{braingb_forward.1} parent=1 // pred_check_branch
      %258 = sbr.rel (0) target = $region141
    $region140: #{braingb_forward.1} parent=1 // pred_region
      %259 = dma.done [#allocation15], 4096
    $region141: #{braingb_forward.1} parent=1 // pred_fallthru
      _
    // Predicated region
    $region142: #{braingb_forward.1} parent=1 // pred_check
      _
    $region143: #{braingb_forward.1} parent=1 // pred_check_branch
      %261 = sbr.rel (0) target = $region145
    $region144: #{braingb_forward.1} parent=1 // pred_region
      %262 = dma.done [#allocation15], 32
    $region145: #{braingb_forward.1} parent=1 // pred_fallthru
      _
    // Predicated region
    $region146: #{braingb_forward.1} parent=1 // pred_check
      _
    $region147: #{braingb_forward.1} parent=1 // pred_check_branch
      %264 = sbr.rel (0) target = $region149
    $region148: #{braingb_forward.1} parent=1 // pred_region
      %265 = dma.done [#allocation18], 16
    $region149: #{braingb_forward.1} parent=1 // pred_fallthru
      _
    // Predicated region
    $region150: #{braingb_forward.1} parent=1 // pred_check
      _
    $region151: #{braingb_forward.1} parent=1 // pred_check_branch
      %267 = sbr.rel (0) target = $region153
    $region152: #{braingb_forward.1} parent=1 // pred_region
      %268 = dma.done [#allocation18], 16
    $region153: #{braingb_forward.1} parent=1 // pred_fallthru
      _
    // Predicated region
    $region154: #{braingb_forward.1} parent=1 // pred_check
      _
    $region155: #{braingb_forward.1} parent=1 // pred_check_branch
      %270 = sbr.rel (0) target = $region157
    $region156: #{braingb_forward.1} parent=1 // pred_region
      %271 = dma.done [#allocation21], 16
    $region157: #{braingb_forward.1} parent=1 // pred_fallthru
      _
    // Predicated region
    $region158: #{braingb_forward.1} parent=1 // pred_check
      _
    $region159: #{braingb_forward.1} parent=1 // pred_check_branch
      %273 = sbr.rel (0) target = $region161
    $region160: #{braingb_forward.1} parent=1 // pred_region
      %274 = dma.done [#allocation21], 2048
    $region161: #{braingb_forward.1} parent=1 // pred_fallthru
      _
    // Predicated region
    $region162: #{braingb_forward.1} parent=1 // pred_check
      _
    $region163: #{braingb_forward.1} parent=1 // pred_check_branch
      %276 = sbr.rel (0) target = $region165
    $region164: #{braingb_forward.1} parent=1 // pred_region
      %277 = dma.done [#allocation24], 32
    $region165: #{braingb_forward.1} parent=1 // pred_fallthru
      _
    // Predicated region
    $region166: #{braingb_forward.1} parent=1 // pred_check
      _
    $region167: #{braingb_forward.1} parent=1 // pred_check_branch
      %279 = sbr.rel (0) target = $region169
    $region168: #{braingb_forward.1} parent=1 // pred_region
      %280 = dma.done [#allocation24], 16
    $region169: #{braingb_forward.1} parent=1 // pred_fallthru
      _
    // Predicated region
    $region170: #{braingb_forward.1} parent=1 // pred_check
      _
    $region171: #{braingb_forward.1} parent=1 // pred_check_branch
      %282 = sbr.rel (0) target = $region173
    $region172: #{braingb_forward.1} parent=1 // pred_region
      %283 = dma.done [#allocation27], 16
    $region173: #{braingb_forward.1} parent=1 // pred_fallthru
      _
    %v285 = vld [vmem:[%s1] sm:$0xf]
    %v286 = vld [vmem:[%s1 + $0x4] sm:$0xf]
    %v287 = vld [vmem:[%s1 + $0x8] sm:$0xf]
    %v288 = vld [vmem:[%s1 + $0xc] sm:$0xf]
    %v289 = vld [vmem:[%s2] sm:$0xff]
    %v290 = vld [vmem:[%s2 + $0x8] sm:$0xff]
    %v291 = vld [vmem:[%s2 + $0x10] sm:$0xff]
    %v292 = vld [vmem:[%s2 + $0x18] sm:$0xff]
    %294 = vset.pattern.permute.xlu0 0
    %295 = vperm.xlu0 %294, %v289
    %v296 = vpop.permute.xlu0 %295
    %299 = vset.pattern.permute.xlu0 0
    %300 = vperm.xlu0 %299, %v290
    %v301 = vpop.permute.xlu0 %300
    %304 = vset.pattern.permute.xlu0 0
    %305 = vperm.xlu0 %304, %v291
    %v306 = vpop.permute.xlu0 %305
    %309 = vset.pattern.permute.xlu0 0
    %310 = vperm.xlu0 %309, %v292
    %v311 = vpop.permute.xlu0 %310
    %v313 = vld [vmem:[#allocation2] sm:$0xff]
    %v314 = vld [vmem:[#allocation2 + $0x8] sm:$0xff]
    %v315 = vld [vmem:[#allocation2 + $0x10] sm:$0xff]
    %v316 = vld [vmem:[#allocation2 + $0x18] sm:$0xff]
    %v317 = vpack.c.bf16 %v314, %v313
    %v318 = vpack.c.bf16 %v316, %v315
    %v319 = vld [vmem:[%s3] sm:$0xff]
    %v320 = vld [vmem:[%s3 + $0x8] sm:$0xff]
    %v323 = vunpack.c.l.b16 %v319
    %v324 = vunpack.c.h.b16 %v319
    %v325 = vunpack.c.l.b16 %v320
    %v326 = vunpack.c.h.b16 %v320
    %v327 = vpack.c.b16 %v325, %v323
    %v328 = vpack.c.b16 %v326, %v324
    %vm331 = vcmask 130048
    %v333 = vsel %vm331, %v317, 0
    %v336 = vsel %vm331, %v318, 0
    %338 = vmatprep.subr.bf16.mxu0 %v328
    %339 = vmatpush1.bf16.msra.mxu0 %v327
    %340 = vmatprep.subr.bf16.mxu0 0
    %341 = vmatpush1.bf16.msra.mxu0 0
    %342 = vmatprep.subr.bf16.mxu0 0
    %343 = vmatpush1.bf16.msra.mxu0 0
    %344 = vmatprep.subr.bf16.mxu0 0
    %345 = vmatpush1.bf16.msra.mxu0 0
    %346 = vmatprep.subr.bf16.mxu0 0
    %347 = vmatpush1.bf16.msra.mxu0 0
    %348 = vmatprep.subr.bf16.mxu0 0
    %349 = vmatpush1.bf16.msra.mxu0 0
    %350 = vmatprep.subr.bf16.mxu0 0
    %351 = vmatpush1.bf16.msra.mxu0 0
    %352 = vmatprep.subr.bf16.mxu0 0
    %353 = vmatpush1.bf16.msra.mxu0 0
    %354 = vmatprep.subr.bf16.mxu0 0
    %355 = vmatpush1.bf16.msra.mxu0 0
    %356 = vmatprep.subr.bf16.mxu0 0
    %357 = vmatpush1.bf16.msra.mxu0 0
    %358 = vmatprep.subr.bf16.mxu0 0
    %359 = vmatpush1.bf16.msra.mxu0 0
    %360 = vmatprep.subr.bf16.mxu0 0
    %361 = vmatpush1.bf16.msra.mxu0 0
    %362 = vmatprep.subr.bf16.mxu0 0
    %363 = vmatpush1.bf16.msra.mxu0 0
    %364 = vmatprep.subr.bf16.mxu0 0
    %365 = vmatpush1.bf16.msra.mxu0 0
    %366 = vmatprep.subr.bf16.mxu0 0
    %367 = vmatpush1.bf16.msra.mxu0 0
    %368 = vmatprep.subr.bf16.mxu0 0
    %369 = vmatpush1.bf16.msra.mxu0 0
    %370 = vmatprep.mubr.bf16.mxu0 0
    %371 = vmatmul.mubr.bf16.gmra.mrb[0].mxu0 %v333
    %v372 = vpop.f32.mrb[0].mxu0
    %v373 = vadd.f32 0.0, %v372
    %v374 = vpop.f32.mrb[0].mxu0
    %v375 = vadd.f32 0.0, %v374
    %v376 = vpop.f32.mrb[0].mxu0
    %v377 = vadd.f32 0.0, %v376
    %v378 = vpop.f32.mrb[0].mxu0
    %v379 = vadd.f32 0.0, %v378
    %380 = vmatprep.mubr.bf16.mxu0 0
    %381 = vmatmul.mubr.bf16.gmra.mrb[0].mxu0 %v336
    %v382 = vpop.f32.mrb[0].mxu0
    %v383 = vadd.f32 0.0, %v382
    %v384 = vpop.f32.mrb[0].mxu0
    %v385 = vadd.f32 0.0, %v384
    %v386 = vpop.f32.mrb[0].mxu0
    %v387 = vadd.f32 0.0, %v386
    %v388 = vpop.f32.mrb[0].mxu0
    %v389 = vadd.f32 0.0, %v388
    %390 = vdwg.mxu0
    %v391 = vpack.c.bf16 %v377, %v373
    %v392 = vpack.c.bf16 %v379, %v375
    %v393 = vpack.c.bf16 %v387, %v383
    %v394 = vpack.c.bf16 %v389, %v385
    %v399 = vunpack.c.l.b16 %v285
    %v400 = vunpack.c.l.b16 %v286
    %v401 = vunpack.c.l.b16 %v287
    %v402 = vunpack.c.l.b16 %v288
    %v403 = vpack.c.b16 %v400, %v399
    %v404 = vpack.c.b16 %v402, %v401
    %vm405 = vcmask 261120
    %v407 = vsel %vm405, %v403, 0
    %v410 = vsel %vm405, %v404, 0
    %412 = vmatprep.subr.bf16.mxu0 %v392
    %413 = vmatpush1.bf16.msra.mxu0 %v391
    %414 = vmatprep.subr.bf16.mxu0 %v394
    %415 = vmatpush1.bf16.msra.mxu0 %v393
    %416 = vmatprep.subr.bf16.mxu0 0
    %417 = vmatpush1.bf16.msra.mxu0 0
    %418 = vmatprep.subr.bf16.mxu0 0
    %419 = vmatpush1.bf16.msra.mxu0 0
    %420 = vmatprep.subr.bf16.mxu0 0
    %421 = vmatpush1.bf16.msra.mxu0 0
    %422 = vmatprep.subr.bf16.mxu0 0
    %423 = vmatpush1.bf16.msra.mxu0 0
    %424 = vmatprep.subr.bf16.mxu0 0
    %425 = vmatpush1.bf16.msra.mxu0 0
    %426 = vmatprep.subr.bf16.mxu0 0
    %427 = vmatpush1.bf16.msra.mxu0 0
    %428 = vmatprep.subr.bf16.mxu0 0
    %429 = vmatpush1.bf16.msra.mxu0 0
    %430 = vmatprep.subr.bf16.mxu0 0
    %431 = vmatpush1.bf16.msra.mxu0 0
    %432 = vmatprep.subr.bf16.mxu0 0
    %433 = vmatpush1.bf16.msra.mxu0 0
    %434 = vmatprep.subr.bf16.mxu0 0
    %435 = vmatpush1.bf16.msra.mxu0 0
    %436 = vmatprep.subr.bf16.mxu0 0
    %437 = vmatpush1.bf16.msra.mxu0 0
    %438 = vmatprep.subr.bf16.mxu0 0
    %439 = vmatpush1.bf16.msra.mxu0 0
    %440 = vmatprep.subr.bf16.mxu0 0
    %441 = vmatpush1.bf16.msra.mxu0 0
    %442 = vmatprep.subr.bf16.mxu0 0
    %443 = vmatpush1.bf16.msra.mxu0 0
    %444 = vmatprep.mubr.bf16.mxu0 0
    %445 = vmatmul.mubr.bf16.gmra.mrb[0].mxu0 %v407
    %v446 = vpop.f32.mrb[0].mxu0
    %v447 = vadd.f32 0.0, %v446
    %v448 = vpop.f32.mrb[0].mxu0
    %v449 = vadd.f32 0.0, %v448
    %v450 = vpop.f32.mrb[0].mxu0
    %v451 = vadd.f32 0.0, %v450
    %v452 = vpop.f32.mrb[0].mxu0
    %v453 = vadd.f32 0.0, %v452
    %454 = vmatprep.mubr.bf16.mxu0 0
    %455 = vmatmul.mubr.bf16.gmra.mrb[0].mxu0 %v410
    %v456 = vpop.f32.mrb[0].mxu0
    %v457 = vadd.f32 0.0, %v456
    %v458 = vpop.f32.mrb[0].mxu0
    %v459 = vadd.f32 0.0, %v458
    %v460 = vpop.f32.mrb[0].mxu0
    %v461 = vadd.f32 0.0, %v460
    %v462 = vpop.f32.mrb[0].mxu0
    %v463 = vadd.f32 0.0, %v462
    %464 = vdwg.mxu0
    %v465 = vld [vmem:[%s4] sm:$0xff]
    %v466 = vld [vmem:[%s4 + $0x8] sm:$0xff]
    %v467 = vld [vmem:[%s4 + $0x10] sm:$0xff]
    %v468 = vld [vmem:[%s4 + $0x18] sm:$0xff]
    %v469 = vld [vmem:[%s4 + $0x20] sm:$0xff]
    %v470 = vld [vmem:[%s4 + $0x28] sm:$0xff]
    %v471 = vld [vmem:[%s4 + $0x30] sm:$0xff]
    %v472 = vld [vmem:[%s4 + $0x38] sm:$0xff]
    %v473 = vld [vmem:[%s4 + $0x40] sm:$0xff]
    %v474 = vld [vmem:[%s4 + $0x48] sm:$0xff]
    %v475 = vld [vmem:[%s4 + $0x50] sm:$0xff]
    %v476 = vld [vmem:[%s4 + $0x58] sm:$0xff]
    %v477 = vld [vmem:[%s4 + $0x60] sm:$0xff]
    %v478 = vld [vmem:[%s4 + $0x68] sm:$0xff]
    %v479 = vld [vmem:[%s4 + $0x70] sm:$0xff]
    %v480 = vld [vmem:[%s4 + $0x78] sm:$0xff]
    %v481 = vld [vmem:[%s4 + $0x80] sm:$0xff]
    %v482 = vld [vmem:[%s4 + $0x88] sm:$0xff]
    %v483 = vld [vmem:[%s4 + $0x90] sm:$0xff]
    %v484 = vld [vmem:[%s4 + $0x98] sm:$0xff]
    %v485 = vld [vmem:[%s4 + $0xa0] sm:$0xff]
    %v486 = vld [vmem:[%s4 + $0xa8] sm:$0xff]
    %v487 = vld [vmem:[%s4 + $0xb0] sm:$0xff]
    %v488 = vld [vmem:[%s4 + $0xb8] sm:$0xff]
    %v489 = vld [vmem:[%s4 + $0xc0] sm:$0xff]
    %v490 = vld [vmem:[%s4 + $0xc8] sm:$0xff]
    %v491 = vld [vmem:[%s4 + $0xd0] sm:$0xff]
    %v492 = vld [vmem:[%s4 + $0xd8] sm:$0xff]
    %v493 = vld [vmem:[%s4 + $0xe0] sm:$0xff]
    %v494 = vld [vmem:[%s4 + $0xe8] sm:$0xff]
    %v495 = vld [vmem:[%s4 + $0xf0] sm:$0xff]
    %v496 = vld [vmem:[%s4 + $0xf8] sm:$0xff]
    %v497 = vld [vmem:[#allocation5] sm:$0x3]
    %v499 = vlaneseq
    %v500 = vshrl.u32 %v499, 7
    %v501 = vsub.s32 0, %v500
    %v502 = vrot.slane %v497, %v501
    %v503 = vlaneseq
    %v504 = vshrl.u32 %v503, 7
    %v505 = vsub.s32 1, %v504
    %v506 = vrot.slane %v497, %v505
    %v541 = vunpack.c.l.b16 %v465
    %v542 = vunpack.c.h.b16 %v465
    %v543 = vunpack.c.l.b16 %v466
    %v544 = vunpack.c.h.b16 %v466
    %v545 = vunpack.c.l.b16 %v467
    %v546 = vunpack.c.h.b16 %v467
    %v547 = vunpack.c.l.b16 %v468
    %v548 = vunpack.c.h.b16 %v468
    %v549 = vunpack.c.l.b16 %v469
    %v550 = vunpack.c.h.b16 %v469
    %v551 = vunpack.c.l.b16 %v470
    %v552 = vunpack.c.h.b16 %v470
    %v553 = vunpack.c.l.b16 %v471
    %v554 = vunpack.c.h.b16 %v471
    %v555 = vunpack.c.l.b16 %v472
    %v556 = vunpack.c.h.b16 %v472
    %v557 = vunpack.c.l.b16 %v473
    %v558 = vunpack.c.h.b16 %v473
    %v559 = vunpack.c.l.b16 %v474
    %v560 = vunpack.c.h.b16 %v474
    %v561 = vunpack.c.l.b16 %v475
    %v562 = vunpack.c.h.b16 %v475
    %v563 = vunpack.c.l.b16 %v476
    %v564 = vunpack.c.h.b16 %v476
    %v565 = vunpack.c.l.b16 %v477
    %v566 = vunpack.c.h.b16 %v477
    %v567 = vunpack.c.l.b16 %v478
    %v568 = vunpack.c.h.b16 %v478
    %v569 = vunpack.c.l.b16 %v479
    %v570 = vunpack.c.h.b16 %v479
    %v571 = vunpack.c.l.b16 %v480
    %v572 = vunpack.c.h.b16 %v480
    %v573 = vunpack.c.l.b16 %v481
    %v574 = vunpack.c.h.b16 %v481
    %v575 = vunpack.c.l.b16 %v482
    %v576 = vunpack.c.h.b16 %v482
    %v577 = vunpack.c.l.b16 %v483
    %v578 = vunpack.c.h.b16 %v483
    %v579 = vunpack.c.l.b16 %v484
    %v580 = vunpack.c.h.b16 %v484
    %v581 = vunpack.c.l.b16 %v485
    %v582 = vunpack.c.h.b16 %v485
    %v583 = vunpack.c.l.b16 %v486
    %v584 = vunpack.c.h.b16 %v486
    %v585 = vunpack.c.l.b16 %v487
    %v586 = vunpack.c.h.b16 %v487
    %v587 = vunpack.c.l.b16 %v488
    %v588 = vunpack.c.h.b16 %v488
    %v589 = vunpack.c.l.b16 %v489
    %v590 = vunpack.c.h.b16 %v489
    %v591 = vunpack.c.l.b16 %v490
    %v592 = vunpack.c.h.b16 %v490
    %v593 = vunpack.c.l.b16 %v491
    %v594 = vunpack.c.h.b16 %v491
    %v595 = vunpack.c.l.b16 %v492
    %v596 = vunpack.c.h.b16 %v492
    %v597 = vunpack.c.l.b16 %v493
    %v598 = vunpack.c.h.b16 %v493
    %v599 = vunpack.c.l.b16 %v494
    %v600 = vunpack.c.h.b16 %v494
    %v601 = vunpack.c.l.b16 %v495
    %v602 = vunpack.c.h.b16 %v495
    %v603 = vunpack.c.l.b16 %v496
    %v604 = vunpack.c.h.b16 %v496
    %v605 = vpack.c.b16 %v543, %v541
    %v606 = vpack.c.b16 %v544, %v542
    %v607 = vpack.c.b16 %v547, %v545
    %v608 = vpack.c.b16 %v548, %v546
    %v609 = vpack.c.b16 %v551, %v549
    %v610 = vpack.c.b16 %v552, %v550
    %v611 = vpack.c.b16 %v555, %v553
    %v612 = vpack.c.b16 %v556, %v554
    %v613 = vpack.c.b16 %v559, %v557
    %v614 = vpack.c.b16 %v560, %v558
    %v615 = vpack.c.b16 %v563, %v561
    %v616 = vpack.c.b16 %v564, %v562
    %v617 = vpack.c.b16 %v567, %v565
    %v618 = vpack.c.b16 %v568, %v566
    %v619 = vpack.c.b16 %v571, %v569
    %v620 = vpack.c.b16 %v572, %v570
    %v621 = vpack.c.b16 %v575, %v573
    %v622 = vpack.c.b16 %v576, %v574
    %v623 = vpack.c.b16 %v579, %v577
    %v624 = vpack.c.b16 %v580, %v578
    %v625 = vpack.c.b16 %v583, %v581
    %v626 = vpack.c.b16 %v584, %v582
    %v627 = vpack.c.b16 %v587, %v585
    %v628 = vpack.c.b16 %v588, %v586
    %v629 = vpack.c.b16 %v591, %v589
    %v630 = vpack.c.b16 %v592, %v590
    %v631 = vpack.c.b16 %v595, %v593
    %v632 = vpack.c.b16 %v596, %v594
    %v633 = vpack.c.b16 %v599, %v597
    %v634 = vpack.c.b16 %v600, %v598
    %v635 = vpack.c.b16 %v603, %v601
    %v636 = vpack.c.b16 %v604, %v602
    %669 = vmatprep.subr.bf16.mxu0 %v606
    %670 = vmatpush1.bf16.msra.mxu0 %v605
    %671 = vmatprep.subr.bf16.mxu0 %v608
    %672 = vmatpush1.bf16.msra.mxu0 %v607
    %673 = vmatprep.subr.bf16.mxu0 %v610
    %674 = vmatpush1.bf16.msra.mxu0 %v609
    %675 = vmatprep.subr.bf16.mxu0 %v612
    %676 = vmatpush1.bf16.msra.mxu0 %v611
    %677 = vmatprep.subr.bf16.mxu0 %v614
    %678 = vmatpush1.bf16.msra.mxu0 %v613
    %679 = vmatprep.subr.bf16.mxu0 %v616
    %680 = vmatpush1.bf16.msra.mxu0 %v615
    %681 = vmatprep.subr.bf16.mxu0 %v618
    %682 = vmatpush1.bf16.msra.mxu0 %v617
    %683 = vmatprep.subr.bf16.mxu0 %v620
    %684 = vmatpush1.bf16.msra.mxu0 %v619
    %685 = vmatprep.subr.bf16.mxu0 %v622
    %686 = vmatpush1.bf16.msra.mxu0 %v621
    %687 = vmatprep.subr.bf16.mxu0 %v624
    %688 = vmatpush1.bf16.msra.mxu0 %v623
    %689 = vmatprep.subr.bf16.mxu0 %v626
    %690 = vmatpush1.bf16.msra.mxu0 %v625
    %691 = vmatprep.subr.bf16.mxu0 %v628
    %692 = vmatpush1.bf16.msra.mxu0 %v627
    %693 = vmatprep.subr.bf16.mxu0 %v630
    %694 = vmatpush1.bf16.msra.mxu0 %v629
    %695 = vmatprep.subr.bf16.mxu0 %v632
    %696 = vmatpush1.bf16.msra.mxu0 %v631
    %697 = vmatprep.subr.bf16.mxu0 %v634
    %698 = vmatpush1.bf16.msra.mxu0 %v633
    %699 = vmatprep.subr.bf16.mxu0 %v636
    %700 = vmatpush1.bf16.msra.mxu0 %v635
    %701 = vmatprep.mubr.bf16.mxu0 %v392
    %702 = vmatmul.mubr.bf16.gmra.mrb[0].mxu0 %v391
    %v703 = vpop.f32.mrb[0].mxu0
    %v704 = vadd.f32 %v502, %v703
    %v705 = vpop.f32.mrb[0].mxu0
    %v706 = vadd.f32 %v506, %v705
    %v707 = vpop.f32.mrb[0].mxu0
    %v708 = vadd.f32 %v502, %v707
    %v709 = vpop.f32.mrb[0].mxu0
    %v710 = vadd.f32 %v506, %v709
    %711 = vmatprep.mubr.bf16.mxu0 %v394
    %712 = vmatmul.mubr.bf16.gmra.mrb[0].mxu0 %v393
    %v713 = vpop.f32.mrb[0].mxu0
    %v714 = vadd.f32 %v502, %v713
    %v715 = vpop.f32.mrb[0].mxu0
    %v716 = vadd.f32 %v506, %v715
    %v717 = vpop.f32.mrb[0].mxu0
    %v718 = vadd.f32 %v502, %v717
    %v719 = vpop.f32.mrb[0].mxu0
    %v720 = vadd.f32 %v506, %v719
    %721 = vdwg.mxu0
    %v722 = vpack.c.bf16 %v451, %v447
    %v723 = vpack.c.bf16 %v453, %v449
    %v724 = vpack.c.bf16 %v461, %v457
    %v725 = vpack.c.bf16 %v463, %v459
    %v726 = vld [vmem:[%s5] sm:$0xff]
    %v727 = vld [vmem:[%s5 + $0x8] sm:$0xff]
    %v728 = vld [vmem:[%s5 + $0x10] sm:$0xff]
    %v729 = vld [vmem:[%s5 + $0x18] sm:$0xff]
    %v730 = vld [vmem:[%s5 + $0x20] sm:$0xff]
    %v731 = vld [vmem:[%s5 + $0x28] sm:$0xff]
    %v732 = vld [vmem:[%s5 + $0x30] sm:$0xff]
    %v733 = vld [vmem:[%s5 + $0x38] sm:$0xff]
    %v734 = vld [vmem:[%s5 + $0x40] sm:$0xff]
    %v735 = vld [vmem:[%s5 + $0x48] sm:$0xff]
    %v736 = vld [vmem:[%s5 + $0x50] sm:$0xff]
    %v737 = vld [vmem:[%s5 + $0x58] sm:$0xff]
    %v738 = vld [vmem:[%s5 + $0x60] sm:$0xff]
    %v739 = vld [vmem:[%s5 + $0x68] sm:$0xff]
    %v740 = vld [vmem:[%s5 + $0x70] sm:$0xff]
    %v741 = vld [vmem:[%s5 + $0x78] sm:$0xff]
    %v742 = vld [vmem:[%s5 + $0x80] sm:$0xff]
    %v743 = vld [vmem:[%s5 + $0x88] sm:$0xff]
    %v744 = vld [vmem:[%s5 + $0x90] sm:$0xff]
    %v745 = vld [vmem:[%s5 + $0x98] sm:$0xff]
    %v746 = vld [vmem:[%s5 + $0xa0] sm:$0xff]
    %v747 = vld [vmem:[%s5 + $0xa8] sm:$0xff]
    %v748 = vld [vmem:[%s5 + $0xb0] sm:$0xff]
    %v749 = vld [vmem:[%s5 + $0xb8] sm:$0xff]
    %v750 = vld [vmem:[%s5 + $0xc0] sm:$0xff]
    %v751 = vld [vmem:[%s5 + $0xc8] sm:$0xff]
    %v752 = vld [vmem:[%s5 + $0xd0] sm:$0xff]
    %v753 = vld [vmem:[%s5 + $0xd8] sm:$0xff]
    %v754 = vld [vmem:[%s5 + $0xe0] sm:$0xff]
    %v755 = vld [vmem:[%s5 + $0xe8] sm:$0xff]
    %v756 = vld [vmem:[%s5 + $0xf0] sm:$0xff]
    %v757 = vld [vmem:[%s5 + $0xf8] sm:$0xff]
    %v790 = vunpack.c.l.b16 %v726
    %v791 = vunpack.c.h.b16 %v726
    %v792 = vunpack.c.l.b16 %v727
    %v793 = vunpack.c.h.b16 %v727
    %v794 = vunpack.c.l.b16 %v728
    %v795 = vunpack.c.h.b16 %v728
    %v796 = vunpack.c.l.b16 %v729
    %v797 = vunpack.c.h.b16 %v729
    %v798 = vunpack.c.l.b16 %v730
    %v799 = vunpack.c.h.b16 %v730
    %v800 = vunpack.c.l.b16 %v731
    %v801 = vunpack.c.h.b16 %v731
    %v802 = vunpack.c.l.b16 %v732
    %v803 = vunpack.c.h.b16 %v732
    %v804 = vunpack.c.l.b16 %v733
    %v805 = vunpack.c.h.b16 %v733
    %v806 = vunpack.c.l.b16 %v734
    %v807 = vunpack.c.h.b16 %v734
    %v808 = vunpack.c.l.b16 %v735
    %v809 = vunpack.c.h.b16 %v735
    %v810 = vunpack.c.l.b16 %v736
    %v811 = vunpack.c.h.b16 %v736
    %v812 = vunpack.c.l.b16 %v737
    %v813 = vunpack.c.h.b16 %v737
    %v814 = vunpack.c.l.b16 %v738
    %v815 = vunpack.c.h.b16 %v738
    %v816 = vunpack.c.l.b16 %v739
    %v817 = vunpack.c.h.b16 %v739
    %v818 = vunpack.c.l.b16 %v740
    %v819 = vunpack.c.h.b16 %v740
    %v820 = vunpack.c.l.b16 %v741
    %v821 = vunpack.c.h.b16 %v741
    %v822 = vunpack.c.l.b16 %v742
    %v823 = vunpack.c.h.b16 %v742
    %v824 = vunpack.c.l.b16 %v743
    %v825 = vunpack.c.h.b16 %v743
    %v826 = vunpack.c.l.b16 %v744
    %v827 = vunpack.c.h.b16 %v744
    %v828 = vunpack.c.l.b16 %v745
    %v829 = vunpack.c.h.b16 %v745
    %v830 = vunpack.c.l.b16 %v746
    %v831 = vunpack.c.h.b16 %v746
    %v832 = vunpack.c.l.b16 %v747
    %v833 = vunpack.c.h.b16 %v747
    %v834 = vunpack.c.l.b16 %v748
    %v835 = vunpack.c.h.b16 %v748
    %v836 = vunpack.c.l.b16 %v749
    %v837 = vunpack.c.h.b16 %v749
    %v838 = vunpack.c.l.b16 %v750
    %v839 = vunpack.c.h.b16 %v750
    %v840 = vunpack.c.l.b16 %v751
    %v841 = vunpack.c.h.b16 %v751
    %v842 = vunpack.c.l.b16 %v752
    %v843 = vunpack.c.h.b16 %v752
    %v844 = vunpack.c.l.b16 %v753
    %v845 = vunpack.c.h.b16 %v753
    %v846 = vunpack.c.l.b16 %v754
    %v847 = vunpack.c.h.b16 %v754
    %v848 = vunpack.c.l.b16 %v755
    %v849 = vunpack.c.h.b16 %v755
    %v850 = vunpack.c.l.b16 %v756
    %v851 = vunpack.c.h.b16 %v756
    %v852 = vunpack.c.l.b16 %v757
    %v853 = vunpack.c.h.b16 %v757
    %v854 = vpack.c.b16 %v792, %v790
    %v855 = vpack.c.b16 %v793, %v791
    %v856 = vpack.c.b16 %v796, %v794
    %v857 = vpack.c.b16 %v797, %v795
    %v858 = vpack.c.b16 %v800, %v798
    %v859 = vpack.c.b16 %v801, %v799
    %v860 = vpack.c.b16 %v804, %v802
    %v861 = vpack.c.b16 %v805, %v803
    %v862 = vpack.c.b16 %v808, %v806
    %v863 = vpack.c.b16 %v809, %v807
    %v864 = vpack.c.b16 %v812, %v810
    %v865 = vpack.c.b16 %v813, %v811
    %v866 = vpack.c.b16 %v816, %v814
    %v867 = vpack.c.b16 %v817, %v815
    %v868 = vpack.c.b16 %v820, %v818
    %v869 = vpack.c.b16 %v821, %v819
    %v870 = vpack.c.b16 %v824, %v822
    %v871 = vpack.c.b16 %v825, %v823
    %v872 = vpack.c.b16 %v828, %v826
    %v873 = vpack.c.b16 %v829, %v827
    %v874 = vpack.c.b16 %v832, %v830
    %v875 = vpack.c.b16 %v833, %v831
    %v876 = vpack.c.b16 %v836, %v834
    %v877 = vpack.c.b16 %v837, %v835
    %v878 = vpack.c.b16 %v840, %v838
    %v879 = vpack.c.b16 %v841, %v839
    %v880 = vpack.c.b16 %v844, %v842
    %v881 = vpack.c.b16 %v845, %v843
    %v882 = vpack.c.b16 %v848, %v846
    %v883 = vpack.c.b16 %v849, %v847
    %v884 = vpack.c.b16 %v852, %v850
    %v885 = vpack.c.b16 %v853, %v851
    %918 = vmatprep.subr.bf16.mxu0 %v855
    %919 = vmatpush1.bf16.msra.mxu0 %v854
    %920 = vmatprep.subr.bf16.mxu0 %v857
    %921 = vmatpush1.bf16.msra.mxu0 %v856
    %922 = vmatprep.subr.bf16.mxu0 %v859
    %923 = vmatpush1.bf16.msra.mxu0 %v858
    %924 = vmatprep.subr.bf16.mxu0 %v861
    %925 = vmatpush1.bf16.msra.mxu0 %v860
    %926 = vmatprep.subr.bf16.mxu0 %v863
    %927 = vmatpush1.bf16.msra.mxu0 %v862
    %928 = vmatprep.subr.bf16.mxu0 %v865
    %929 = vmatpush1.bf16.msra.mxu0 %v864
    %930 = vmatprep.subr.bf16.mxu0 %v867
    %931 = vmatpush1.bf16.msra.mxu0 %v866
    %932 = vmatprep.subr.bf16.mxu0 %v869
    %933 = vmatpush1.bf16.msra.mxu0 %v868
    %934 = vmatprep.subr.bf16.mxu0 %v871
    %935 = vmatpush1.bf16.msra.mxu0 %v870
    %936 = vmatprep.subr.bf16.mxu0 %v873
    %937 = vmatpush1.bf16.msra.mxu0 %v872
    %938 = vmatprep.subr.bf16.mxu0 %v875
    %939 = vmatpush1.bf16.msra.mxu0 %v874
    %940 = vmatprep.subr.bf16.mxu0 %v877
    %941 = vmatpush1.bf16.msra.mxu0 %v876
    %942 = vmatprep.subr.bf16.mxu0 %v879
    %943 = vmatpush1.bf16.msra.mxu0 %v878
    %944 = vmatprep.subr.bf16.mxu0 %v881
    %945 = vmatpush1.bf16.msra.mxu0 %v880
    %946 = vmatprep.subr.bf16.mxu0 %v883
    %947 = vmatpush1.bf16.msra.mxu0 %v882
    %948 = vmatprep.subr.bf16.mxu0 %v885
    %949 = vmatpush1.bf16.msra.mxu0 %v884
    %950 = vmatprep.mubr.bf16.mxu0 %v723
    %951 = vmatmul.mubr.bf16.gmra.mrb[0].mxu0 %v722
    %v952 = vpop.f32.mrb[0].mxu0
    %v953 = vadd.f32 0.0, %v952
    %v954 = vpop.f32.mrb[0].mxu0
    %v955 = vadd.f32 0.0, %v954
    %v956 = vpop.f32.mrb[0].mxu0
    %v957 = vadd.f32 0.0, %v956
    %v958 = vpop.f32.mrb[0].mxu0
    %v959 = vadd.f32 0.0, %v958
    %960 = vmatprep.mubr.bf16.mxu0 %v725
    %961 = vmatmul.mubr.bf16.gmra.mrb[0].mxu0 %v724
    %v962 = vpop.f32.mrb[0].mxu0
    %v963 = vadd.f32 0.0, %v962
    %v964 = vpop.f32.mrb[0].mxu0
    %v965 = vadd.f32 0.0, %v964
    %v966 = vpop.f32.mrb[0].mxu0
    %v967 = vadd.f32 0.0, %v966
    %v968 = vpop.f32.mrb[0].mxu0
    %v969 = vadd.f32 0.0, %v968
    %970 = vdwg.mxu0
    %v971 = vmul.f32 %v296, %v704
    %v972 = vmul.f32 %v296, %v706
    %v973 = vmul.f32 %v301, %v708
    %v974 = vmul.f32 %v301, %v710
    %v975 = vmul.f32 %v306, %v714
    %v976 = vmul.f32 %v306, %v716
    %v977 = vmul.f32 %v311, %v718
    %v978 = vmul.f32 %v311, %v720
    %v979 = vadd.f32 %v971, %v953
    %v980 = vadd.f32 %v972, %v955
    %v981 = vadd.f32 %v973, %v957
    %v982 = vadd.f32 %v974, %v959
    %v983 = vadd.f32 %v975, %v963
    %v984 = vadd.f32 %v976, %v965
    %v985 = vadd.f32 %v977, %v967
    %v986 = vadd.f32 %v978, %v969
    %v987 = vpack.c.bf16 %v981, %v979
    %v988 = vpack.c.bf16 %v982, %v980
    %v989 = vpack.c.bf16 %v985, %v983
    %v990 = vpack.c.bf16 %v986, %v984
    %v991 = vld [vmem:[%s7] sm:$0xff]
    %v992 = vld [vmem:[%s7 + $0x8] sm:$0xff]
    %v993 = vld [vmem:[%s7 + $0x10] sm:$0xff]
    %v994 = vld [vmem:[%s7 + $0x18] sm:$0xff]
    %v995 = vld [vmem:[%s7 + $0x20] sm:$0xff]
    %v996 = vld [vmem:[%s7 + $0x28] sm:$0xff]
    %v997 = vld [vmem:[%s7 + $0x30] sm:$0xff]
    %v998 = vld [vmem:[%s7 + $0x38] sm:$0xff]
    %v999 = vld [vmem:[%s7 + $0x40] sm:$0xff]
    %v1000 = vld [vmem:[%s7 + $0x48] sm:$0xff]
    %v1001 = vld [vmem:[%s7 + $0x50] sm:$0xff]
    %v1002 = vld [vmem:[%s7 + $0x58] sm:$0xff]
    %v1003 = vld [vmem:[%s7 + $0x60] sm:$0xff]
    %v1004 = vld [vmem:[%s7 + $0x68] sm:$0xff]
    %v1005 = vld [vmem:[%s7 + $0x70] sm:$0xff]
    %v1006 = vld [vmem:[%s7 + $0x78] sm:$0xff]
    %v1007 = vld [vmem:[%s7 + $0x80] sm:$0xff]
    %v1008 = vld [vmem:[%s7 + $0x88] sm:$0xff]
    %v1009 = vld [vmem:[%s7 + $0x90] sm:$0xff]
    %v1010 = vld [vmem:[%s7 + $0x98] sm:$0xff]
    %v1011 = vld [vmem:[%s7 + $0xa0] sm:$0xff]
    %v1012 = vld [vmem:[%s7 + $0xa8] sm:$0xff]
    %v1013 = vld [vmem:[%s7 + $0xb0] sm:$0xff]
    %v1014 = vld [vmem:[%s7 + $0xb8] sm:$0xff]
    %v1015 = vld [vmem:[%s7 + $0xc0] sm:$0xff]
    %v1016 = vld [vmem:[%s7 + $0xc8] sm:$0xff]
    %v1017 = vld [vmem:[%s7 + $0xd0] sm:$0xff]
    %v1018 = vld [vmem:[%s7 + $0xd8] sm:$0xff]
    %v1019 = vld [vmem:[%s7 + $0xe0] sm:$0xff]
    %v1020 = vld [vmem:[%s7 + $0xe8] sm:$0xff]
    %v1021 = vld [vmem:[%s7 + $0xf0] sm:$0xff]
    %v1022 = vld [vmem:[%s7 + $0xf8] sm:$0xff]
    %v1023 = vld [vmem:[#allocation7] sm:$0x3]
    %v1025 = vlaneseq
    %v1026 = vshrl.u32 %v1025, 7
    %v1027 = vsub.s32 0, %v1026
    %v1028 = vrot.slane %v1023, %v1027
    %v1029 = vlaneseq
    %v1030 = vshrl.u32 %v1029, 7
    %v1031 = vsub.s32 1, %v1030
    %v1032 = vrot.slane %v1023, %v1031
    %v1067 = vunpack.c.l.b16 %v991
    %v1068 = vunpack.c.h.b16 %v991
    %v1069 = vunpack.c.l.b16 %v992
    %v1070 = vunpack.c.h.b16 %v992
    %v1071 = vunpack.c.l.b16 %v993
    %v1072 = vunpack.c.h.b16 %v993
    %v1073 = vunpack.c.l.b16 %v994
    %v1074 = vunpack.c.h.b16 %v994
    %v1075 = vunpack.c.l.b16 %v995
    %v1076 = vunpack.c.h.b16 %v995
    %v1077 = vunpack.c.l.b16 %v996
    %v1078 = vunpack.c.h.b16 %v996
    %v1079 = vunpack.c.l.b16 %v997
    %v1080 = vunpack.c.h.b16 %v997
    %v1081 = vunpack.c.l.b16 %v998
    %v1082 = vunpack.c.h.b16 %v998
    %v1083 = vunpack.c.l.b16 %v999
    %v1084 = vunpack.c.h.b16 %v999
    %v1085 = vunpack.c.l.b16 %v1000
    %v1086 = vunpack.c.h.b16 %v1000
    %v1087 = vunpack.c.l.b16 %v1001
    %v1088 = vunpack.c.h.b16 %v1001
    %v1089 = vunpack.c.l.b16 %v1002
    %v1090 = vunpack.c.h.b16 %v1002
    %v1091 = vunpack.c.l.b16 %v1003
    %v1092 = vunpack.c.h.b16 %v1003
    %v1093 = vunpack.c.l.b16 %v1004
    %v1094 = vunpack.c.h.b16 %v1004
    %v1095 = vunpack.c.l.b16 %v1005
    %v1096 = vunpack.c.h.b16 %v1005
    %v1097 = vunpack.c.l.b16 %v1006
    %v1098 = vunpack.c.h.b16 %v1006
    %v1099 = vunpack.c.l.b16 %v1007
    %v1100 = vunpack.c.h.b16 %v1007
    %v1101 = vunpack.c.l.b16 %v1008
    %v1102 = vunpack.c.h.b16 %v1008
    %v1103 = vunpack.c.l.b16 %v1009
    %v1104 = vunpack.c.h.b16 %v1009
    %v1105 = vunpack.c.l.b16 %v1010
    %v1106 = vunpack.c.h.b16 %v1010
    %v1107 = vunpack.c.l.b16 %v1011
    %v1108 = vunpack.c.h.b16 %v1011
    %v1109 = vunpack.c.l.b16 %v1012
    %v1110 = vunpack.c.h.b16 %v1012
    %v1111 = vunpack.c.l.b16 %v1013
    %v1112 = vunpack.c.h.b16 %v1013
    %v1113 = vunpack.c.l.b16 %v1014
    %v1114 = vunpack.c.h.b16 %v1014
    %v1115 = vunpack.c.l.b16 %v1015
    %v1116 = vunpack.c.h.b16 %v1015
    %v1117 = vunpack.c.l.b16 %v1016
    %v1118 = vunpack.c.h.b16 %v1016
    %v1119 = vunpack.c.l.b16 %v1017
    %v1120 = vunpack.c.h.b16 %v1017
    %v1121 = vunpack.c.l.b16 %v1018
    %v1122 = vunpack.c.h.b16 %v1018
    %v1123 = vunpack.c.l.b16 %v1019
    %v1124 = vunpack.c.h.b16 %v1019
    %v1125 = vunpack.c.l.b16 %v1020
    %v1126 = vunpack.c.h.b16 %v1020
    %v1127 = vunpack.c.l.b16 %v1021
    %v1128 = vunpack.c.h.b16 %v1021
    %v1129 = vunpack.c.l.b16 %v1022
    %v1130 = vunpack.c.h.b16 %v1022
    %v1131 = vpack.c.b16 %v1069, %v1067
    %v1132 = vpack.c.b16 %v1070, %v1068
    %v1133 = vpack.c.b16 %v1073, %v1071
    %v1134 = vpack.c.b16 %v1074, %v1072
    %v1135 = vpack.c.b16 %v1077, %v1075
    %v1136 = vpack.c.b16 %v1078, %v1076
    %v1137 = vpack.c.b16 %v1081, %v1079
    %v1138 = vpack.c.b16 %v1082, %v1080
    %v1139 = vpack.c.b16 %v1085, %v1083
    %v1140 = vpack.c.b16 %v1086, %v1084
    %v1141 = vpack.c.b16 %v1089, %v1087
    %v1142 = vpack.c.b16 %v1090, %v1088
    %v1143 = vpack.c.b16 %v1093, %v1091
    %v1144 = vpack.c.b16 %v1094, %v1092
    %v1145 = vpack.c.b16 %v1097, %v1095
    %v1146 = vpack.c.b16 %v1098, %v1096
    %v1147 = vpack.c.b16 %v1101, %v1099
    %v1148 = vpack.c.b16 %v1102, %v1100
    %v1149 = vpack.c.b16 %v1105, %v1103
    %v1150 = vpack.c.b16 %v1106, %v1104
    %v1151 = vpack.c.b16 %v1109, %v1107
    %v1152 = vpack.c.b16 %v1110, %v1108
    %v1153 = vpack.c.b16 %v1113, %v1111
    %v1154 = vpack.c.b16 %v1114, %v1112
    %v1155 = vpack.c.b16 %v1117, %v1115
    %v1156 = vpack.c.b16 %v1118, %v1116
    %v1157 = vpack.c.b16 %v1121, %v1119
    %v1158 = vpack.c.b16 %v1122, %v1120
    %v1159 = vpack.c.b16 %v1125, %v1123
    %v1160 = vpack.c.b16 %v1126, %v1124
    %v1161 = vpack.c.b16 %v1129, %v1127
    %v1162 = vpack.c.b16 %v1130, %v1128
    %1195 = vmatprep.subr.bf16.mxu0 %v1132
    %1196 = vmatpush1.bf16.msra.mxu0 %v1131
    %1197 = vmatprep.subr.bf16.mxu0 %v1134
    %1198 = vmatpush1.bf16.msra.mxu0 %v1133
    %1199 = vmatprep.subr.bf16.mxu0 %v1136
    %1200 = vmatpush1.bf16.msra.mxu0 %v1135
    %1201 = vmatprep.subr.bf16.mxu0 %v1138
    %1202 = vmatpush1.bf16.msra.mxu0 %v1137
    %1203 = vmatprep.subr.bf16.mxu0 %v1140
    %1204 = vmatpush1.bf16.msra.mxu0 %v1139
    %1205 = vmatprep.subr.bf16.mxu0 %v1142
    %1206 = vmatpush1.bf16.msra.mxu0 %v1141
    %1207 = vmatprep.subr.bf16.mxu0 %v1144
    %1208 = vmatpush1.bf16.msra.mxu0 %v1143
    %1209 = vmatprep.subr.bf16.mxu0 %v1146
    %1210 = vmatpush1.bf16.msra.mxu0 %v1145
    %1211 = vmatprep.subr.bf16.mxu0 %v1148
    %1212 = vmatpush1.bf16.msra.mxu0 %v1147
    %1213 = vmatprep.subr.bf16.mxu0 %v1150
    %1214 = vmatpush1.bf16.msra.mxu0 %v1149
    %1215 = vmatprep.subr.bf16.mxu0 %v1152
    %1216 = vmatpush1.bf16.msra.mxu0 %v1151
    %1217 = vmatprep.subr.bf16.mxu0 %v1154
    %1218 = vmatpush1.bf16.msra.mxu0 %v1153
    %1219 = vmatprep.subr.bf16.mxu0 %v1156
    %1220 = vmatpush1.bf16.msra.mxu0 %v1155
    %1221 = vmatprep.subr.bf16.mxu0 %v1158
    %1222 = vmatpush1.bf16.msra.mxu0 %v1157
    %1223 = vmatprep.subr.bf16.mxu0 %v1160
    %1224 = vmatpush1.bf16.msra.mxu0 %v1159
    %1225 = vmatprep.subr.bf16.mxu0 %v1162
    %1226 = vmatpush1.bf16.msra.mxu0 %v1161
    %1227 = vmatprep.mubr.bf16.mxu0 %v988
    %1228 = vmatmul.mubr.bf16.gmra.mrb[0].mxu0 %v987
    %v1229 = vpop.f32.mrb[0].mxu0
    %v1230 = vadd.f32 %v1028, %v1229
    %v1231 = vpop.f32.mrb[0].mxu0
    %v1232 = vadd.f32 %v1032, %v1231
    %v1233 = vpop.f32.mrb[0].mxu0
    %v1234 = vadd.f32 %v1028, %v1233
    %v1235 = vpop.f32.mrb[0].mxu0
    %v1236 = vadd.f32 %v1032, %v1235
    %1237 = vmatprep.mubr.bf16.mxu0 %v990
    %1238 = vmatmul.mubr.bf16.gmra.mrb[0].mxu0 %v989
    %v1239 = vpop.f32.mrb[0].mxu0
    %v1240 = vadd.f32 %v1028, %v1239
    %v1241 = vpop.f32.mrb[0].mxu0
    %v1242 = vadd.f32 %v1032, %v1241
    %v1243 = vpop.f32.mrb[0].mxu0
    %v1244 = vadd.f32 %v1028, %v1243
    %v1245 = vpop.f32.mrb[0].mxu0
    %v1246 = vadd.f32 %v1032, %v1245
    %1247 = vdwg.mxu0
    %v1248 = vmul.f32 %v1230, 0.2
    %v1249 = vmul.f32 %v1232, 0.2
    %v1250 = vmul.f32 %v1234, 0.2
    %v1251 = vmul.f32 %v1236, 0.2
    %v1252 = vmul.f32 %v1240, 0.2
    %v1253 = vmul.f32 %v1242, 0.2
    %v1254 = vmul.f32 %v1244, 0.2
    %v1255 = vmul.f32 %v1246, 0.2
    %v1256 = vmax.f32 %v1230, %v1248
    %v1257 = vmax.f32 %v1232, %v1249
    %v1258 = vmax.f32 %v1234, %v1250
    %v1259 = vmax.f32 %v1236, %v1251
    %v1260 = vmax.f32 %v1240, %v1252
    %v1261 = vmax.f32 %v1242, %v1253
    %v1262 = vmax.f32 %v1244, %v1254
    %v1263 = vmax.f32 %v1246, %v1255
    %v1264 = vadd.f32 %v1256, %v1258
    %v1265 = vadd.f32 %v1264, %v1260
    %v1266 = vadd.f32 %v1265, %v1262
    %v1267 = vrot.slane %v1266, 4
    %v1268 = vadd.f32 %v1266, %v1267
    %v1269 = vrot.slane %v1268, 2
    %v1270 = vadd.f32 %v1268, %v1269
    %v1271 = vrot.slane %v1270, 1
    %v1272 = vadd.f32 %v1270, %v1271
    %v1273 = vadd.f32 %v1257, %v1259
    %v1274 = vadd.f32 %v1273, %v1261
    %v1275 = vadd.f32 %v1274, %v1263
    %v1276 = vrot.slane %v1275, 4
    %v1277 = vadd.f32 %v1275, %v1276
    %v1278 = vrot.slane %v1277, 2
    %v1279 = vadd.f32 %v1277, %v1278
    %v1280 = vrot.slane %v1279, 1
    %v1281 = vadd.f32 %v1279, %v1280
    %v1282 = vrcp.pop 32.0
    %v1283 = vmul.f32 %v1272, %v1282
    %v1284 = vmul.f32 %v1281, %v1282
    %v1285 = vsub.f32 %v1256, %v1283
    %v1286 = vsub.f32 %v1257, %v1284
    %v1287 = vsub.f32 %v1258, %v1283
    %v1288 = vsub.f32 %v1259, %v1284
    %v1289 = vsub.f32 %v1260, %v1283
    %v1290 = vsub.f32 %v1261, %v1284
    %v1291 = vsub.f32 %v1262, %v1283
    %v1292 = vsub.f32 %v1263, %v1284
    %v1293 = vmul.f32 %v1285, %v1285
    %v1294 = vmul.f32 %v1286, %v1286
    %v1295 = vmul.f32 %v1287, %v1287
    %v1296 = vmul.f32 %v1288, %v1288
    %v1297 = vmul.f32 %v1289, %v1289
    %v1298 = vmul.f32 %v1290, %v1290
    %v1299 = vmul.f32 %v1291, %v1291
    %v1300 = vmul.f32 %v1292, %v1292
    %v1301 = vadd.f32 %v1293, %v1295
    %v1302 = vadd.f32 %v1301, %v1297
    %v1303 = vadd.f32 %v1302, %v1299
    %v1304 = vrot.slane %v1303, 4
    %v1305 = vadd.f32 %v1303, %v1304
    %v1306 = vrot.slane %v1305, 2
    %v1307 = vadd.f32 %v1305, %v1306
    %v1308 = vrot.slane %v1307, 1
    %v1309 = vadd.f32 %v1307, %v1308
    %v1310 = vadd.f32 %v1294, %v1296
    %v1311 = vadd.f32 %v1310, %v1298
    %v1312 = vadd.f32 %v1311, %v1300
    %v1313 = vrot.slane %v1312, 4
    %v1314 = vadd.f32 %v1312, %v1313
    %v1315 = vrot.slane %v1314, 2
    %v1316 = vadd.f32 %v1314, %v1315
    %v1317 = vrot.slane %v1316, 1
    %v1318 = vadd.f32 %v1316, %v1317
    %v1319 = vmul.f32 %v1309, %v1282
    %v1320 = vmul.f32 %v1318, %v1282
    %v1321 = vld [vmem:[#allocation8] sm:$0x3]
    %v1322 = vadd.f32 %v1319, 1e-05
    %v1323 = vadd.f32 %v1320, 1e-05
    %v1324 = vrsqrt.pop %v1322
    %v1325 = vrsqrt.pop %v1323
    %v1328 = vcombine.low %v1324, %v1325
    %v1330 = vunpack.c.l.s4 1966171168
    %v1331 = vunpack.c.0.s8 %v1330
    %v1332 = vlaneseq
    %v1333 = vshrl.u32 %v1332, 7
    %v1334 = vsub.s32 %v1331, %v1333
    %v1335 = vrot.slane %v1328, %v1334
    %v1337 = vunpack.c.l.s4 1966171168
    %v1338 = vunpack.c.0.s8 %v1337
    %v1339 = vlaneseq
    %v1340 = vshrl.u32 %v1339, 7
    %v1341 = vsub.s32 %v1338, %v1340
    %v1342 = vrot.slane %v1335, %v1341
    %v1344 = vmul.f32 %v1321, %v1342
    %v1346 = vlaneseq
    %v1347 = vshrl.u32 %v1346, 7
    %v1348 = vsub.s32 0, %v1347
    %v1349 = vrot.slane %v1344, %v1348
    %v1350 = vlaneseq
    %v1351 = vshrl.u32 %v1350, 7
    %v1352 = vsub.s32 1, %v1351
    %v1353 = vrot.slane %v1344, %v1352
    %v1356 = vmul.f32 %v1285, %v1349
    %v1357 = vmul.f32 %v1286, %v1353
    %v1358 = vmul.f32 %v1287, %v1349
    %v1359 = vmul.f32 %v1288, %v1353
    %v1360 = vmul.f32 %v1289, %v1349
    %v1361 = vmul.f32 %v1290, %v1353
    %v1362 = vmul.f32 %v1291, %v1349
    %v1363 = vmul.f32 %v1292, %v1353
    %v1364 = vld [vmem:[#allocation10] sm:$0x3]
    %v1366 = vlaneseq
    %v1367 = vshrl.u32 %v1366, 7
    %v1368 = vsub.s32 0, %v1367
    %v1369 = vrot.slane %v1364, %v1368
    %v1370 = vlaneseq
    %v1371 = vshrl.u32 %v1370, 7
    %v1372 = vsub.s32 1, %v1371
    %v1373 = vrot.slane %v1364, %v1372
    %v1376 = vadd.f32 %v1356, %v1369
    %v1377 = vadd.f32 %v1357, %v1373
    %v1378 = vadd.f32 %v1358, %v1369
    %v1379 = vadd.f32 %v1359, %v1373
    %v1380 = vadd.f32 %v1360, %v1369
    %v1381 = vadd.f32 %v1361, %v1373
    %v1382 = vadd.f32 %v1362, %v1369
    %v1383 = vadd.f32 %v1363, %v1373
    %v1384 = vpack.c.bf16 %v1378, %v1376
    %v1385 = vpack.c.bf16 %v1379, %v1377
    %v1386 = vpack.c.bf16 %v1382, %v1380
    %v1387 = vpack.c.bf16 %v1383, %v1381
    %v1388 = vld [vmem:[#allocation11] sm:$0xff]
    %v1389 = vld [vmem:[#allocation11 + $0x8] sm:$0xff]
    %v1390 = vld [vmem:[#allocation11 + $0x10] sm:$0xff]
    %v1391 = vld [vmem:[#allocation11 + $0x18] sm:$0xff]
    %v1392 = vld [vmem:[#allocation11 + $0x20] sm:$0xff]
    %v1393 = vld [vmem:[#allocation11 + $0x28] sm:$0xff]
    %v1394 = vld [vmem:[#allocation11 + $0x30] sm:$0xff]
    %v1395 = vld [vmem:[#allocation11 + $0x38] sm:$0xff]
    %v1396 = vld [vmem:[#allocation11 + $0x40] sm:$0xff]
    %v1397 = vld [vmem:[#allocation11 + $0x48] sm:$0xff]
    %v1398 = vld [vmem:[#allocation11 + $0x50] sm:$0xff]
    %v1399 = vld [vmem:[#allocation11 + $0x58] sm:$0xff]
    %v1400 = vld [vmem:[#allocation11 + $0x60] sm:$0xff]
    %v1401 = vld [vmem:[#allocation11 + $0x68] sm:$0xff]
    %v1402 = vld [vmem:[#allocation11 + $0x70] sm:$0xff]
    %v1403 = vld [vmem:[#allocation11 + $0x78] sm:$0xff]
    %v1404 = vld [vmem:[#allocation11 + $0x80] sm:$0xff]
    %v1405 = vld [vmem:[#allocation11 + $0x88] sm:$0xff]
    %v1406 = vld [vmem:[#allocation11 + $0x90] sm:$0xff]
    %v1407 = vld [vmem:[#allocation11 + $0x98] sm:$0xff]
    %v1408 = vld [vmem:[#allocation11 + $0xa0] sm:$0xff]
    %v1409 = vld [vmem:[#allocation11 + $0xa8] sm:$0xff]
    %v1410 = vld [vmem:[#allocation11 + $0xb0] sm:$0xff]
    %v1411 = vld [vmem:[#allocation11 + $0xb8] sm:$0xff]
    %v1412 = vld [vmem:[#allocation11 + $0xc0] sm:$0xff]
    %v1413 = vld [vmem:[#allocation11 + $0xc8] sm:$0xff]
    %v1414 = vld [vmem:[#allocation11 + $0xd0] sm:$0xff]
    %v1415 = vld [vmem:[#allocation11 + $0xd8] sm:$0xff]
    %v1416 = vld [vmem:[#allocation11 + $0xe0] sm:$0xff]
    %v1417 = vld [vmem:[#allocation11 + $0xe8] sm:$0xff]
    %v1418 = vld [vmem:[#allocation11 + $0xf0] sm:$0xff]
    %v1419 = vld [vmem:[#allocation11 + $0xf8] sm:$0xff]
    %v1452 = vunpack.c.l.b16 %v1388
    %v1453 = vunpack.c.h.b16 %v1388
    %v1454 = vunpack.c.l.b16 %v1389
    %v1455 = vunpack.c.h.b16 %v1389
    %v1456 = vunpack.c.l.b16 %v1390
    %v1457 = vunpack.c.h.b16 %v1390
    %v1458 = vunpack.c.l.b16 %v1391
    %v1459 = vunpack.c.h.b16 %v1391
    %v1460 = vunpack.c.l.b16 %v1392
    %v1461 = vunpack.c.h.b16 %v1392
    %v1462 = vunpack.c.l.b16 %v1393
    %v1463 = vunpack.c.h.b16 %v1393
    %v1464 = vunpack.c.l.b16 %v1394
    %v1465 = vunpack.c.h.b16 %v1394
    %v1466 = vunpack.c.l.b16 %v1395
    %v1467 = vunpack.c.h.b16 %v1395
    %v1468 = vunpack.c.l.b16 %v1396
    %v1469 = vunpack.c.h.b16 %v1396
    %v1470 = vunpack.c.l.b16 %v1397
    %v1471 = vunpack.c.h.b16 %v1397
    %v1472 = vunpack.c.l.b16 %v1398
    %v1473 = vunpack.c.h.b16 %v1398
    %v1474 = vunpack.c.l.b16 %v1399
    %v1475 = vunpack.c.h.b16 %v1399
    %v1476 = vunpack.c.l.b16 %v1400
    %v1477 = vunpack.c.h.b16 %v1400
    %v1478 = vunpack.c.l.b16 %v1401
    %v1479 = vunpack.c.h.b16 %v1401
    %v1480 = vunpack.c.l.b16 %v1402
    %v1481 = vunpack.c.h.b16 %v1402
    %v1482 = vunpack.c.l.b16 %v1403
    %v1483 = vunpack.c.h.b16 %v1403
    %v1484 = vunpack.c.l.b16 %v1404
    %v1485 = vunpack.c.h.b16 %v1404
    %v1486 = vunpack.c.l.b16 %v1405
    %v1487 = vunpack.c.h.b16 %v1405
    %v1488 = vunpack.c.l.b16 %v1406
    %v1489 = vunpack.c.h.b16 %v1406
    %v1490 = vunpack.c.l.b16 %v1407
    %v1491 = vunpack.c.h.b16 %v1407
    %v1492 = vunpack.c.l.b16 %v1408
    %v1493 = vunpack.c.h.b16 %v1408
    %v1494 = vunpack.c.l.b16 %v1409
    %v1495 = vunpack.c.h.b16 %v1409
    %v1496 = vunpack.c.l.b16 %v1410
    %v1497 = vunpack.c.h.b16 %v1410
    %v1498 = vunpack.c.l.b16 %v1411
    %v1499 = vunpack.c.h.b16 %v1411
    %v1500 = vunpack.c.l.b16 %v1412
    %v1501 = vunpack.c.h.b16 %v1412
    %v1502 = vunpack.c.l.b16 %v1413
    %v1503 = vunpack.c.h.b16 %v1413
    %v1504 = vunpack.c.l.b16 %v1414
    %v1505 = vunpack.c.h.b16 %v1414
    %v1506 = vunpack.c.l.b16 %v1415
    %v1507 = vunpack.c.h.b16 %v1415
    %v1508 = vunpack.c.l.b16 %v1416
    %v1509 = vunpack.c.h.b16 %v1416
    %v1510 = vunpack.c.l.b16 %v1417
    %v1511 = vunpack.c.h.b16 %v1417
    %v1512 = vunpack.c.l.b16 %v1418
    %v1513 = vunpack.c.h.b16 %v1418
    %v1514 = vunpack.c.l.b16 %v1419
    %v1515 = vunpack.c.h.b16 %v1419
    %v1516 = vpack.c.b16 %v1454, %v1452
    %v1517 = vpack.c.b16 %v1455, %v1453
    %v1518 = vpack.c.b16 %v1458, %v1456
    %v1519 = vpack.c.b16 %v1459, %v1457
    %v1520 = vpack.c.b16 %v1462, %v1460
    %v1521 = vpack.c.b16 %v1463, %v1461
    %v1522 = vpack.c.b16 %v1466, %v1464
    %v1523 = vpack.c.b16 %v1467, %v1465
    %v1524 = vpack.c.b16 %v1470, %v1468
    %v1525 = vpack.c.b16 %v1471, %v1469
    %v1526 = vpack.c.b16 %v1474, %v1472
    %v1527 = vpack.c.b16 %v1475, %v1473
    %v1528 = vpack.c.b16 %v1478, %v1476
    %v1529 = vpack.c.b16 %v1479, %v1477
    %v1530 = vpack.c.b16 %v1482, %v1480
    %v1531 = vpack.c.b16 %v1483, %v1481
    %v1532 = vpack.c.b16 %v1486, %v1484
    %v1533 = vpack.c.b16 %v1487, %v1485
    %v1534 = vpack.c.b16 %v1490, %v1488
    %v1535 = vpack.c.b16 %v1491, %v1489
    %v1536 = vpack.c.b16 %v1494, %v1492
    %v1537 = vpack.c.b16 %v1495, %v1493
    %v1538 = vpack.c.b16 %v1498, %v1496
    %v1539 = vpack.c.b16 %v1499, %v1497
    %v1540 = vpack.c.b16 %v1502, %v1500
    %v1541 = vpack.c.b16 %v1503, %v1501
    %v1542 = vpack.c.b16 %v1506, %v1504
    %v1543 = vpack.c.b16 %v1507, %v1505
    %v1544 = vpack.c.b16 %v1510, %v1508
    %v1545 = vpack.c.b16 %v1511, %v1509
    %v1546 = vpack.c.b16 %v1514, %v1512
    %v1547 = vpack.c.b16 %v1515, %v1513
    %1580 = vmatprep.subr.bf16.mxu0 %v1517
    %1581 = vmatpush1.bf16.msra.mxu0 %v1516
    %1582 = vmatprep.subr.bf16.mxu0 %v1519
    %1583 = vmatpush1.bf16.msra.mxu0 %v1518
    %1584 = vmatprep.subr.bf16.mxu0 %v1521
    %1585 = vmatpush1.bf16.msra.mxu0 %v1520
    %1586 = vmatprep.subr.bf16.mxu0 %v1523
    %1587 = vmatpush1.bf16.msra.mxu0 %v1522
    %1588 = vmatprep.subr.bf16.mxu0 %v1525
    %1589 = vmatpush1.bf16.msra.mxu0 %v1524
    %1590 = vmatprep.subr.bf16.mxu0 %v1527
    %1591 = vmatpush1.bf16.msra.mxu0 %v1526
    %1592 = vmatprep.subr.bf16.mxu0 %v1529
    %1593 = vmatpush1.bf16.msra.mxu0 %v1528
    %1594 = vmatprep.subr.bf16.mxu0 %v1531
    %1595 = vmatpush1.bf16.msra.mxu0 %v1530
    %1596 = vmatprep.subr.bf16.mxu0 %v1533
    %1597 = vmatpush1.bf16.msra.mxu0 %v1532
    %1598 = vmatprep.subr.bf16.mxu0 %v1535
    %1599 = vmatpush1.bf16.msra.mxu0 %v1534
    %1600 = vmatprep.subr.bf16.mxu0 %v1537
    %1601 = vmatpush1.bf16.msra.mxu0 %v1536
    %1602 = vmatprep.subr.bf16.mxu0 %v1539
    %1603 = vmatpush1.bf16.msra.mxu0 %v1538
    %1604 = vmatprep.subr.bf16.mxu0 %v1541
    %1605 = vmatpush1.bf16.msra.mxu0 %v1540
    %1606 = vmatprep.subr.bf16.mxu0 %v1543
    %1607 = vmatpush1.bf16.msra.mxu0 %v1542
    %1608 = vmatprep.subr.bf16.mxu0 %v1545
    %1609 = vmatpush1.bf16.msra.mxu0 %v1544
    %1610 = vmatprep.subr.bf16.mxu0 %v1547
    %1611 = vmatpush1.bf16.msra.mxu0 %v1546
    %1612 = vmatprep.mubr.bf16.mxu0 %v1385
    %1613 = vmatmul.mubr.bf16.gmra.mrb[0].mxu0 %v1384
    %v1614 = vpop.f32.mrb[0].mxu0
    %v1615 = vadd.f32 0.0, %v1614
    %v1616 = vpop.f32.mrb[0].mxu0
    %v1617 = vadd.f32 0.0, %v1616
    %v1618 = vpop.f32.mrb[0].mxu0
    %v1619 = vadd.f32 0.0, %v1618
    %v1620 = vpop.f32.mrb[0].mxu0
    %v1621 = vadd.f32 0.0, %v1620
    %1622 = vmatprep.mubr.bf16.mxu0 %v1387
    %1623 = vmatmul.mubr.bf16.gmra.mrb[0].mxu0 %v1386
    %v1624 = vpop.f32.mrb[0].mxu0
    %v1625 = vadd.f32 0.0, %v1624
    %v1626 = vpop.f32.mrb[0].mxu0
    %v1627 = vadd.f32 0.0, %v1626
    %v1628 = vpop.f32.mrb[0].mxu0
    %v1629 = vadd.f32 0.0, %v1628
    %v1630 = vpop.f32.mrb[0].mxu0
    %v1631 = vadd.f32 0.0, %v1630
    %1632 = vdwg.mxu0
    %v1633 = vpack.c.bf16 %v1619, %v1615
    %v1634 = vpack.c.bf16 %v1621, %v1617
    %v1635 = vpack.c.bf16 %v1629, %v1625
    %v1636 = vpack.c.bf16 %v1631, %v1627
    %1637 = vmatprep.subr.bf16.mxu0 %v1634
    %1638 = vmatpush1.bf16.msra.mxu0 %v1633
    %1639 = vmatprep.subr.bf16.mxu0 %v1636
    %1640 = vmatpush1.bf16.msra.mxu0 %v1635
    %1641 = vmatprep.subr.bf16.mxu0 0
    %1642 = vmatpush1.bf16.msra.mxu0 0
    %1643 = vmatprep.subr.bf16.mxu0 0
    %1644 = vmatpush1.bf16.msra.mxu0 0
    %1645 = vmatprep.subr.bf16.mxu0 0
    %1646 = vmatpush1.bf16.msra.mxu0 0
    %1647 = vmatprep.subr.bf16.mxu0 0
    %1648 = vmatpush1.bf16.msra.mxu0 0
    %1649 = vmatprep.subr.bf16.mxu0 0
    %1650 = vmatpush1.bf16.msra.mxu0 0
    %1651 = vmatprep.subr.bf16.mxu0 0
    %1652 = vmatpush1.bf16.msra.mxu0 0
    %1653 = vmatprep.subr.bf16.mxu0 0
    %1654 = vmatpush1.bf16.msra.mxu0 0
    %1655 = vmatprep.subr.bf16.mxu0 0
    %1656 = vmatpush1.bf16.msra.mxu0 0
    %1657 = vmatprep.subr.bf16.mxu0 0
    %1658 = vmatpush1.bf16.msra.mxu0 0
    %1659 = vmatprep.subr.bf16.mxu0 0
    %1660 = vmatpush1.bf16.msra.mxu0 0
    %1661 = vmatprep.subr.bf16.mxu0 0
    %1662 = vmatpush1.bf16.msra.mxu0 0
    %1663 = vmatprep.subr.bf16.mxu0 0
    %1664 = vmatpush1.bf16.msra.mxu0 0
    %1665 = vmatprep.subr.bf16.mxu0 0
    %1666 = vmatpush1.bf16.msra.mxu0 0
    %1667 = vmatprep.subr.bf16.mxu0 0
    %1668 = vmatpush1.bf16.msra.mxu0 0
    %1669 = vmatprep.mubr.bf16.mxu0 0
    %1670 = vmatmul.mubr.bf16.gmra.mrb[0].mxu0 %v407
    %v1671 = vpop.f32.mrb[0].mxu0
    %v1672 = vadd.f32 0.0, %v1671
    %v1673 = vpop.f32.mrb[0].mxu0
    %v1674 = vadd.f32 0.0, %v1673
    %v1675 = vpop.f32.mrb[0].mxu0
    %v1676 = vadd.f32 0.0, %v1675
    %v1677 = vpop.f32.mrb[0].mxu0
    %v1678 = vadd.f32 0.0, %v1677
    %1679 = vmatprep.mubr.bf16.mxu0 0
    %1680 = vmatmul.mubr.bf16.gmra.mrb[0].mxu0 %v410
    %v1681 = vpop.f32.mrb[0].mxu0
    %v1682 = vadd.f32 0.0, %v1681
    %v1683 = vpop.f32.mrb[0].mxu0
    %v1684 = vadd.f32 0.0, %v1683
    %v1685 = vpop.f32.mrb[0].mxu0
    %v1686 = vadd.f32 0.0, %v1685
    %v1687 = vpop.f32.mrb[0].mxu0
    %v1688 = vadd.f32 0.0, %v1687
    %1689 = vdwg.mxu0
    %v1690 = vld [vmem:[#allocation13] sm:$0xff]
    %v1691 = vld [vmem:[#allocation13 + $0x8] sm:$0xff]
    %v1692 = vld [vmem:[#allocation13 + $0x10] sm:$0xff]
    %v1693 = vld [vmem:[#allocation13 + $0x18] sm:$0xff]
    %v1694 = vld [vmem:[#allocation13 + $0x20] sm:$0xff]
    %v1695 = vld [vmem:[#allocation13 + $0x28] sm:$0xff]
    %v1696 = vld [vmem:[#allocation13 + $0x30] sm:$0xff]
    %v1697 = vld [vmem:[#allocation13 + $0x38] sm:$0xff]
    %v1698 = vld [vmem:[#allocation13 + $0x40] sm:$0xff]
    %v1699 = vld [vmem:[#allocation13 + $0x48] sm:$0xff]
    %v1700 = vld [vmem:[#allocation13 + $0x50] sm:$0xff]
    %v1701 = vld [vmem:[#allocation13 + $0x58] sm:$0xff]
    %v1702 = vld [vmem:[#allocation13 + $0x60] sm:$0xff]
    %v1703 = vld [vmem:[#allocation13 + $0x68] sm:$0xff]
    %v1704 = vld [vmem:[#allocation13 + $0x70] sm:$0xff]
    %v1705 = vld [vmem:[#allocation13 + $0x78] sm:$0xff]
    %v1706 = vld [vmem:[#allocation13 + $0x80] sm:$0xff]
    %v1707 = vld [vmem:[#allocation13 + $0x88] sm:$0xff]
    %v1708 = vld [vmem:[#allocation13 + $0x90] sm:$0xff]
    %v1709 = vld [vmem:[#allocation13 + $0x98] sm:$0xff]
    %v1710 = vld [vmem:[#allocation13 + $0xa0] sm:$0xff]
    %v1711 = vld [vmem:[#allocation13 + $0xa8] sm:$0xff]
    %v1712 = vld [vmem:[#allocation13 + $0xb0] sm:$0xff]
    %v1713 = vld [vmem:[#allocation13 + $0xb8] sm:$0xff]
    %v1714 = vld [vmem:[#allocation13 + $0xc0] sm:$0xff]
    %v1715 = vld [vmem:[#allocation13 + $0xc8] sm:$0xff]
    %v1716 = vld [vmem:[#allocation13 + $0xd0] sm:$0xff]
    %v1717 = vld [vmem:[#allocation13 + $0xd8] sm:$0xff]
    %v1718 = vld [vmem:[#allocation13 + $0xe0] sm:$0xff]
    %v1719 = vld [vmem:[#allocation13 + $0xe8] sm:$0xff]
    %v1720 = vld [vmem:[#allocation13 + $0xf0] sm:$0xff]
    %v1721 = vld [vmem:[#allocation13 + $0xf8] sm:$0xff]
    %v1722 = vld [vmem:[#allocation16] sm:$0x3]
    %v1724 = vlaneseq
    %v1725 = vshrl.u32 %v1724, 7
    %v1726 = vsub.s32 0, %v1725
    %v1727 = vrot.slane %v1722, %v1726
    %v1728 = vlaneseq
    %v1729 = vshrl.u32 %v1728, 7
    %v1730 = vsub.s32 1, %v1729
    %v1731 = vrot.slane %v1722, %v1730
    %v1766 = vunpack.c.l.b16 %v1690
    %v1767 = vunpack.c.h.b16 %v1690
    %v1768 = vunpack.c.l.b16 %v1691
    %v1769 = vunpack.c.h.b16 %v1691
    %v1770 = vunpack.c.l.b16 %v1692
    %v1771 = vunpack.c.h.b16 %v1692
    %v1772 = vunpack.c.l.b16 %v1693
    %v1773 = vunpack.c.h.b16 %v1693
    %v1774 = vunpack.c.l.b16 %v1694
    %v1775 = vunpack.c.h.b16 %v1694
    %v1776 = vunpack.c.l.b16 %v1695
    %v1777 = vunpack.c.h.b16 %v1695
    %v1778 = vunpack.c.l.b16 %v1696
    %v1779 = vunpack.c.h.b16 %v1696
    %v1780 = vunpack.c.l.b16 %v1697
    %v1781 = vunpack.c.h.b16 %v1697
    %v1782 = vunpack.c.l.b16 %v1698
    %v1783 = vunpack.c.h.b16 %v1698
    %v1784 = vunpack.c.l.b16 %v1699
    %v1785 = vunpack.c.h.b16 %v1699
    %v1786 = vunpack.c.l.b16 %v1700
    %v1787 = vunpack.c.h.b16 %v1700
    %v1788 = vunpack.c.l.b16 %v1701
    %v1789 = vunpack.c.h.b16 %v1701
    %v1790 = vunpack.c.l.b16 %v1702
    %v1791 = vunpack.c.h.b16 %v1702
    %v1792 = vunpack.c.l.b16 %v1703
    %v1793 = vunpack.c.h.b16 %v1703
    %v1794 = vunpack.c.l.b16 %v1704
    %v1795 = vunpack.c.h.b16 %v1704
    %v1796 = vunpack.c.l.b16 %v1705
    %v1797 = vunpack.c.h.b16 %v1705
    %v1798 = vunpack.c.l.b16 %v1706
    %v1799 = vunpack.c.h.b16 %v1706
    %v1800 = vunpack.c.l.b16 %v1707
    %v1801 = vunpack.c.h.b16 %v1707
    %v1802 = vunpack.c.l.b16 %v1708
    %v1803 = vunpack.c.h.b16 %v1708
    %v1804 = vunpack.c.l.b16 %v1709
    %v1805 = vunpack.c.h.b16 %v1709
    %v1806 = vunpack.c.l.b16 %v1710
    %v1807 = vunpack.c.h.b16 %v1710
    %v1808 = vunpack.c.l.b16 %v1711
    %v1809 = vunpack.c.h.b16 %v1711
    %v1810 = vunpack.c.l.b16 %v1712
    %v1811 = vunpack.c.h.b16 %v1712
    %v1812 = vunpack.c.l.b16 %v1713
    %v1813 = vunpack.c.h.b16 %v1713
    %v1814 = vunpack.c.l.b16 %v1714
    %v1815 = vunpack.c.h.b16 %v1714
    %v1816 = vunpack.c.l.b16 %v1715
    %v1817 = vunpack.c.h.b16 %v1715
    %v1818 = vunpack.c.l.b16 %v1716
    %v1819 = vunpack.c.h.b16 %v1716
    %v1820 = vunpack.c.l.b16 %v1717
    %v1821 = vunpack.c.h.b16 %v1717
    %v1822 = vunpack.c.l.b16 %v1718
    %v1823 = vunpack.c.h.b16 %v1718
    %v1824 = vunpack.c.l.b16 %v1719
    %v1825 = vunpack.c.h.b16 %v1719
    %v1826 = vunpack.c.l.b16 %v1720
    %v1827 = vunpack.c.h.b16 %v1720
    %v1828 = vunpack.c.l.b16 %v1721
    %v1829 = vunpack.c.h.b16 %v1721
    %v1830 = vpack.c.b16 %v1768, %v1766
    %v1831 = vpack.c.b16 %v1769, %v1767
    %v1832 = vpack.c.b16 %v1772, %v1770
    %v1833 = vpack.c.b16 %v1773, %v1771
    %v1834 = vpack.c.b16 %v1776, %v1774
    %v1835 = vpack.c.b16 %v1777, %v1775
    %v1836 = vpack.c.b16 %v1780, %v1778
    %v1837 = vpack.c.b16 %v1781, %v1779
    %v1838 = vpack.c.b16 %v1784, %v1782
    %v1839 = vpack.c.b16 %v1785, %v1783
    %v1840 = vpack.c.b16 %v1788, %v1786
    %v1841 = vpack.c.b16 %v1789, %v1787
    %v1842 = vpack.c.b16 %v1792, %v1790
    %v1843 = vpack.c.b16 %v1793, %v1791
    %v1844 = vpack.c.b16 %v1796, %v1794
    %v1845 = vpack.c.b16 %v1797, %v1795
    %v1846 = vpack.c.b16 %v1800, %v1798
    %v1847 = vpack.c.b16 %v1801, %v1799
    %v1848 = vpack.c.b16 %v1804, %v1802
    %v1849 = vpack.c.b16 %v1805, %v1803
    %v1850 = vpack.c.b16 %v1808, %v1806
    %v1851 = vpack.c.b16 %v1809, %v1807
    %v1852 = vpack.c.b16 %v1812, %v1810
    %v1853 = vpack.c.b16 %v1813, %v1811
    %v1854 = vpack.c.b16 %v1816, %v1814
    %v1855 = vpack.c.b16 %v1817, %v1815
    %v1856 = vpack.c.b16 %v1820, %v1818
    %v1857 = vpack.c.b16 %v1821, %v1819
    %v1858 = vpack.c.b16 %v1824, %v1822
    %v1859 = vpack.c.b16 %v1825, %v1823
    %v1860 = vpack.c.b16 %v1828, %v1826
    %v1861 = vpack.c.b16 %v1829, %v1827
    %1894 = vmatprep.subr.bf16.mxu0 %v1831
    %1895 = vmatpush1.bf16.msra.mxu0 %v1830
    %1896 = vmatprep.subr.bf16.mxu0 %v1833
    %1897 = vmatpush1.bf16.msra.mxu0 %v1832
    %1898 = vmatprep.subr.bf16.mxu0 %v1835
    %1899 = vmatpush1.bf16.msra.mxu0 %v1834
    %1900 = vmatprep.subr.bf16.mxu0 %v1837
    %1901 = vmatpush1.bf16.msra.mxu0 %v1836
    %1902 = vmatprep.subr.bf16.mxu0 %v1839
    %1903 = vmatpush1.bf16.msra.mxu0 %v1838
    %1904 = vmatprep.subr.bf16.mxu0 %v1841
    %1905 = vmatpush1.bf16.msra.mxu0 %v1840
    %1906 = vmatprep.subr.bf16.mxu0 %v1843
    %1907 = vmatpush1.bf16.msra.mxu0 %v1842
    %1908 = vmatprep.subr.bf16.mxu0 %v1845
    %1909 = vmatpush1.bf16.msra.mxu0 %v1844
    %1910 = vmatprep.subr.bf16.mxu0 %v1847
    %1911 = vmatpush1.bf16.msra.mxu0 %v1846
    %1912 = vmatprep.subr.bf16.mxu0 %v1849
    %1913 = vmatpush1.bf16.msra.mxu0 %v1848
    %1914 = vmatprep.subr.bf16.mxu0 %v1851
    %1915 = vmatpush1.bf16.msra.mxu0 %v1850
    %1916 = vmatprep.subr.bf16.mxu0 %v1853
    %1917 = vmatpush1.bf16.msra.mxu0 %v1852
    %1918 = vmatprep.subr.bf16.mxu0 %v1855
    %1919 = vmatpush1.bf16.msra.mxu0 %v1854
    %1920 = vmatprep.subr.bf16.mxu0 %v1857
    %1921 = vmatpush1.bf16.msra.mxu0 %v1856
    %1922 = vmatprep.subr.bf16.mxu0 %v1859
    %1923 = vmatpush1.bf16.msra.mxu0 %v1858
    %1924 = vmatprep.subr.bf16.mxu0 %v1861
    %1925 = vmatpush1.bf16.msra.mxu0 %v1860
    %1926 = vmatprep.mubr.bf16.mxu0 %v1634
    %1927 = vmatmul.mubr.bf16.gmra.mrb[0].mxu0 %v1633
    %v1928 = vpop.f32.mrb[0].mxu0
    %v1929 = vadd.f32 %v1727, %v1928
    %v1930 = vpop.f32.mrb[0].mxu0
    %v1931 = vadd.f32 %v1731, %v1930
    %v1932 = vpop.f32.mrb[0].mxu0
    %v1933 = vadd.f32 %v1727, %v1932
    %v1934 = vpop.f32.mrb[0].mxu0
    %v1935 = vadd.f32 %v1731, %v1934
    %1936 = vmatprep.mubr.bf16.mxu0 %v1636
    %1937 = vmatmul.mubr.bf16.gmra.mrb[0].mxu0 %v1635
    %v1938 = vpop.f32.mrb[0].mxu0
    %v1939 = vadd.f32 %v1727, %v1938
    %v1940 = vpop.f32.mrb[0].mxu0
    %v1941 = vadd.f32 %v1731, %v1940
    %v1942 = vpop.f32.mrb[0].mxu0
    %v1943 = vadd.f32 %v1727, %v1942
    %v1944 = vpop.f32.mrb[0].mxu0
    %v1945 = vadd.f32 %v1731, %v1944
    %1946 = vdwg.mxu0
    %v1947 = vpack.c.bf16 %v1676, %v1672
    %v1948 = vpack.c.bf16 %v1678, %v1674
    %v1949 = vpack.c.bf16 %v1686, %v1682
    %v1950 = vpack.c.bf16 %v1688, %v1684
    %v1951 = vld [vmem:[#allocation14] sm:$0xff]
    %v1952 = vld [vmem:[#allocation14 + $0x8] sm:$0xff]
    %v1953 = vld [vmem:[#allocation14 + $0x10] sm:$0xff]
    %v1954 = vld [vmem:[#allocation14 + $0x18] sm:$0xff]
    %v1955 = vld [vmem:[#allocation14 + $0x20] sm:$0xff]
    %v1956 = vld [vmem:[#allocation14 + $0x28] sm:$0xff]
    %v1957 = vld [vmem:[#allocation14 + $0x30] sm:$0xff]
    %v1958 = vld [vmem:[#allocation14 + $0x38] sm:$0xff]
    %v1959 = vld [vmem:[#allocation14 + $0x40] sm:$0xff]
    %v1960 = vld [vmem:[#allocation14 + $0x48] sm:$0xff]
    %v1961 = vld [vmem:[#allocation14 + $0x50] sm:$0xff]
    %v1962 = vld [vmem:[#allocation14 + $0x58] sm:$0xff]
    %v1963 = vld [vmem:[#allocation14 + $0x60] sm:$0xff]
    %v1964 = vld [vmem:[#allocation14 + $0x68] sm:$0xff]
    %v1965 = vld [vmem:[#allocation14 + $0x70] sm:$0xff]
    %v1966 = vld [vmem:[#allocation14 + $0x78] sm:$0xff]
    %v1967 = vld [vmem:[#allocation14 + $0x80] sm:$0xff]
    %v1968 = vld [vmem:[#allocation14 + $0x88] sm:$0xff]
    %v1969 = vld [vmem:[#allocation14 + $0x90] sm:$0xff]
    %v1970 = vld [vmem:[#allocation14 + $0x98] sm:$0xff]
    %v1971 = vld [vmem:[#allocation14 + $0xa0] sm:$0xff]
    %v1972 = vld [vmem:[#allocation14 + $0xa8] sm:$0xff]
    %v1973 = vld [vmem:[#allocation14 + $0xb0] sm:$0xff]
    %v1974 = vld [vmem:[#allocation14 + $0xb8] sm:$0xff]
    %v1975 = vld [vmem:[#allocation14 + $0xc0] sm:$0xff]
    %v1976 = vld [vmem:[#allocation14 + $0xc8] sm:$0xff]
    %v1977 = vld [vmem:[#allocation14 + $0xd0] sm:$0xff]
    %v1978 = vld [vmem:[#allocation14 + $0xd8] sm:$0xff]
    %v1979 = vld [vmem:[#allocation14 + $0xe0] sm:$0xff]
    %v1980 = vld [vmem:[#allocation14 + $0xe8] sm:$0xff]
    %v1981 = vld [vmem:[#allocation14 + $0xf0] sm:$0xff]
    %v1982 = vld [vmem:[#allocation14 + $0xf8] sm:$0xff]
    %v2015 = vunpack.c.l.b16 %v1951
    %v2016 = vunpack.c.h.b16 %v1951
    %v2017 = vunpack.c.l.b16 %v1952
    %v2018 = vunpack.c.h.b16 %v1952
    %v2019 = vunpack.c.l.b16 %v1953
    %v2020 = vunpack.c.h.b16 %v1953
    %v2021 = vunpack.c.l.b16 %v1954
    %v2022 = vunpack.c.h.b16 %v1954
    %v2023 = vunpack.c.l.b16 %v1955
    %v2024 = vunpack.c.h.b16 %v1955
    %v2025 = vunpack.c.l.b16 %v1956
    %v2026 = vunpack.c.h.b16 %v1956
    %v2027 = vunpack.c.l.b16 %v1957
    %v2028 = vunpack.c.h.b16 %v1957
    %v2029 = vunpack.c.l.b16 %v1958
    %v2030 = vunpack.c.h.b16 %v1958
    %v2031 = vunpack.c.l.b16 %v1959
    %v2032 = vunpack.c.h.b16 %v1959
    %v2033 = vunpack.c.l.b16 %v1960
    %v2034 = vunpack.c.h.b16 %v1960
    %v2035 = vunpack.c.l.b16 %v1961
    %v2036 = vunpack.c.h.b16 %v1961
    %v2037 = vunpack.c.l.b16 %v1962
    %v2038 = vunpack.c.h.b16 %v1962
    %v2039 = vunpack.c.l.b16 %v1963
    %v2040 = vunpack.c.h.b16 %v1963
    %v2041 = vunpack.c.l.b16 %v1964
    %v2042 = vunpack.c.h.b16 %v1964
    %v2043 = vunpack.c.l.b16 %v1965
    %v2044 = vunpack.c.h.b16 %v1965
    %v2045 = vunpack.c.l.b16 %v1966
    %v2046 = vunpack.c.h.b16 %v1966
    %v2047 = vunpack.c.l.b16 %v1967
    %v2048 = vunpack.c.h.b16 %v1967
    %v2049 = vunpack.c.l.b16 %v1968
    %v2050 = vunpack.c.h.b16 %v1968
    %v2051 = vunpack.c.l.b16 %v1969
    %v2052 = vunpack.c.h.b16 %v1969
    %v2053 = vunpack.c.l.b16 %v1970
    %v2054 = vunpack.c.h.b16 %v1970
    %v2055 = vunpack.c.l.b16 %v1971
    %v2056 = vunpack.c.h.b16 %v1971
    %v2057 = vunpack.c.l.b16 %v1972
    %v2058 = vunpack.c.h.b16 %v1972
    %v2059 = vunpack.c.l.b16 %v1973
    %v2060 = vunpack.c.h.b16 %v1973
    %v2061 = vunpack.c.l.b16 %v1974
    %v2062 = vunpack.c.h.b16 %v1974
    %v2063 = vunpack.c.l.b16 %v1975
    %v2064 = vunpack.c.h.b16 %v1975
    %v2065 = vunpack.c.l.b16 %v1976
    %v2066 = vunpack.c.h.b16 %v1976
    %v2067 = vunpack.c.l.b16 %v1977
    %v2068 = vunpack.c.h.b16 %v1977
    %v2069 = vunpack.c.l.b16 %v1978
    %v2070 = vunpack.c.h.b16 %v1978
    %v2071 = vunpack.c.l.b16 %v1979
    %v2072 = vunpack.c.h.b16 %v1979
    %v2073 = vunpack.c.l.b16 %v1980
    %v2074 = vunpack.c.h.b16 %v1980
    %v2075 = vunpack.c.l.b16 %v1981
    %v2076 = vunpack.c.h.b16 %v1981
    %v2077 = vunpack.c.l.b16 %v1982
    %v2078 = vunpack.c.h.b16 %v1982
    %v2079 = vpack.c.b16 %v2017, %v2015
    %v2080 = vpack.c.b16 %v2018, %v2016
    %v2081 = vpack.c.b16 %v2021, %v2019
    %v2082 = vpack.c.b16 %v2022, %v2020
    %v2083 = vpack.c.b16 %v2025, %v2023
    %v2084 = vpack.c.b16 %v2026, %v2024
    %v2085 = vpack.c.b16 %v2029, %v2027
    %v2086 = vpack.c.b16 %v2030, %v2028
    %v2087 = vpack.c.b16 %v2033, %v2031
    %v2088 = vpack.c.b16 %v2034, %v2032
    %v2089 = vpack.c.b16 %v2037, %v2035
    %v2090 = vpack.c.b16 %v2038, %v2036
    %v2091 = vpack.c.b16 %v2041, %v2039
    %v2092 = vpack.c.b16 %v2042, %v2040
    %v2093 = vpack.c.b16 %v2045, %v2043
    %v2094 = vpack.c.b16 %v2046, %v2044
    %v2095 = vpack.c.b16 %v2049, %v2047
    %v2096 = vpack.c.b16 %v2050, %v2048
    %v2097 = vpack.c.b16 %v2053, %v2051
    %v2098 = vpack.c.b16 %v2054, %v2052
    %v2099 = vpack.c.b16 %v2057, %v2055
    %v2100 = vpack.c.b16 %v2058, %v2056
    %v2101 = vpack.c.b16 %v2061, %v2059
    %v2102 = vpack.c.b16 %v2062, %v2060
    %v2103 = vpack.c.b16 %v2065, %v2063
    %v2104 = vpack.c.b16 %v2066, %v2064
    %v2105 = vpack.c.b16 %v2069, %v2067
    %v2106 = vpack.c.b16 %v2070, %v2068
    %v2107 = vpack.c.b16 %v2073, %v2071
    %v2108 = vpack.c.b16 %v2074, %v2072
    %v2109 = vpack.c.b16 %v2077, %v2075
    %v2110 = vpack.c.b16 %v2078, %v2076
    %2143 = vmatprep.subr.bf16.mxu0 %v2080
    %2144 = vmatpush1.bf16.msra.mxu0 %v2079
    %2145 = vmatprep.subr.bf16.mxu0 %v2082
    %2146 = vmatpush1.bf16.msra.mxu0 %v2081
    %2147 = vmatprep.subr.bf16.mxu0 %v2084
    %2148 = vmatpush1.bf16.msra.mxu0 %v2083
    %2149 = vmatprep.subr.bf16.mxu0 %v2086
    %2150 = vmatpush1.bf16.msra.mxu0 %v2085
    %2151 = vmatprep.subr.bf16.mxu0 %v2088
    %2152 = vmatpush1.bf16.msra.mxu0 %v2087
    %2153 = vmatprep.subr.bf16.mxu0 %v2090
    %2154 = vmatpush1.bf16.msra.mxu0 %v2089
    %2155 = vmatprep.subr.bf16.mxu0 %v2092
    %2156 = vmatpush1.bf16.msra.mxu0 %v2091
    %2157 = vmatprep.subr.bf16.mxu0 %v2094
    %2158 = vmatpush1.bf16.msra.mxu0 %v2093
    %2159 = vmatprep.subr.bf16.mxu0 %v2096
    %2160 = vmatpush1.bf16.msra.mxu0 %v2095
    %2161 = vmatprep.subr.bf16.mxu0 %v2098
    %2162 = vmatpush1.bf16.msra.mxu0 %v2097
    %2163 = vmatprep.subr.bf16.mxu0 %v2100
    %2164 = vmatpush1.bf16.msra.mxu0 %v2099
    %2165 = vmatprep.subr.bf16.mxu0 %v2102
    %2166 = vmatpush1.bf16.msra.mxu0 %v2101
    %2167 = vmatprep.subr.bf16.mxu0 %v2104
    %2168 = vmatpush1.bf16.msra.mxu0 %v2103
    %2169 = vmatprep.subr.bf16.mxu0 %v2106
    %2170 = vmatpush1.bf16.msra.mxu0 %v2105
    %2171 = vmatprep.subr.bf16.mxu0 %v2108
    %2172 = vmatpush1.bf16.msra.mxu0 %v2107
    %2173 = vmatprep.subr.bf16.mxu0 %v2110
    %2174 = vmatpush1.bf16.msra.mxu0 %v2109
    %2175 = vmatprep.mubr.bf16.mxu0 %v1948
    %2176 = vmatmul.mubr.bf16.gmra.mrb[0].mxu0 %v1947
    %v2177 = vpop.f32.mrb[0].mxu0
    %v2178 = vadd.f32 0.0, %v2177
    %v2179 = vpop.f32.mrb[0].mxu0
    %v2180 = vadd.f32 0.0, %v2179
    %v2181 = vpop.f32.mrb[0].mxu0
    %v2182 = vadd.f32 0.0, %v2181
    %v2183 = vpop.f32.mrb[0].mxu0
    %v2184 = vadd.f32 0.0, %v2183
    %2185 = vmatprep.mubr.bf16.mxu0 %v1950
    %2186 = vmatmul.mubr.bf16.gmra.mrb[0].mxu0 %v1949
    %v2187 = vpop.f32.mrb[0].mxu0
    %v2188 = vadd.f32 0.0, %v2187
    %v2189 = vpop.f32.mrb[0].mxu0
    %v2190 = vadd.f32 0.0, %v2189
    %v2191 = vpop.f32.mrb[0].mxu0
    %v2192 = vadd.f32 0.0, %v2191
    %v2193 = vpop.f32.mrb[0].mxu0
    %v2194 = vadd.f32 0.0, %v2193
    %2195 = vdwg.mxu0
    %v2196 = vmul.f32 %v296, %v1929
    %v2197 = vmul.f32 %v296, %v1931
    %v2198 = vmul.f32 %v301, %v1933
    %v2199 = vmul.f32 %v301, %v1935
    %v2200 = vmul.f32 %v306, %v1939
    %v2201 = vmul.f32 %v306, %v1941
    %v2202 = vmul.f32 %v311, %v1943
    %v2203 = vmul.f32 %v311, %v1945
    %v2204 = vadd.f32 %v2196, %v2178
    %v2205 = vadd.f32 %v2197, %v2180
    %v2206 = vadd.f32 %v2198, %v2182
    %v2207 = vadd.f32 %v2199, %v2184
    %v2208 = vadd.f32 %v2200, %v2188
    %v2209 = vadd.f32 %v2201, %v2190
    %v2210 = vadd.f32 %v2202, %v2192
    %v2211 = vadd.f32 %v2203, %v2194
    %v2212 = vpack.c.bf16 %v2206, %v2204
    %v2213 = vpack.c.bf16 %v2207, %v2205
    %v2214 = vpack.c.bf16 %v2210, %v2208
    %v2215 = vpack.c.bf16 %v2211, %v2209
    %v2216 = vld [vmem:[%s15] sm:$0xf]
    %v2217 = vld [vmem:[%s15 + $0x4] sm:$0xf]
    %v2218 = vld [vmem:[%s15 + $0x8] sm:$0xf]
    %v2219 = vld [vmem:[%s15 + $0xc] sm:$0xf]
    %v2220 = vld [vmem:[%s15 + $0x10] sm:$0xf]
    %v2221 = vld [vmem:[%s15 + $0x14] sm:$0xf]
    %v2222 = vld [vmem:[%s15 + $0x18] sm:$0xf]
    %v2223 = vld [vmem:[%s15 + $0x1c] sm:$0xf]
    %v2224 = vld [vmem:[%s15 + $0x20] sm:$0xf]
    %v2225 = vld [vmem:[%s15 + $0x24] sm:$0xf]
    %v2226 = vld [vmem:[%s15 + $0x28] sm:$0xf]
    %v2227 = vld [vmem:[%s15 + $0x2c] sm:$0xf]
    %v2228 = vld [vmem:[%s15 + $0x30] sm:$0xf]
    %v2229 = vld [vmem:[%s15 + $0x34] sm:$0xf]
    %v2230 = vld [vmem:[%s15 + $0x38] sm:$0xf]
    %v2231 = vld [vmem:[%s15 + $0x3c] sm:$0xf]
    %v2232 = vld [vmem:[%s15 + $0x40] sm:$0xf]
    %v2233 = vld [vmem:[%s15 + $0x44] sm:$0xf]
    %v2234 = vld [vmem:[%s15 + $0x48] sm:$0xf]
    %v2235 = vld [vmem:[%s15 + $0x4c] sm:$0xf]
    %v2236 = vld [vmem:[%s15 + $0x50] sm:$0xf]
    %v2237 = vld [vmem:[%s15 + $0x54] sm:$0xf]
    %v2238 = vld [vmem:[%s15 + $0x58] sm:$0xf]
    %v2239 = vld [vmem:[%s15 + $0x5c] sm:$0xf]
    %v2240 = vld [vmem:[%s15 + $0x60] sm:$0xf]
    %v2241 = vld [vmem:[%s15 + $0x64] sm:$0xf]
    %v2242 = vld [vmem:[%s15 + $0x68] sm:$0xf]
    %v2243 = vld [vmem:[%s15 + $0x6c] sm:$0xf]
    %v2244 = vld [vmem:[%s15 + $0x70] sm:$0xf]
    %v2245 = vld [vmem:[%s15 + $0x74] sm:$0xf]
    %v2246 = vld [vmem:[%s15 + $0x78] sm:$0xf]
    %v2247 = vld [vmem:[%s15 + $0x7c] sm:$0xf]
    %v2248 = vld [vmem:[%s16] sm:$0x1]
    %v2250 = vlaneseq
    %v2251 = vshrl.u32 %v2250, 7
    %v2252 = vsub.s32 0, %v2251
    %v2253 = vrot.slane %v2248, %v2252
    %v2287 = vunpack.c.l.b16 %v2216
    %v2288 = vunpack.c.l.b16 %v2217
    %v2289 = vunpack.c.l.b16 %v2218
    %v2290 = vunpack.c.l.b16 %v2219
    %v2291 = vunpack.c.l.b16 %v2220
    %v2292 = vunpack.c.l.b16 %v2221
    %v2293 = vunpack.c.l.b16 %v2222
    %v2294 = vunpack.c.l.b16 %v2223
    %v2295 = vunpack.c.l.b16 %v2224
    %v2296 = vunpack.c.l.b16 %v2225
    %v2297 = vunpack.c.l.b16 %v2226
    %v2298 = vunpack.c.l.b16 %v2227
    %v2299 = vunpack.c.l.b16 %v2228
    %v2300 = vunpack.c.l.b16 %v2229
    %v2301 = vunpack.c.l.b16 %v2230
    %v2302 = vunpack.c.l.b16 %v2231
    %v2303 = vunpack.c.l.b16 %v2232
    %v2304 = vunpack.c.l.b16 %v2233
    %v2305 = vunpack.c.l.b16 %v2234
    %v2306 = vunpack.c.l.b16 %v2235
    %v2307 = vunpack.c.l.b16 %v2236
    %v2308 = vunpack.c.l.b16 %v2237
    %v2309 = vunpack.c.l.b16 %v2238
    %v2310 = vunpack.c.l.b16 %v2239
    %v2311 = vunpack.c.l.b16 %v2240
    %v2312 = vunpack.c.l.b16 %v2241
    %v2313 = vunpack.c.l.b16 %v2242
    %v2314 = vunpack.c.l.b16 %v2243
    %v2315 = vunpack.c.l.b16 %v2244
    %v2316 = vunpack.c.l.b16 %v2245
    %v2317 = vunpack.c.l.b16 %v2246
    %v2318 = vunpack.c.l.b16 %v2247
    %v2319 = vpack.c.b16 %v2288, %v2287
    %v2320 = vpack.c.b16 %v2290, %v2289
    %v2321 = vpack.c.b16 %v2292, %v2291
    %v2322 = vpack.c.b16 %v2294, %v2293
    %v2323 = vpack.c.b16 %v2296, %v2295
    %v2324 = vpack.c.b16 %v2298, %v2297
    %v2325 = vpack.c.b16 %v2300, %v2299
    %v2326 = vpack.c.b16 %v2302, %v2301
    %v2327 = vpack.c.b16 %v2304, %v2303
    %v2328 = vpack.c.b16 %v2306, %v2305
    %v2329 = vpack.c.b16 %v2308, %v2307
    %v2330 = vpack.c.b16 %v2310, %v2309
    %v2331 = vpack.c.b16 %v2312, %v2311
    %v2332 = vpack.c.b16 %v2314, %v2313
    %v2333 = vpack.c.b16 %v2316, %v2315
    %v2334 = vpack.c.b16 %v2318, %v2317
    %2351 = vmatprep.subr.bf16.mxu0 0
    %2352 = vmatpush1.bf16.msra.mxu0 %v2319
    %2353 = vmatprep.subr.bf16.mxu0 0
    %2354 = vmatpush1.bf16.msra.mxu0 %v2320
    %2355 = vmatprep.subr.bf16.mxu0 0
    %2356 = vmatpush1.bf16.msra.mxu0 %v2321
    %2357 = vmatprep.subr.bf16.mxu0 0
    %2358 = vmatpush1.bf16.msra.mxu0 %v2322
    %2359 = vmatprep.subr.bf16.mxu0 0
    %2360 = vmatpush1.bf16.msra.mxu0 %v2323
    %2361 = vmatprep.subr.bf16.mxu0 0
    %2362 = vmatpush1.bf16.msra.mxu0 %v2324
    %2363 = vmatprep.subr.bf16.mxu0 0
    %2364 = vmatpush1.bf16.msra.mxu0 %v2325
    %2365 = vmatprep.subr.bf16.mxu0 0
    %2366 = vmatpush1.bf16.msra.mxu0 %v2326
    %2367 = vmatprep.subr.bf16.mxu0 0
    %2368 = vmatpush1.bf16.msra.mxu0 %v2327
    %2369 = vmatprep.subr.bf16.mxu0 0
    %2370 = vmatpush1.bf16.msra.mxu0 %v2328
    %2371 = vmatprep.subr.bf16.mxu0 0
    %2372 = vmatpush1.bf16.msra.mxu0 %v2329
    %2373 = vmatprep.subr.bf16.mxu0 0
    %2374 = vmatpush1.bf16.msra.mxu0 %v2330
    %2375 = vmatprep.subr.bf16.mxu0 0
    %2376 = vmatpush1.bf16.msra.mxu0 %v2331
    %2377 = vmatprep.subr.bf16.mxu0 0
    %2378 = vmatpush1.bf16.msra.mxu0 %v2332
    %2379 = vmatprep.subr.bf16.mxu0 0
    %2380 = vmatpush1.bf16.msra.mxu0 %v2333
    %2381 = vmatprep.subr.bf16.mxu0 0
    %2382 = vmatpush1.bf16.msra.mxu0 %v2334
    %2383 = vmatprep.mubr.bf16.mxu0 %v2213
    %2384 = vmatmul.mubr.bf16.gmra.mrb[0].mxu0 %v2212
    %v2385 = vpop.f32.mrb[0].mxu0
    %v2386 = vadd.f32 %v2253, %v2385
    %v2387 = vpop.f32.mrb[0].mxu0
    %v2388 = vpop.f32.mrb[0].mxu0
    %v2389 = vadd.f32 %v2253, %v2388
    %v2390 = vpop.f32.mrb[0].mxu0
    %2391 = vmatprep.mubr.bf16.mxu0 %v2215
    %2392 = vmatmul.mubr.bf16.gmra.mrb[0].mxu0 %v2214
    %v2393 = vpop.f32.mrb[0].mxu0
    %v2394 = vadd.f32 %v2253, %v2393
    %v2395 = vpop.f32.mrb[0].mxu0
    %v2396 = vpop.f32.mrb[0].mxu0
    %v2397 = vadd.f32 %v2253, %v2396
    %v2398 = vpop.f32.mrb[0].mxu0
    %2399 = vdwg.mxu0
    %v2400 = vmul.f32 %v2386, 0.2
    %v2401 = vmul.f32 %v2389, 0.2
    %v2402 = vmul.f32 %v2394, 0.2
    %v2403 = vmul.f32 %v2397, 0.2
    %v2404 = vmax.f32 %v2386, %v2400
    %v2405 = vmax.f32 %v2389, %v2401
    %v2406 = vmax.f32 %v2394, %v2402
    %v2407 = vmax.f32 %v2397, %v2403
    %v2408 = vpack.c.bf16 %v2405, %v2404
    %v2409 = vpack.c.bf16 %v2407, %v2406
    %v2410 = vld [vmem:[%s17] sm:$0xf]
    %v2411 = vld [vmem:[%s17 + $0x4] sm:$0xf]
    %v2412 = vld [vmem:[%s17 + $0x8] sm:$0xf]
    %v2413 = vld [vmem:[%s17 + $0xc] sm:$0xf]
    %v2414 = vld [vmem:[%s17 + $0x10] sm:$0xf]
    %v2415 = vld [vmem:[%s17 + $0x14] sm:$0xf]
    %v2416 = vld [vmem:[%s17 + $0x18] sm:$0xf]
    %v2417 = vld [vmem:[%s17 + $0x1c] sm:$0xf]
    %v2418 = vld [vmem:[#allocation17] sm:$0x1]
    %v2420 = vlaneseq
    %v2421 = vshrl.u32 %v2420, 7
    %v2422 = vsub.s32 0, %v2421
    %v2423 = vrot.slane %v2418, %v2422
    %v2433 = vunpack.c.l.b16 %v2410
    %v2434 = vunpack.c.l.b16 %v2411
    %v2435 = vunpack.c.l.b16 %v2412
    %v2436 = vunpack.c.l.b16 %v2413
    %v2437 = vunpack.c.l.b16 %v2414
    %v2438 = vunpack.c.l.b16 %v2415
    %v2439 = vunpack.c.l.b16 %v2416
    %v2440 = vunpack.c.l.b16 %v2417
    %v2441 = vpack.c.b16 %v2434, %v2433
    %v2442 = vpack.c.b16 %v2436, %v2435
    %v2443 = vpack.c.b16 %v2438, %v2437
    %v2444 = vpack.c.b16 %v2440, %v2439
    %vm2449 = vcmask 523264
    %v2451 = vsel %vm2449, %v2408, 0
    %v2454 = vsel %vm2449, %v2409, 0
    %2456 = vmatprep.subr.bf16.mxu0 0
    %2457 = vmatpush1.bf16.msra.mxu0 %v2441
    %2458 = vmatprep.subr.bf16.mxu0 0
    %2459 = vmatpush1.bf16.msra.mxu0 %v2442
    %2460 = vmatprep.subr.bf16.mxu0 0
    %2461 = vmatpush1.bf16.msra.mxu0 %v2443
    %2462 = vmatprep.subr.bf16.mxu0 0
    %2463 = vmatpush1.bf16.msra.mxu0 %v2444
    %2464 = vmatprep.subr.bf16.mxu0 0
    %2465 = vmatpush1.bf16.msra.mxu0 0
    %2466 = vmatprep.subr.bf16.mxu0 0
    %2467 = vmatpush1.bf16.msra.mxu0 0
    %2468 = vmatprep.subr.bf16.mxu0 0
    %2469 = vmatpush1.bf16.msra.mxu0 0
    %2470 = vmatprep.subr.bf16.mxu0 0
    %2471 = vmatpush1.bf16.msra.mxu0 0
    %2472 = vmatprep.subr.bf16.mxu0 0
    %2473 = vmatpush1.bf16.msra.mxu0 0
    %2474 = vmatprep.subr.bf16.mxu0 0
    %2475 = vmatpush1.bf16.msra.mxu0 0
    %2476 = vmatprep.subr.bf16.mxu0 0
    %2477 = vmatpush1.bf16.msra.mxu0 0
    %2478 = vmatprep.subr.bf16.mxu0 0
    %2479 = vmatpush1.bf16.msra.mxu0 0
    %2480 = vmatprep.subr.bf16.mxu0 0
    %2481 = vmatpush1.bf16.msra.mxu0 0
    %2482 = vmatprep.subr.bf16.mxu0 0
    %2483 = vmatpush1.bf16.msra.mxu0 0
    %2484 = vmatprep.subr.bf16.mxu0 0
    %2485 = vmatpush1.bf16.msra.mxu0 0
    %2486 = vmatprep.subr.bf16.mxu0 0
    %2487 = vmatpush1.bf16.msra.mxu0 0
    %2488 = vmatprep.mubr.bf16.mxu0 0
    %2489 = vmatmul.mubr.bf16.gmra.mrb[0].mxu0 %v2451
    %v2490 = vpop.f32.mrb[0].mxu0
    %v2491 = vadd.f32 %v2423, %v2490
    %v2492 = vpop.f32.mrb[0].mxu0
    %v2493 = vpop.f32.mrb[0].mxu0
    %v2494 = vadd.f32 %v2423, %v2493
    %v2495 = vpop.f32.mrb[0].mxu0
    %2496 = vmatprep.mubr.bf16.mxu0 0
    %2497 = vmatmul.mubr.bf16.gmra.mrb[0].mxu0 %v2454
    %v2498 = vpop.f32.mrb[0].mxu0
    %v2499 = vadd.f32 %v2423, %v2498
    %v2500 = vpop.f32.mrb[0].mxu0
    %v2501 = vpop.f32.mrb[0].mxu0
    %v2502 = vadd.f32 %v2423, %v2501
    %v2503 = vpop.f32.mrb[0].mxu0
    %2504 = vdwg.mxu0
    %v2505 = vmul.f32 %v2491, 0.2
    %v2506 = vmul.f32 %v2494, 0.2
    %v2507 = vmul.f32 %v2499, 0.2
    %v2508 = vmul.f32 %v2502, 0.2
    %v2509 = vmax.f32 %v2491, %v2505
    %v2510 = vmax.f32 %v2494, %v2506
    %v2511 = vmax.f32 %v2499, %v2507
    %v2512 = vmax.f32 %v2502, %v2508
    %vm2513 = vcmask 64512
    %v2514 = vsel %vm2513, %v2509, 0.0
    %v2515 = vsel %vm2513, %v2510, 0.0
    %v2516 = vadd.f32 %v2514, %v2515
    %v2517 = vsel %vm2513, %v2511, 0.0
    %v2518 = vadd.f32 %v2516, %v2517
    %v2519 = vsel %vm2513, %v2512, 0.0
    %v2520 = vadd.f32 %v2518, %v2519
    %v2521 = vrot.slane %v2520, 4
    %v2522 = vadd.f32 %v2520, %v2521
    %v2523 = vrot.slane %v2522, 2
    %v2524 = vadd.f32 %v2522, %v2523
    %v2525 = vrot.slane %v2524, 1
    %v2526 = vadd.f32 %v2524, %v2525
    %v2527 = vmul.f32 %v2526, %v1282
    %v2528 = vsub.f32 %v2509, %v2527
    %v2529 = vsub.f32 %v2510, %v2527
    %v2530 = vsub.f32 %v2511, %v2527
    %v2531 = vsub.f32 %v2512, %v2527
    %v2532 = vmul.f32 %v2528, %v2528
    %v2533 = vmul.f32 %v2529, %v2529
    %v2534 = vmul.f32 %v2530, %v2530
    %v2535 = vmul.f32 %v2531, %v2531
    %v2536 = vsel %vm2513, %v2532, 0.0
    %v2537 = vsel %vm2513, %v2533, 0.0
    %v2538 = vadd.f32 %v2536, %v2537
    %v2539 = vsel %vm2513, %v2534, 0.0
    %v2540 = vadd.f32 %v2538, %v2539
    %v2541 = vsel %vm2513, %v2535, 0.0
    %v2542 = vadd.f32 %v2540, %v2541
    %v2543 = vrot.slane %v2542, 4
    %v2544 = vadd.f32 %v2542, %v2543
    %v2545 = vrot.slane %v2544, 2
    %v2546 = vadd.f32 %v2544, %v2545
    %v2547 = vrot.slane %v2546, 1
    %v2548 = vadd.f32 %v2546, %v2547
    %v2549 = vmul.f32 %v2548, %v1282
    %v2550 = vld [vmem:[#allocation19] sm:$0x1]
    %v2551 = vadd.f32 %v2549, 1e-05
    %v2552 = vrsqrt.pop %v2551
    %v2553 = vmul.f32 %v2550, %v2552
    %v2555 = vlaneseq
    %v2556 = vshrl.u32 %v2555, 7
    %v2557 = vsub.s32 0, %v2556
    %v2558 = vrot.slane %v2553, %v2557
    %v2560 = vmul.f32 %v2528, %v2558
    %v2561 = vmul.f32 %v2529, %v2558
    %v2562 = vmul.f32 %v2530, %v2558
    %v2563 = vmul.f32 %v2531, %v2558
    %v2564 = vld [vmem:[#allocation20] sm:$0x1]
    %v2566 = vlaneseq
    %v2567 = vshrl.u32 %v2566, 7
    %v2568 = vsub.s32 0, %v2567
    %v2569 = vrot.slane %v2564, %v2568
    %v2571 = vadd.f32 %v2560, %v2569
    %v2572 = vadd.f32 %v2561, %v2569
    %v2573 = vadd.f32 %v2562, %v2569
    %v2574 = vadd.f32 %v2563, %v2569
    %2575 = vst.msk [vmem:[%s28] sm:$0xff] %vm2513, %v2571
    %2576 = vst.msk [vmem:[%s28 + $0x8] sm:$0xff] %vm2513, %v2572
    %2577 = vst.msk [vmem:[%s28 + $0x10] sm:$0xff] %vm2513, %v2573
    %2578 = vst.msk [vmem:[%s28 + $0x18] sm:$0xff] %vm2513, %v2574
    %v2579 = vld [vmem:[#allocation23] sm:$0x3]
    %v2580 = vpack.c.bf16 %v2571, %v2571
    %v2581 = vpack.c.bf16 %v2573, %v2573
    %v2582 = vld [vmem:[#allocation22] sm:$0xff]
    %v2585 = vunpack.c.l.b16 %v2580
    %v2586 = vunpack.c.l.b16 %v2581
    %v2587 = vrot.slane %v2586, 7
    %vm2588 = vcmask 1041409
    %v2589 = vsel %vm2588, %v2587, %v2585
    %v2590 = vpack.c.b16 %v2589, %v2589
    %v2592 = vunpack.c.l.b16 %v2582
    %v2593 = vunpack.c.h.b16 %v2582
    %v2594 = vpack.c.b16 %v2592, %v2592
    %v2595 = vpack.c.b16 %v2593, %v2593
    %v2597 = vsel %vm2513, %v2590, 0
    %vm2599 = vcmask 1043456
    %v2601 = vsel %vm2599, %v2594, 0
    %v2604 = vsel %vm2599, %v2595, 0
    %2606 = vmatprep.subr.bf16.mxu0 %v2604
    %2607 = vmatpush1.bf16.msra.mxu0 %v2601
    %2608 = vmatprep.subr.bf16.mxu0 0
    %2609 = vmatpush1.bf16.msra.mxu0 0
    %2610 = vmatprep.subr.bf16.mxu0 0
    %2611 = vmatpush1.bf16.msra.mxu0 0
    %2612 = vmatprep.subr.bf16.mxu0 0
    %2613 = vmatpush1.bf16.msra.mxu0 0
    %2614 = vmatprep.subr.bf16.mxu0 0
    %2615 = vmatpush1.bf16.msra.mxu0 0
    %2616 = vmatprep.subr.bf16.mxu0 0
    %2617 = vmatpush1.bf16.msra.mxu0 0
    %2618 = vmatprep.subr.bf16.mxu0 0
    %2619 = vmatpush1.bf16.msra.mxu0 0
    %2620 = vmatprep.subr.bf16.mxu0 0
    %2621 = vmatpush1.bf16.msra.mxu0 0
    %2622 = vmatprep.subr.bf16.mxu0 0
    %2623 = vmatpush1.bf16.msra.mxu0 0
    %2624 = vmatprep.subr.bf16.mxu0 0
    %2625 = vmatpush1.bf16.msra.mxu0 0
    %2626 = vmatprep.subr.bf16.mxu0 0
    %2627 = vmatpush1.bf16.msra.mxu0 0
    %2628 = vmatprep.subr.bf16.mxu0 0
    %2629 = vmatpush1.bf16.msra.mxu0 0
    %2630 = vmatprep.subr.bf16.mxu0 0
    %2631 = vmatpush1.bf16.msra.mxu0 0
    %2632 = vmatprep.subr.bf16.mxu0 0
    %2633 = vmatpush1.bf16.msra.mxu0 0
    %2634 = vmatprep.subr.bf16.mxu0 0
    %2635 = vmatpush1.bf16.msra.mxu0 0
    %2636 = vmatprep.subr.bf16.mxu0 0
    %2637 = vmatpush1.bf16.msra.mxu0 0
    %2638 = vmatprep.mubr.bf16.mxu0 0
    %2639 = vmatmul.mubr.bf16.gmra.mrb[0].mxu0 %v2597
    %v2640 = vpop.f32.mrb[0].mxu0
    %v2641 = vadd.f32 0.0, %v2640
    %v2642 = vpop.f32.mrb[0].mxu0
    %v2643 = vadd.f32 0.0, %v2642
    %v2644 = vpop.f32.mrb[0].mxu0
    %v2645 = vpop.f32.mrb[0].mxu0
    %2646 = vdwg.mxu0
    %v2648 = vlaneseq
    %v2649 = vshrl.u32 %v2648, 7
    %v2650 = vsub.s32 0, %v2649
    %v2651 = vrot.slane %v2579, %v2650
    %v2652 = vlaneseq
    %v2653 = vshrl.u32 %v2652, 7
    %v2654 = vsub.s32 1, %v2653
    %v2655 = vrot.slane %v2579, %v2654
    %v2658 = vadd.f32 %v2651, %v2641
    %v2659 = vadd.f32 %v2655, %v2643
    %s2660 = scalar_lea.vmem [#allocation22], 8
    %v2661 = vld [vmem:[%s2660] sm:$0xff]
    %v2662 = vrot.slane %v2585, 1
    %v2663 = vsel %vm2588, %v2586, %v2662
    %v2664 = vpack.c.b16 %v2663, %v2663
    %v2666 = vunpack.c.l.b16 %v2661
    %v2667 = vunpack.c.h.b16 %v2661
    %v2668 = vpack.c.b16 %v2666, %v2666
    %v2669 = vpack.c.b16 %v2667, %v2667
    %v2671 = vsel %vm2513, %v2664, 0
    %v2674 = vsel %vm2599, %v2668, 0
    %v2677 = vsel %vm2599, %v2669, 0
    %2679 = vmatprep.subr.bf16.mxu0 %v2677
    %2680 = vmatpush1.bf16.msra.mxu0 %v2674
    %2681 = vmatprep.subr.bf16.mxu0 0
    %2682 = vmatpush1.bf16.msra.mxu0 0
    %2683 = vmatprep.subr.bf16.mxu0 0
    %2684 = vmatpush1.bf16.msra.mxu0 0
    %2685 = vmatprep.subr.bf16.mxu0 0
    %2686 = vmatpush1.bf16.msra.mxu0 0
    %2687 = vmatprep.subr.bf16.mxu0 0
    %2688 = vmatpush1.bf16.msra.mxu0 0
    %2689 = vmatprep.subr.bf16.mxu0 0
    %2690 = vmatpush1.bf16.msra.mxu0 0
    %2691 = vmatprep.subr.bf16.mxu0 0
    %2692 = vmatpush1.bf16.msra.mxu0 0
    %2693 = vmatprep.subr.bf16.mxu0 0
    %2694 = vmatpush1.bf16.msra.mxu0 0
    %2695 = vmatprep.subr.bf16.mxu0 0
    %2696 = vmatpush1.bf16.msra.mxu0 0
    %2697 = vmatprep.subr.bf16.mxu0 0
    %2698 = vmatpush1.bf16.msra.mxu0 0
    %2699 = vmatprep.subr.bf16.mxu0 0
    %2700 = vmatpush1.bf16.msra.mxu0 0
    %2701 = vmatprep.subr.bf16.mxu0 0
    %2702 = vmatpush1.bf16.msra.mxu0 0
    %2703 = vmatprep.subr.bf16.mxu0 0
    %2704 = vmatpush1.bf16.msra.mxu0 0
    %2705 = vmatprep.subr.bf16.mxu0 0
    %2706 = vmatpush1.bf16.msra.mxu0 0
    %2707 = vmatprep.subr.bf16.mxu0 0
    %2708 = vmatpush1.bf16.msra.mxu0 0
    %2709 = vmatprep.subr.bf16.mxu0 0
    %2710 = vmatpush1.bf16.msra.mxu0 0
    %2711 = vmatprep.mubr.bf16.mxu0 0
    %2712 = vmatmul.mubr.bf16.gmra.mrb[0].mxu0 %v2671
    %v2713 = vpop.f32.mrb[0].mxu0
    %v2714 = vadd.f32 0.0, %v2713
    %v2715 = vpop.f32.mrb[0].mxu0
    %v2716 = vadd.f32 0.0, %v2715
    %v2717 = vpop.f32.mrb[0].mxu0
    %v2718 = vpop.f32.mrb[0].mxu0
    %2719 = vdwg.mxu0
    %v2720 = vadd.f32 %v2658, %v2714
    %v2721 = vadd.f32 %v2659, %v2716
    %s2722 = scalar_lea.vmem [#allocation22], 16
    %v2723 = vld [vmem:[%s2722] sm:$0xff]
    %v2724 = vrot.slane %v2585, 2
    %v2725 = vrot.slane %v2586, 1
    %v2726 = vsel %vm2588, %v2725, %v2724
    %v2727 = vpack.c.b16 %v2726, %v2726
    %v2729 = vunpack.c.l.b16 %v2723
    %v2730 = vunpack.c.h.b16 %v2723
    %v2731 = vpack.c.b16 %v2729, %v2729
    %v2732 = vpack.c.b16 %v2730, %v2730
    %v2734 = vsel %vm2513, %v2727, 0
    %v2737 = vsel %vm2599, %v2731, 0
    %v2740 = vsel %vm2599, %v2732, 0
    %2742 = vmatprep.subr.bf16.mxu0 %v2740
    %2743 = vmatpush1.bf16.msra.mxu0 %v2737
    %2744 = vmatprep.subr.bf16.mxu0 0
    %2745 = vmatpush1.bf16.msra.mxu0 0
    %2746 = vmatprep.subr.bf16.mxu0 0
    %2747 = vmatpush1.bf16.msra.mxu0 0
    %2748 = vmatprep.subr.bf16.mxu0 0
    %2749 = vmatpush1.bf16.msra.mxu0 0
    %2750 = vmatprep.subr.bf16.mxu0 0
    %2751 = vmatpush1.bf16.msra.mxu0 0
    %2752 = vmatprep.subr.bf16.mxu0 0
    %2753 = vmatpush1.bf16.msra.mxu0 0
    %2754 = vmatprep.subr.bf16.mxu0 0
    %2755 = vmatpush1.bf16.msra.mxu0 0
    %2756 = vmatprep.subr.bf16.mxu0 0
    %2757 = vmatpush1.bf16.msra.mxu0 0
    %2758 = vmatprep.subr.bf16.mxu0 0
    %2759 = vmatpush1.bf16.msra.mxu0 0
    %2760 = vmatprep.subr.bf16.mxu0 0
    %2761 = vmatpush1.bf16.msra.mxu0 0
    %2762 = vmatprep.subr.bf16.mxu0 0
    %2763 = vmatpush1.bf16.msra.mxu0 0
    %2764 = vmatprep.subr.bf16.mxu0 0
    %2765 = vmatpush1.bf16.msra.mxu0 0
    %2766 = vmatprep.subr.bf16.mxu0 0
    %2767 = vmatpush1.bf16.msra.mxu0 0
    %2768 = vmatprep.subr.bf16.mxu0 0
    %2769 = vmatpush1.bf16.msra.mxu0 0
    %2770 = vmatprep.subr.bf16.mxu0 0
    %2771 = vmatpush1.bf16.msra.mxu0 0
    %2772 = vmatprep.subr.bf16.mxu0 0
    %2773 = vmatpush1.bf16.msra.mxu0 0
    %2774 = vmatprep.mubr.bf16.mxu0 0
    %2775 = vmatmul.mubr.bf16.gmra.mrb[0].mxu0 %v2734
    %v2776 = vpop.f32.mrb[0].mxu0
    %v2777 = vadd.f32 0.0, %v2776
    %v2778 = vpop.f32.mrb[0].mxu0
    %v2779 = vadd.f32 0.0, %v2778
    %v2780 = vpop.f32.mrb[0].mxu0
    %v2781 = vpop.f32.mrb[0].mxu0
    %2782 = vdwg.mxu0
    %v2783 = vadd.f32 %v2720, %v2777
    %v2784 = vadd.f32 %v2721, %v2779
    %s2785 = scalar_lea.vmem [#allocation22], 24
    %v2786 = vld [vmem:[%s2785] sm:$0xff]
    %v2787 = vrot.slane %v2585, 3
    %v2788 = vrot.slane %v2586, 2
    %v2789 = vsel %vm2588, %v2788, %v2787
    %v2790 = vpack.c.b16 %v2789, %v2789
    %v2792 = vunpack.c.l.b16 %v2786
    %v2793 = vunpack.c.h.b16 %v2786
    %v2794 = vpack.c.b16 %v2792, %v2792
    %v2795 = vpack.c.b16 %v2793, %v2793
    %v2797 = vsel %vm2513, %v2790, 0
    %v2800 = vsel %vm2599, %v2794, 0
    %v2803 = vsel %vm2599, %v2795, 0
    %2805 = vmatprep.subr.bf16.mxu0 %v2803
    %2806 = vmatpush1.bf16.msra.mxu0 %v2800
    %2807 = vmatprep.subr.bf16.mxu0 0
    %2808 = vmatpush1.bf16.msra.mxu0 0
    %2809 = vmatprep.subr.bf16.mxu0 0
    %2810 = vmatpush1.bf16.msra.mxu0 0
    %2811 = vmatprep.subr.bf16.mxu0 0
    %2812 = vmatpush1.bf16.msra.mxu0 0
    %2813 = vmatprep.subr.bf16.mxu0 0
    %2814 = vmatpush1.bf16.msra.mxu0 0
    %2815 = vmatprep.subr.bf16.mxu0 0
    %2816 = vmatpush1.bf16.msra.mxu0 0
    %2817 = vmatprep.subr.bf16.mxu0 0
    %2818 = vmatpush1.bf16.msra.mxu0 0
    %2819 = vmatprep.subr.bf16.mxu0 0
    %2820 = vmatpush1.bf16.msra.mxu0 0
    %2821 = vmatprep.subr.bf16.mxu0 0
    %2822 = vmatpush1.bf16.msra.mxu0 0
    %2823 = vmatprep.subr.bf16.mxu0 0
    %2824 = vmatpush1.bf16.msra.mxu0 0
    %2825 = vmatprep.subr.bf16.mxu0 0
    %2826 = vmatpush1.bf16.msra.mxu0 0
    %2827 = vmatprep.subr.bf16.mxu0 0
    %2828 = vmatpush1.bf16.msra.mxu0 0
    %2829 = vmatprep.subr.bf16.mxu0 0
    %2830 = vmatpush1.bf16.msra.mxu0 0
    %2831 = vmatprep.subr.bf16.mxu0 0
    %2832 = vmatpush1.bf16.msra.mxu0 0
    %2833 = vmatprep.subr.bf16.mxu0 0
    %2834 = vmatpush1.bf16.msra.mxu0 0
    %2835 = vmatprep.subr.bf16.mxu0 0
    %2836 = vmatpush1.bf16.msra.mxu0 0
    %2837 = vmatprep.mubr.bf16.mxu0 0
    %2838 = vmatmul.mubr.bf16.gmra.mrb[0].mxu0 %v2797
    %v2839 = vpop.f32.mrb[0].mxu0
    %v2840 = vadd.f32 0.0, %v2839
    %v2841 = vpop.f32.mrb[0].mxu0
    %v2842 = vadd.f32 0.0, %v2841
    %v2843 = vpop.f32.mrb[0].mxu0
    %v2844 = vpop.f32.mrb[0].mxu0
    %2845 = vdwg.mxu0
    %v2846 = vadd.f32 %v2783, %v2840
    %v2847 = vadd.f32 %v2784, %v2842
    %s2848 = scalar_lea.vmem [#allocation22], 32
    %v2849 = vld [vmem:[%s2848] sm:$0xff]
    %v2850 = vrot.slane %v2585, 4
    %v2851 = vrot.slane %v2586, 3
    %v2852 = vsel %vm2588, %v2851, %v2850
    %v2853 = vpack.c.b16 %v2852, %v2852
    %v2855 = vunpack.c.l.b16 %v2849
    %v2856 = vunpack.c.h.b16 %v2849
    %v2857 = vpack.c.b16 %v2855, %v2855
    %v2858 = vpack.c.b16 %v2856, %v2856
    %v2860 = vsel %vm2513, %v2853, 0
    %v2863 = vsel %vm2599, %v2857, 0
    %v2866 = vsel %vm2599, %v2858, 0
    %2868 = vmatprep.subr.bf16.mxu0 %v2866
    %2869 = vmatpush1.bf16.msra.mxu0 %v2863
    %2870 = vmatprep.subr.bf16.mxu0 0
    %2871 = vmatpush1.bf16.msra.mxu0 0
    %2872 = vmatprep.subr.bf16.mxu0 0
    %2873 = vmatpush1.bf16.msra.mxu0 0
    %2874 = vmatprep.subr.bf16.mxu0 0
    %2875 = vmatpush1.bf16.msra.mxu0 0
    %2876 = vmatprep.subr.bf16.mxu0 0
    %2877 = vmatpush1.bf16.msra.mxu0 0
    %2878 = vmatprep.subr.bf16.mxu0 0
    %2879 = vmatpush1.bf16.msra.mxu0 0
    %2880 = vmatprep.subr.bf16.mxu0 0
    %2881 = vmatpush1.bf16.msra.mxu0 0
    %2882 = vmatprep.subr.bf16.mxu0 0
    %2883 = vmatpush1.bf16.msra.mxu0 0
    %2884 = vmatprep.subr.bf16.mxu0 0
    %2885 = vmatpush1.bf16.msra.mxu0 0
    %2886 = vmatprep.subr.bf16.mxu0 0
    %2887 = vmatpush1.bf16.msra.mxu0 0
    %2888 = vmatprep.subr.bf16.mxu0 0
    %2889 = vmatpush1.bf16.msra.mxu0 0
    %2890 = vmatprep.subr.bf16.mxu0 0
    %2891 = vmatpush1.bf16.msra.mxu0 0
    %2892 = vmatprep.subr.bf16.mxu0 0
    %2893 = vmatpush1.bf16.msra.mxu0 0
    %2894 = vmatprep.subr.bf16.mxu0 0
    %2895 = vmatpush1.bf16.msra.mxu0 0
    %2896 = vmatprep.subr.bf16.mxu0 0
    %2897 = vmatpush1.bf16.msra.mxu0 0
    %2898 = vmatprep.subr.bf16.mxu0 0
    %2899 = vmatpush1.bf16.msra.mxu0 0
    %2900 = vmatprep.mubr.bf16.mxu0 0
    %2901 = vmatmul.mubr.bf16.gmra.mrb[0].mxu0 %v2860
    %v2902 = vpop.f32.mrb[0].mxu0
    %v2903 = vadd.f32 0.0, %v2902
    %v2904 = vpop.f32.mrb[0].mxu0
    %v2905 = vadd.f32 0.0, %v2904
    %v2906 = vpop.f32.mrb[0].mxu0
    %v2907 = vpop.f32.mrb[0].mxu0
    %2908 = vdwg.mxu0
    %v2909 = vadd.f32 %v2846, %v2903
    %v2910 = vadd.f32 %v2847, %v2905
    %s2911 = scalar_lea.vmem [#allocation22], 40
    %v2912 = vld [vmem:[%s2911] sm:$0xff]
    %v2913 = vrot.slane %v2585, 5
    %v2914 = vrot.slane %v2586, 4
    %v2915 = vsel %vm2588, %v2914, %v2913
    %v2916 = vpack.c.b16 %v2915, %v2915
    %v2918 = vunpack.c.l.b16 %v2912
    %v2919 = vunpack.c.h.b16 %v2912
    %v2920 = vpack.c.b16 %v2918, %v2918
    %v2921 = vpack.c.b16 %v2919, %v2919
    %v2923 = vsel %vm2513, %v2916, 0
    %v2926 = vsel %vm2599, %v2920, 0
    %v2929 = vsel %vm2599, %v2921, 0
    %2931 = vmatprep.subr.bf16.mxu0 %v2929
    %2932 = vmatpush1.bf16.msra.mxu0 %v2926
    %2933 = vmatprep.subr.bf16.mxu0 0
    %2934 = vmatpush1.bf16.msra.mxu0 0
    %2935 = vmatprep.subr.bf16.mxu0 0
    %2936 = vmatpush1.bf16.msra.mxu0 0
    %2937 = vmatprep.subr.bf16.mxu0 0
    %2938 = vmatpush1.bf16.msra.mxu0 0
    %2939 = vmatprep.subr.bf16.mxu0 0
    %2940 = vmatpush1.bf16.msra.mxu0 0
    %2941 = vmatprep.subr.bf16.mxu0 0
    %2942 = vmatpush1.bf16.msra.mxu0 0
    %2943 = vmatprep.subr.bf16.mxu0 0
    %2944 = vmatpush1.bf16.msra.mxu0 0
    %2945 = vmatprep.subr.bf16.mxu0 0
    %2946 = vmatpush1.bf16.msra.mxu0 0
    %2947 = vmatprep.subr.bf16.mxu0 0
    %2948 = vmatpush1.bf16.msra.mxu0 0
    %2949 = vmatprep.subr.bf16.mxu0 0
    %2950 = vmatpush1.bf16.msra.mxu0 0
    %2951 = vmatprep.subr.bf16.mxu0 0
    %2952 = vmatpush1.bf16.msra.mxu0 0
    %2953 = vmatprep.subr.bf16.mxu0 0
    %2954 = vmatpush1.bf16.msra.mxu0 0
    %2955 = vmatprep.subr.bf16.mxu0 0
    %2956 = vmatpush1.bf16.msra.mxu0 0
    %2957 = vmatprep.subr.bf16.mxu0 0
    %2958 = vmatpush1.bf16.msra.mxu0 0
    %2959 = vmatprep.subr.bf16.mxu0 0
    %2960 = vmatpush1.bf16.msra.mxu0 0
    %2961 = vmatprep.subr.bf16.mxu0 0
    %2962 = vmatpush1.bf16.msra.mxu0 0
    %2963 = vmatprep.mubr.bf16.mxu0 0
    %2964 = vmatmul.mubr.bf16.gmra.mrb[0].mxu0 %v2923
    %v2965 = vpop.f32.mrb[0].mxu0
    %v2966 = vadd.f32 0.0, %v2965
    %v2967 = vpop.f32.mrb[0].mxu0
    %v2968 = vadd.f32 0.0, %v2967
    %v2969 = vpop.f32.mrb[0].mxu0
    %v2970 = vpop.f32.mrb[0].mxu0
    %2971 = vdwg.mxu0
    %v2972 = vadd.f32 %v2909, %v2966
    %v2973 = vadd.f32 %v2910, %v2968
    %s2974 = scalar_lea.vmem [#allocation22], 48
    %v2975 = vld [vmem:[%s2974] sm:$0xff]
    %v2976 = vrot.slane %v2585, 6
    %v2977 = vrot.slane %v2586, 5
    %v2978 = vsel %vm2588, %v2977, %v2976
    %v2979 = vpack.c.b16 %v2978, %v2978
    %v2981 = vunpack.c.l.b16 %v2975
    %v2982 = vunpack.c.h.b16 %v2975
    %v2983 = vpack.c.b16 %v2981, %v2981
    %v2984 = vpack.c.b16 %v2982, %v2982
    %v2986 = vsel %vm2513, %v2979, 0
    %v2989 = vsel %vm2599, %v2983, 0
    %v2992 = vsel %vm2599, %v2984, 0
    %2994 = vmatprep.subr.bf16.mxu0 %v2992
    %2995 = vmatpush1.bf16.msra.mxu0 %v2989
    %2996 = vmatprep.subr.bf16.mxu0 0
    %2997 = vmatpush1.bf16.msra.mxu0 0
    %2998 = vmatprep.subr.bf16.mxu0 0
    %2999 = vmatpush1.bf16.msra.mxu0 0
    %3000 = vmatprep.subr.bf16.mxu0 0
    %3001 = vmatpush1.bf16.msra.mxu0 0
    %3002 = vmatprep.subr.bf16.mxu0 0
    %3003 = vmatpush1.bf16.msra.mxu0 0
    %3004 = vmatprep.subr.bf16.mxu0 0
    %3005 = vmatpush1.bf16.msra.mxu0 0
    %3006 = vmatprep.subr.bf16.mxu0 0
    %3007 = vmatpush1.bf16.msra.mxu0 0
    %3008 = vmatprep.subr.bf16.mxu0 0
    %3009 = vmatpush1.bf16.msra.mxu0 0
    %3010 = vmatprep.subr.bf16.mxu0 0
    %3011 = vmatpush1.bf16.msra.mxu0 0
    %3012 = vmatprep.subr.bf16.mxu0 0
    %3013 = vmatpush1.bf16.msra.mxu0 0
    %3014 = vmatprep.subr.bf16.mxu0 0
    %3015 = vmatpush1.bf16.msra.mxu0 0
    %3016 = vmatprep.subr.bf16.mxu0 0
    %3017 = vmatpush1.bf16.msra.mxu0 0
    %3018 = vmatprep.subr.bf16.mxu0 0
    %3019 = vmatpush1.bf16.msra.mxu0 0
    %3020 = vmatprep.subr.bf16.mxu0 0
    %3021 = vmatpush1.bf16.msra.mxu0 0
    %3022 = vmatprep.subr.bf16.mxu0 0
    %3023 = vmatpush1.bf16.msra.mxu0 0
    %3024 = vmatprep.subr.bf16.mxu0 0
    %3025 = vmatpush1.bf16.msra.mxu0 0
    %3026 = vmatprep.mubr.bf16.mxu0 0
    %3027 = vmatmul.mubr.bf16.gmra.mrb[0].mxu0 %v2986
    %v3028 = vpop.f32.mrb[0].mxu0
    %v3029 = vadd.f32 0.0, %v3028
    %v3030 = vpop.f32.mrb[0].mxu0
    %v3031 = vadd.f32 0.0, %v3030
    %v3032 = vpop.f32.mrb[0].mxu0
    %v3033 = vpop.f32.mrb[0].mxu0
    %3034 = vdwg.mxu0
    %v3035 = vadd.f32 %v2972, %v3029
    %v3036 = vadd.f32 %v2973, %v3031
    %s3037 = scalar_lea.vmem [#allocation22], 56
    %v3038 = vld [vmem:[%s3037] sm:$0xff]
    %v3039 = vrot.slane %v2585, 7
    %v3040 = vrot.slane %v2586, 6
    %v3041 = vsel %vm2588, %v3040, %v3039
    %v3042 = vpack.c.b16 %v3041, %v3041
    %v3044 = vunpack.c.l.b16 %v3038
    %v3045 = vunpack.c.h.b16 %v3038
    %v3046 = vpack.c.b16 %v3044, %v3044
    %v3047 = vpack.c.b16 %v3045, %v3045
    %v3049 = vsel %vm2513, %v3042, 0
    %v3052 = vsel %vm2599, %v3046, 0
    %v3055 = vsel %vm2599, %v3047, 0
    %3057 = vmatprep.subr.bf16.mxu0 %v3055
    %3058 = vmatpush1.bf16.msra.mxu0 %v3052
    %3059 = vmatprep.subr.bf16.mxu0 0
    %3060 = vmatpush1.bf16.msra.mxu0 0
    %3061 = vmatprep.subr.bf16.mxu0 0
    %3062 = vmatpush1.bf16.msra.mxu0 0
    %3063 = vmatprep.subr.bf16.mxu0 0
    %3064 = vmatpush1.bf16.msra.mxu0 0
    %3065 = vmatprep.subr.bf16.mxu0 0
    %3066 = vmatpush1.bf16.msra.mxu0 0
    %3067 = vmatprep.subr.bf16.mxu0 0
    %3068 = vmatpush1.bf16.msra.mxu0 0
    %3069 = vmatprep.subr.bf16.mxu0 0
    %3070 = vmatpush1.bf16.msra.mxu0 0
    %3071 = vmatprep.subr.bf16.mxu0 0
    %3072 = vmatpush1.bf16.msra.mxu0 0
    %3073 = vmatprep.subr.bf16.mxu0 0
    %3074 = vmatpush1.bf16.msra.mxu0 0
    %3075 = vmatprep.subr.bf16.mxu0 0
    %3076 = vmatpush1.bf16.msra.mxu0 0
    %3077 = vmatprep.subr.bf16.mxu0 0
    %3078 = vmatpush1.bf16.msra.mxu0 0
    %3079 = vmatprep.subr.bf16.mxu0 0
    %3080 = vmatpush1.bf16.msra.mxu0 0
    %3081 = vmatprep.subr.bf16.mxu0 0
    %3082 = vmatpush1.bf16.msra.mxu0 0
    %3083 = vmatprep.subr.bf16.mxu0 0
    %3084 = vmatpush1.bf16.msra.mxu0 0
    %3085 = vmatprep.subr.bf16.mxu0 0
    %3086 = vmatpush1.bf16.msra.mxu0 0
    %3087 = vmatprep.subr.bf16.mxu0 0
    %3088 = vmatpush1.bf16.msra.mxu0 0
    %3089 = vmatprep.mubr.bf16.mxu0 0
    %3090 = vmatmul.mubr.bf16.gmra.mrb[0].mxu0 %v3049
    %v3091 = vpop.f32.mrb[0].mxu0
    %v3092 = vadd.f32 0.0, %v3091
    %v3093 = vpop.f32.mrb[0].mxu0
    %v3094 = vadd.f32 0.0, %v3093
    %v3095 = vpop.f32.mrb[0].mxu0
    %v3096 = vpop.f32.mrb[0].mxu0
    %3097 = vdwg.mxu0
    %v3098 = vadd.f32 %v3035, %v3092
    %v3099 = vadd.f32 %v3036, %v3094
    %v3100 = vpack.c.bf16 %v2572, %v2572
    %v3101 = vpack.c.bf16 %v2574, %v2574
    %s3102 = scalar_lea.vmem [#allocation22], 64
    %v3103 = vld [vmem:[%s3102] sm:$0xff]
    %v3106 = vunpack.c.l.b16 %v3100
    %v3107 = vunpack.c.l.b16 %v3101
    %v3108 = vrot.slane %v3107, 7
    %v3109 = vsel %vm2588, %v3108, %v3106
    %v3110 = vpack.c.b16 %v3109, %v3109
    %v3112 = vunpack.c.l.b16 %v3103
    %v3113 = vunpack.c.h.b16 %v3103
    %v3114 = vpack.c.b16 %v3112, %v3112
    %v3115 = vpack.c.b16 %v3113, %v3113
    %v3117 = vsel %vm2513, %v3110, 0
    %v3120 = vsel %vm2599, %v3114, 0
    %v3123 = vsel %vm2599, %v3115, 0
    %3125 = vmatprep.subr.bf16.mxu0 %v3123
    %3126 = vmatpush1.bf16.msra.mxu0 %v3120
    %3127 = vmatprep.subr.bf16.mxu0 0
    %3128 = vmatpush1.bf16.msra.mxu0 0
    %3129 = vmatprep.subr.bf16.mxu0 0
    %3130 = vmatpush1.bf16.msra.mxu0 0
    %3131 = vmatprep.subr.bf16.mxu0 0
    %3132 = vmatpush1.bf16.msra.mxu0 0
    %3133 = vmatprep.subr.bf16.mxu0 0
    %3134 = vmatpush1.bf16.msra.mxu0 0
    %3135 = vmatprep.subr.bf16.mxu0 0
    %3136 = vmatpush1.bf16.msra.mxu0 0
    %3137 = vmatprep.subr.bf16.mxu0 0
    %3138 = vmatpush1.bf16.msra.mxu0 0
    %3139 = vmatprep.subr.bf16.mxu0 0
    %3140 = vmatpush1.bf16.msra.mxu0 0
    %3141 = vmatprep.subr.bf16.mxu0 0
    %3142 = vmatpush1.bf16.msra.mxu0 0
    %3143 = vmatprep.subr.bf16.mxu0 0
    %3144 = vmatpush1.bf16.msra.mxu0 0
    %3145 = vmatprep.subr.bf16.mxu0 0
    %3146 = vmatpush1.bf16.msra.mxu0 0
    %3147 = vmatprep.subr.bf16.mxu0 0
    %3148 = vmatpush1.bf16.msra.mxu0 0
    %3149 = vmatprep.subr.bf16.mxu0 0
    %3150 = vmatpush1.bf16.msra.mxu0 0
    %3151 = vmatprep.subr.bf16.mxu0 0
    %3152 = vmatpush1.bf16.msra.mxu0 0
    %3153 = vmatprep.subr.bf16.mxu0 0
    %3154 = vmatpush1.bf16.msra.mxu0 0
    %3155 = vmatprep.subr.bf16.mxu0 0
    %3156 = vmatpush1.bf16.msra.mxu0 0
    %3157 = vmatprep.mubr.bf16.mxu0 0
    %3158 = vmatmul.mubr.bf16.gmra.mrb[0].mxu0 %v3117
    %v3159 = vpop.f32.mrb[0].mxu0
    %v3160 = vadd.f32 0.0, %v3159
    %v3161 = vpop.f32.mrb[0].mxu0
    %v3162 = vadd.f32 0.0, %v3161
    %v3163 = vpop.f32.mrb[0].mxu0
    %v3164 = vpop.f32.mrb[0].mxu0
    %3165 = vdwg.mxu0
    %v3166 = vadd.f32 %v3098, %v3160
    %v3167 = vadd.f32 %v3099, %v3162
    %s3168 = scalar_lea.vmem [#allocation22], 72
    %v3169 = vld [vmem:[%s3168] sm:$0xff]
    %v3170 = vrot.slane %v3106, 1
    %v3171 = vsel %vm2588, %v3107, %v3170
    %v3172 = vpack.c.b16 %v3171, %v3171
    %v3174 = vunpack.c.l.b16 %v3169
    %v3175 = vunpack.c.h.b16 %v3169
    %v3176 = vpack.c.b16 %v3174, %v3174
    %v3177 = vpack.c.b16 %v3175, %v3175
    %v3179 = vsel %vm2513, %v3172, 0
    %v3182 = vsel %vm2599, %v3176, 0
    %v3185 = vsel %vm2599, %v3177, 0
    %3187 = vmatprep.subr.bf16.mxu0 %v3185
    %3188 = vmatpush1.bf16.msra.mxu0 %v3182
    %3189 = vmatprep.subr.bf16.mxu0 0
    %3190 = vmatpush1.bf16.msra.mxu0 0
    %3191 = vmatprep.subr.bf16.mxu0 0
    %3192 = vmatpush1.bf16.msra.mxu0 0
    %3193 = vmatprep.subr.bf16.mxu0 0
    %3194 = vmatpush1.bf16.msra.mxu0 0
    %3195 = vmatprep.subr.bf16.mxu0 0
    %3196 = vmatpush1.bf16.msra.mxu0 0
    %3197 = vmatprep.subr.bf16.mxu0 0
    %3198 = vmatpush1.bf16.msra.mxu0 0
    %3199 = vmatprep.subr.bf16.mxu0 0
    %3200 = vmatpush1.bf16.msra.mxu0 0
    %3201 = vmatprep.subr.bf16.mxu0 0
    %3202 = vmatpush1.bf16.msra.mxu0 0
    %3203 = vmatprep.subr.bf16.mxu0 0
    %3204 = vmatpush1.bf16.msra.mxu0 0
    %3205 = vmatprep.subr.bf16.mxu0 0
    %3206 = vmatpush1.bf16.msra.mxu0 0
    %3207 = vmatprep.subr.bf16.mxu0 0
    %3208 = vmatpush1.bf16.msra.mxu0 0
    %3209 = vmatprep.subr.bf16.mxu0 0
    %3210 = vmatpush1.bf16.msra.mxu0 0
    %3211 = vmatprep.subr.bf16.mxu0 0
    %3212 = vmatpush1.bf16.msra.mxu0 0
    %3213 = vmatprep.subr.bf16.mxu0 0
    %3214 = vmatpush1.bf16.msra.mxu0 0
    %3215 = vmatprep.subr.bf16.mxu0 0
    %3216 = vmatpush1.bf16.msra.mxu0 0
    %3217 = vmatprep.subr.bf16.mxu0 0
    %3218 = vmatpush1.bf16.msra.mxu0 0
    %3219 = vmatprep.mubr.bf16.mxu0 0
    %3220 = vmatmul.mubr.bf16.gmra.mrb[0].mxu0 %v3179
    %v3221 = vpop.f32.mrb[0].mxu0
    %v3222 = vadd.f32 0.0, %v3221
    %v3223 = vpop.f32.mrb[0].mxu0
    %v3224 = vadd.f32 0.0, %v3223
    %v3225 = vpop.f32.mrb[0].mxu0
    %v3226 = vpop.f32.mrb[0].mxu0
    %3227 = vdwg.mxu0
    %v3228 = vadd.f32 %v3166, %v3222
    %v3229 = vadd.f32 %v3167, %v3224
    %s3230 = scalar_lea.vmem [#allocation22], 80
    %v3231 = vld [vmem:[%s3230] sm:$0xff]
    %v3232 = vrot.slane %v3106, 2
    %v3233 = vrot.slane %v3107, 1
    %v3234 = vsel %vm2588, %v3233, %v3232
    %v3235 = vpack.c.b16 %v3234, %v3234
    %v3237 = vunpack.c.l.b16 %v3231
    %v3238 = vunpack.c.h.b16 %v3231
    %v3239 = vpack.c.b16 %v3237, %v3237
    %v3240 = vpack.c.b16 %v3238, %v3238
    %v3242 = vsel %vm2513, %v3235, 0
    %v3245 = vsel %vm2599, %v3239, 0
    %v3248 = vsel %vm2599, %v3240, 0
    %3250 = vmatprep.subr.bf16.mxu0 %v3248
    %3251 = vmatpush1.bf16.msra.mxu0 %v3245
    %3252 = vmatprep.subr.bf16.mxu0 0
    %3253 = vmatpush1.bf16.msra.mxu0 0
    %3254 = vmatprep.subr.bf16.mxu0 0
    %3255 = vmatpush1.bf16.msra.mxu0 0
    %3256 = vmatprep.subr.bf16.mxu0 0
    %3257 = vmatpush1.bf16.msra.mxu0 0
    %3258 = vmatprep.subr.bf16.mxu0 0
    %3259 = vmatpush1.bf16.msra.mxu0 0
    %3260 = vmatprep.subr.bf16.mxu0 0
    %3261 = vmatpush1.bf16.msra.mxu0 0
    %3262 = vmatprep.subr.bf16.mxu0 0
    %3263 = vmatpush1.bf16.msra.mxu0 0
    %3264 = vmatprep.subr.bf16.mxu0 0
    %3265 = vmatpush1.bf16.msra.mxu0 0
    %3266 = vmatprep.subr.bf16.mxu0 0
    %3267 = vmatpush1.bf16.msra.mxu0 0
    %3268 = vmatprep.subr.bf16.mxu0 0
    %3269 = vmatpush1.bf16.msra.mxu0 0
    %3270 = vmatprep.subr.bf16.mxu0 0
    %3271 = vmatpush1.bf16.msra.mxu0 0
    %3272 = vmatprep.subr.bf16.mxu0 0
    %3273 = vmatpush1.bf16.msra.mxu0 0
    %3274 = vmatprep.subr.bf16.mxu0 0
    %3275 = vmatpush1.bf16.msra.mxu0 0
    %3276 = vmatprep.subr.bf16.mxu0 0
    %3277 = vmatpush1.bf16.msra.mxu0 0
    %3278 = vmatprep.subr.bf16.mxu0 0
    %3279 = vmatpush1.bf16.msra.mxu0 0
    %3280 = vmatprep.subr.bf16.mxu0 0
    %3281 = vmatpush1.bf16.msra.mxu0 0
    %3282 = vmatprep.mubr.bf16.mxu0 0
    %3283 = vmatmul.mubr.bf16.gmra.mrb[0].mxu0 %v3242
    %v3284 = vpop.f32.mrb[0].mxu0
    %v3285 = vadd.f32 0.0, %v3284
    %v3286 = vpop.f32.mrb[0].mxu0
    %v3287 = vadd.f32 0.0, %v3286
    %v3288 = vpop.f32.mrb[0].mxu0
    %v3289 = vpop.f32.mrb[0].mxu0
    %3290 = vdwg.mxu0
    %v3291 = vadd.f32 %v3228, %v3285
    %v3292 = vadd.f32 %v3229, %v3287
    %s3293 = scalar_lea.vmem [#allocation22], 88
    %v3294 = vld [vmem:[%s3293] sm:$0xff]
    %v3295 = vrot.slane %v3106, 3
    %v3296 = vrot.slane %v3107, 2
    %v3297 = vsel %vm2588, %v3296, %v3295
    %v3298 = vpack.c.b16 %v3297, %v3297
    %v3300 = vunpack.c.l.b16 %v3294
    %v3301 = vunpack.c.h.b16 %v3294
    %v3302 = vpack.c.b16 %v3300, %v3300
    %v3303 = vpack.c.b16 %v3301, %v3301
    %v3305 = vsel %vm2513, %v3298, 0
    %v3308 = vsel %vm2599, %v3302, 0
    %v3311 = vsel %vm2599, %v3303, 0
    %3313 = vmatprep.subr.bf16.mxu0 %v3311
    %3314 = vmatpush1.bf16.msra.mxu0 %v3308
    %3315 = vmatprep.subr.bf16.mxu0 0
    %3316 = vmatpush1.bf16.msra.mxu0 0
    %3317 = vmatprep.subr.bf16.mxu0 0
    %3318 = vmatpush1.bf16.msra.mxu0 0
    %3319 = vmatprep.subr.bf16.mxu0 0
    %3320 = vmatpush1.bf16.msra.mxu0 0
    %3321 = vmatprep.subr.bf16.mxu0 0
    %3322 = vmatpush1.bf16.msra.mxu0 0
    %3323 = vmatprep.subr.bf16.mxu0 0
    %3324 = vmatpush1.bf16.msra.mxu0 0
    %3325 = vmatprep.subr.bf16.mxu0 0
    %3326 = vmatpush1.bf16.msra.mxu0 0
    %3327 = vmatprep.subr.bf16.mxu0 0
    %3328 = vmatpush1.bf16.msra.mxu0 0
    %3329 = vmatprep.subr.bf16.mxu0 0
    %3330 = vmatpush1.bf16.msra.mxu0 0
    %3331 = vmatprep.subr.bf16.mxu0 0
    %3332 = vmatpush1.bf16.msra.mxu0 0
    %3333 = vmatprep.subr.bf16.mxu0 0
    %3334 = vmatpush1.bf16.msra.mxu0 0
    %3335 = vmatprep.subr.bf16.mxu0 0
    %3336 = vmatpush1.bf16.msra.mxu0 0
    %3337 = vmatprep.subr.bf16.mxu0 0
    %3338 = vmatpush1.bf16.msra.mxu0 0
    %3339 = vmatprep.subr.bf16.mxu0 0
    %3340 = vmatpush1.bf16.msra.mxu0 0
    %3341 = vmatprep.subr.bf16.mxu0 0
    %3342 = vmatpush1.bf16.msra.mxu0 0
    %3343 = vmatprep.subr.bf16.mxu0 0
    %3344 = vmatpush1.bf16.msra.mxu0 0
    %3345 = vmatprep.mubr.bf16.mxu0 0
    %3346 = vmatmul.mubr.bf16.gmra.mrb[0].mxu0 %v3305
    %v3347 = vpop.f32.mrb[0].mxu0
    %v3348 = vadd.f32 0.0, %v3347
    %v3349 = vpop.f32.mrb[0].mxu0
    %v3350 = vadd.f32 0.0, %v3349
    %v3351 = vpop.f32.mrb[0].mxu0
    %v3352 = vpop.f32.mrb[0].mxu0
    %3353 = vdwg.mxu0
    %v3354 = vadd.f32 %v3291, %v3348
    %v3355 = vadd.f32 %v3292, %v3350
    %s3356 = scalar_lea.vmem [#allocation22], 96
    %v3357 = vld [vmem:[%s3356] sm:$0xff]
    %v3358 = vrot.slane %v3106, 4
    %v3359 = vrot.slane %v3107, 3
    %v3360 = vsel %vm2588, %v3359, %v3358
    %v3361 = vpack.c.b16 %v3360, %v3360
    %v3363 = vunpack.c.l.b16 %v3357
    %v3364 = vunpack.c.h.b16 %v3357
    %v3365 = vpack.c.b16 %v3363, %v3363
    %v3366 = vpack.c.b16 %v3364, %v3364
    %v3368 = vsel %vm2513, %v3361, 0
    %v3371 = vsel %vm2599, %v3365, 0
    %v3374 = vsel %vm2599, %v3366, 0
    %3376 = vmatprep.subr.bf16.mxu0 %v3374
    %3377 = vmatpush1.bf16.msra.mxu0 %v3371
    %3378 = vmatprep.subr.bf16.mxu0 0
    %3379 = vmatpush1.bf16.msra.mxu0 0
    %3380 = vmatprep.subr.bf16.mxu0 0
    %3381 = vmatpush1.bf16.msra.mxu0 0
    %3382 = vmatprep.subr.bf16.mxu0 0
    %3383 = vmatpush1.bf16.msra.mxu0 0
    %3384 = vmatprep.subr.bf16.mxu0 0
    %3385 = vmatpush1.bf16.msra.mxu0 0
    %3386 = vmatprep.subr.bf16.mxu0 0
    %3387 = vmatpush1.bf16.msra.mxu0 0
    %3388 = vmatprep.subr.bf16.mxu0 0
    %3389 = vmatpush1.bf16.msra.mxu0 0
    %3390 = vmatprep.subr.bf16.mxu0 0
    %3391 = vmatpush1.bf16.msra.mxu0 0
    %3392 = vmatprep.subr.bf16.mxu0 0
    %3393 = vmatpush1.bf16.msra.mxu0 0
    %3394 = vmatprep.subr.bf16.mxu0 0
    %3395 = vmatpush1.bf16.msra.mxu0 0
    %3396 = vmatprep.subr.bf16.mxu0 0
    %3397 = vmatpush1.bf16.msra.mxu0 0
    %3398 = vmatprep.subr.bf16.mxu0 0
    %3399 = vmatpush1.bf16.msra.mxu0 0
    %3400 = vmatprep.subr.bf16.mxu0 0
    %3401 = vmatpush1.bf16.msra.mxu0 0
    %3402 = vmatprep.subr.bf16.mxu0 0
    %3403 = vmatpush1.bf16.msra.mxu0 0
    %3404 = vmatprep.subr.bf16.mxu0 0
    %3405 = vmatpush1.bf16.msra.mxu0 0
    %3406 = vmatprep.subr.bf16.mxu0 0
    %3407 = vmatpush1.bf16.msra.mxu0 0
    %3408 = vmatprep.mubr.bf16.mxu0 0
    %3409 = vmatmul.mubr.bf16.gmra.mrb[0].mxu0 %v3368
    %v3410 = vpop.f32.mrb[0].mxu0
    %v3411 = vadd.f32 0.0, %v3410
    %v3412 = vpop.f32.mrb[0].mxu0
    %v3413 = vadd.f32 0.0, %v3412
    %v3414 = vpop.f32.mrb[0].mxu0
    %v3415 = vpop.f32.mrb[0].mxu0
    %3416 = vdwg.mxu0
    %v3417 = vadd.f32 %v3354, %v3411
    %v3418 = vadd.f32 %v3355, %v3413
    %s3419 = scalar_lea.vmem [#allocation22], 104
    %v3420 = vld [vmem:[%s3419] sm:$0xff]
    %v3421 = vrot.slane %v3106, 5
    %v3422 = vrot.slane %v3107, 4
    %v3423 = vsel %vm2588, %v3422, %v3421
    %v3424 = vpack.c.b16 %v3423, %v3423
    %v3426 = vunpack.c.l.b16 %v3420
    %v3427 = vunpack.c.h.b16 %v3420
    %v3428 = vpack.c.b16 %v3426, %v3426
    %v3429 = vpack.c.b16 %v3427, %v3427
    %v3431 = vsel %vm2513, %v3424, 0
    %v3434 = vsel %vm2599, %v3428, 0
    %v3437 = vsel %vm2599, %v3429, 0
    %3439 = vmatprep.subr.bf16.mxu0 %v3437
    %3440 = vmatpush1.bf16.msra.mxu0 %v3434
    %3441 = vmatprep.subr.bf16.mxu0 0
    %3442 = vmatpush1.bf16.msra.mxu0 0
    %3443 = vmatprep.subr.bf16.mxu0 0
    %3444 = vmatpush1.bf16.msra.mxu0 0
    %3445 = vmatprep.subr.bf16.mxu0 0
    %3446 = vmatpush1.bf16.msra.mxu0 0
    %3447 = vmatprep.subr.bf16.mxu0 0
    %3448 = vmatpush1.bf16.msra.mxu0 0
    %3449 = vmatprep.subr.bf16.mxu0 0
    %3450 = vmatpush1.bf16.msra.mxu0 0
    %3451 = vmatprep.subr.bf16.mxu0 0
    %3452 = vmatpush1.bf16.msra.mxu0 0
    %3453 = vmatprep.subr.bf16.mxu0 0
    %3454 = vmatpush1.bf16.msra.mxu0 0
    %3455 = vmatprep.subr.bf16.mxu0 0
    %3456 = vmatpush1.bf16.msra.mxu0 0
    %3457 = vmatprep.subr.bf16.mxu0 0
    %3458 = vmatpush1.bf16.msra.mxu0 0
    %3459 = vmatprep.subr.bf16.mxu0 0
    %3460 = vmatpush1.bf16.msra.mxu0 0
    %3461 = vmatprep.subr.bf16.mxu0 0
    %3462 = vmatpush1.bf16.msra.mxu0 0
    %3463 = vmatprep.subr.bf16.mxu0 0
    %3464 = vmatpush1.bf16.msra.mxu0 0
    %3465 = vmatprep.subr.bf16.mxu0 0
    %3466 = vmatpush1.bf16.msra.mxu0 0
    %3467 = vmatprep.subr.bf16.mxu0 0
    %3468 = vmatpush1.bf16.msra.mxu0 0
    %3469 = vmatprep.subr.bf16.mxu0 0
    %3470 = vmatpush1.bf16.msra.mxu0 0
    %3471 = vmatprep.mubr.bf16.mxu0 0
    %3472 = vmatmul.mubr.bf16.gmra.mrb[0].mxu0 %v3431
    %v3473 = vpop.f32.mrb[0].mxu0
    %v3474 = vadd.f32 0.0, %v3473
    %v3475 = vpop.f32.mrb[0].mxu0
    %v3476 = vadd.f32 0.0, %v3475
    %v3477 = vpop.f32.mrb[0].mxu0
    %v3478 = vpop.f32.mrb[0].mxu0
    %3479 = vdwg.mxu0
    %v3480 = vadd.f32 %v3417, %v3474
    %v3481 = vadd.f32 %v3418, %v3476
    %s3482 = scalar_lea.vmem [#allocation22], 112
    %v3483 = vld [vmem:[%s3482] sm:$0xff]
    %v3484 = vrot.slane %v3106, 6
    %v3485 = vrot.slane %v3107, 5
    %v3486 = vsel %vm2588, %v3485, %v3484
    %v3487 = vpack.c.b16 %v3486, %v3486
    %v3489 = vunpack.c.l.b16 %v3483
    %v3490 = vunpack.c.h.b16 %v3483
    %v3491 = vpack.c.b16 %v3489, %v3489
    %v3492 = vpack.c.b16 %v3490, %v3490
    %v3494 = vsel %vm2513, %v3487, 0
    %v3497 = vsel %vm2599, %v3491, 0
    %v3500 = vsel %vm2599, %v3492, 0
    %3502 = vmatprep.subr.bf16.mxu0 %v3500
    %3503 = vmatpush1.bf16.msra.mxu0 %v3497
    %3504 = vmatprep.subr.bf16.mxu0 0
    %3505 = vmatpush1.bf16.msra.mxu0 0
    %3506 = vmatprep.subr.bf16.mxu0 0
    %3507 = vmatpush1.bf16.msra.mxu0 0
    %3508 = vmatprep.subr.bf16.mxu0 0
    %3509 = vmatpush1.bf16.msra.mxu0 0
    %3510 = vmatprep.subr.bf16.mxu0 0
    %3511 = vmatpush1.bf16.msra.mxu0 0
    %3512 = vmatprep.subr.bf16.mxu0 0
    %3513 = vmatpush1.bf16.msra.mxu0 0
    %3514 = vmatprep.subr.bf16.mxu0 0
    %3515 = vmatpush1.bf16.msra.mxu0 0
    %3516 = vmatprep.subr.bf16.mxu0 0
    %3517 = vmatpush1.bf16.msra.mxu0 0
    %3518 = vmatprep.subr.bf16.mxu0 0
    %3519 = vmatpush1.bf16.msra.mxu0 0
    %3520 = vmatprep.subr.bf16.mxu0 0
    %3521 = vmatpush1.bf16.msra.mxu0 0
    %3522 = vmatprep.subr.bf16.mxu0 0
    %3523 = vmatpush1.bf16.msra.mxu0 0
    %3524 = vmatprep.subr.bf16.mxu0 0
    %3525 = vmatpush1.bf16.msra.mxu0 0
    %3526 = vmatprep.subr.bf16.mxu0 0
    %3527 = vmatpush1.bf16.msra.mxu0 0
    %3528 = vmatprep.subr.bf16.mxu0 0
    %3529 = vmatpush1.bf16.msra.mxu0 0
    %3530 = vmatprep.subr.bf16.mxu0 0
    %3531 = vmatpush1.bf16.msra.mxu0 0
    %3532 = vmatprep.subr.bf16.mxu0 0
    %3533 = vmatpush1.bf16.msra.mxu0 0
    %3534 = vmatprep.mubr.bf16.mxu0 0
    %3535 = vmatmul.mubr.bf16.gmra.mrb[0].mxu0 %v3494
    %v3536 = vpop.f32.mrb[0].mxu0
    %v3537 = vadd.f32 0.0, %v3536
    %v3538 = vpop.f32.mrb[0].mxu0
    %v3539 = vadd.f32 0.0, %v3538
    %v3540 = vpop.f32.mrb[0].mxu0
    %v3541 = vpop.f32.mrb[0].mxu0
    %3542 = vdwg.mxu0
    %v3543 = vadd.f32 %v3480, %v3537
    %v3544 = vadd.f32 %v3481, %v3539
    %s3545 = scalar_lea.vmem [#allocation22], 120
    %v3546 = vld [vmem:[%s3545] sm:$0xff]
    %v3547 = vrot.slane %v3106, 7
    %v3548 = vrot.slane %v3107, 6
    %v3549 = vsel %vm2588, %v3548, %v3547
    %v3550 = vpack.c.b16 %v3549, %v3549
    %v3552 = vunpack.c.l.b16 %v3546
    %v3553 = vunpack.c.h.b16 %v3546
    %v3554 = vpack.c.b16 %v3552, %v3552
    %v3555 = vpack.c.b16 %v3553, %v3553
    %v3557 = vsel %vm2513, %v3550, 0
    %v3560 = vsel %vm2599, %v3554, 0
    %v3563 = vsel %vm2599, %v3555, 0
    %3565 = vmatprep.subr.bf16.mxu0 %v3563
    %3566 = vmatpush1.bf16.msra.mxu0 %v3560
    %3567 = vmatprep.subr.bf16.mxu0 0
    %3568 = vmatpush1.bf16.msra.mxu0 0
    %3569 = vmatprep.subr.bf16.mxu0 0
    %3570 = vmatpush1.bf16.msra.mxu0 0
    %3571 = vmatprep.subr.bf16.mxu0 0
    %3572 = vmatpush1.bf16.msra.mxu0 0
    %3573 = vmatprep.subr.bf16.mxu0 0
    %3574 = vmatpush1.bf16.msra.mxu0 0
    %3575 = vmatprep.subr.bf16.mxu0 0
    %3576 = vmatpush1.bf16.msra.mxu0 0
    %3577 = vmatprep.subr.bf16.mxu0 0
    %3578 = vmatpush1.bf16.msra.mxu0 0
    %3579 = vmatprep.subr.bf16.mxu0 0
    %3580 = vmatpush1.bf16.msra.mxu0 0
    %3581 = vmatprep.subr.bf16.mxu0 0
    %3582 = vmatpush1.bf16.msra.mxu0 0
    %3583 = vmatprep.subr.bf16.mxu0 0
    %3584 = vmatpush1.bf16.msra.mxu0 0
    %3585 = vmatprep.subr.bf16.mxu0 0
    %3586 = vmatpush1.bf16.msra.mxu0 0
    %3587 = vmatprep.subr.bf16.mxu0 0
    %3588 = vmatpush1.bf16.msra.mxu0 0
    %3589 = vmatprep.subr.bf16.mxu0 0
    %3590 = vmatpush1.bf16.msra.mxu0 0
    %3591 = vmatprep.subr.bf16.mxu0 0
    %3592 = vmatpush1.bf16.msra.mxu0 0
    %3593 = vmatprep.subr.bf16.mxu0 0
    %3594 = vmatpush1.bf16.msra.mxu0 0
    %3595 = vmatprep.subr.bf16.mxu0 0
    %3596 = vmatpush1.bf16.msra.mxu0 0
    %3597 = vmatprep.mubr.bf16.mxu0 0
    %3598 = vmatmul.mubr.bf16.gmra.mrb[0].mxu0 %v3557
    %v3599 = vpop.f32.mrb[0].mxu0
    %v3600 = vadd.f32 0.0, %v3599
    %v3601 = vpop.f32.mrb[0].mxu0
    %v3602 = vadd.f32 0.0, %v3601
    %v3603 = vpop.f32.mrb[0].mxu0
    %v3604 = vpop.f32.mrb[0].mxu0
    %3605 = vdwg.mxu0
    %v3606 = vadd.f32 %v3543, %v3600
    %v3607 = vadd.f32 %v3544, %v3602
    %v3608 = vmul.f32 %v3606, 0.2
    %v3609 = vmul.f32 %v3607, 0.2
    %v3610 = vmax.f32 %v3606, %v3608
    %v3611 = vmax.f32 %v3607, %v3609
    %v3612 = vpack.c.bf16 %v3610, %v3610
    %v3613 = vpack.c.bf16 %v3611, %v3611
    %v3614 = vld [vmem:[%s23] sm:$0xf]
    %v3615 = vld [vmem:[%s23 + $0x4] sm:$0xf]
    %v3616 = vld [vmem:[%s23 + $0x8] sm:$0xf]
    %v3617 = vld [vmem:[%s23 + $0xc] sm:$0xf]
    %v3618 = vld [vmem:[%s23 + $0x10] sm:$0xf]
    %v3619 = vld [vmem:[%s23 + $0x14] sm:$0xf]
    %v3620 = vld [vmem:[%s23 + $0x18] sm:$0xf]
    %v3621 = vld [vmem:[%s23 + $0x1c] sm:$0xf]
    %v3622 = vld [vmem:[%s23 + $0x20] sm:$0xf]
    %v3623 = vld [vmem:[%s23 + $0x24] sm:$0xf]
    %v3624 = vld [vmem:[%s23 + $0x28] sm:$0xf]
    %v3625 = vld [vmem:[%s23 + $0x2c] sm:$0xf]
    %v3626 = vld [vmem:[%s23 + $0x30] sm:$0xf]
    %v3627 = vld [vmem:[%s23 + $0x34] sm:$0xf]
    %v3628 = vld [vmem:[%s23 + $0x38] sm:$0xf]
    %v3629 = vld [vmem:[%s23 + $0x3c] sm:$0xf]
    %v3630 = vld [vmem:[%s23 + $0x40] sm:$0xf]
    %v3631 = vld [vmem:[%s23 + $0x44] sm:$0xf]
    %v3632 = vld [vmem:[%s23 + $0x48] sm:$0xf]
    %v3633 = vld [vmem:[%s23 + $0x4c] sm:$0xf]
    %v3634 = vld [vmem:[%s23 + $0x50] sm:$0xf]
    %v3635 = vld [vmem:[%s23 + $0x54] sm:$0xf]
    %v3636 = vld [vmem:[%s23 + $0x58] sm:$0xf]
    %v3637 = vld [vmem:[%s23 + $0x5c] sm:$0xf]
    %v3638 = vld [vmem:[%s23 + $0x60] sm:$0xf]
    %v3639 = vld [vmem:[%s23 + $0x64] sm:$0xf]
    %v3640 = vld [vmem:[%s23 + $0x68] sm:$0xf]
    %v3641 = vld [vmem:[%s23 + $0x6c] sm:$0xf]
    %v3642 = vld [vmem:[%s23 + $0x70] sm:$0xf]
    %v3643 = vld [vmem:[%s23 + $0x74] sm:$0xf]
    %v3644 = vld [vmem:[%s23 + $0x78] sm:$0xf]
    %v3645 = vld [vmem:[%s23 + $0x7c] sm:$0xf]
    %v3646 = vld [vmem:[#allocation25] sm:$0x1]
    %v3648 = vlaneseq
    %v3649 = vshrl.u32 %v3648, 7
    %v3650 = vsub.s32 0, %v3649
    %v3651 = vrot.slane %v3646, %v3650
    %v3685 = vunpack.c.l.b16 %v3614
    %v3686 = vunpack.c.l.b16 %v3615
    %v3687 = vunpack.c.l.b16 %v3616
    %v3688 = vunpack.c.l.b16 %v3617
    %v3689 = vunpack.c.l.b16 %v3618
    %v3690 = vunpack.c.l.b16 %v3619
    %v3691 = vunpack.c.l.b16 %v3620
    %v3692 = vunpack.c.l.b16 %v3621
    %v3693 = vunpack.c.l.b16 %v3622
    %v3694 = vunpack.c.l.b16 %v3623
    %v3695 = vunpack.c.l.b16 %v3624
    %v3696 = vunpack.c.l.b16 %v3625
    %v3697 = vunpack.c.l.b16 %v3626
    %v3698 = vunpack.c.l.b16 %v3627
    %v3699 = vunpack.c.l.b16 %v3628
    %v3700 = vunpack.c.l.b16 %v3629
    %v3701 = vunpack.c.l.b16 %v3630
    %v3702 = vunpack.c.l.b16 %v3631
    %v3703 = vunpack.c.l.b16 %v3632
    %v3704 = vunpack.c.l.b16 %v3633
    %v3705 = vunpack.c.l.b16 %v3634
    %v3706 = vunpack.c.l.b16 %v3635
    %v3707 = vunpack.c.l.b16 %v3636
    %v3708 = vunpack.c.l.b16 %v3637
    %v3709 = vunpack.c.l.b16 %v3638
    %v3710 = vunpack.c.l.b16 %v3639
    %v3711 = vunpack.c.l.b16 %v3640
    %v3712 = vunpack.c.l.b16 %v3641
    %v3713 = vunpack.c.l.b16 %v3642
    %v3714 = vunpack.c.l.b16 %v3643
    %v3715 = vunpack.c.l.b16 %v3644
    %v3716 = vunpack.c.l.b16 %v3645
    %v3717 = vpack.c.b16 %v3686, %v3685
    %v3718 = vpack.c.b16 %v3688, %v3687
    %v3719 = vpack.c.b16 %v3690, %v3689
    %v3720 = vpack.c.b16 %v3692, %v3691
    %v3721 = vpack.c.b16 %v3694, %v3693
    %v3722 = vpack.c.b16 %v3696, %v3695
    %v3723 = vpack.c.b16 %v3698, %v3697
    %v3724 = vpack.c.b16 %v3700, %v3699
    %v3725 = vpack.c.b16 %v3702, %v3701
    %v3726 = vpack.c.b16 %v3704, %v3703
    %v3727 = vpack.c.b16 %v3706, %v3705
    %v3728 = vpack.c.b16 %v3708, %v3707
    %v3729 = vpack.c.b16 %v3710, %v3709
    %v3730 = vpack.c.b16 %v3712, %v3711
    %v3731 = vpack.c.b16 %v3714, %v3713
    %v3732 = vpack.c.b16 %v3716, %v3715
    %3749 = vmatprep.subr.bf16.mxu0 0
    %3750 = vmatpush1.bf16.msra.mxu0 %v3717
    %3751 = vmatprep.subr.bf16.mxu0 0
    %3752 = vmatpush1.bf16.msra.mxu0 %v3718
    %3753 = vmatprep.subr.bf16.mxu0 0
    %3754 = vmatpush1.bf16.msra.mxu0 %v3719
    %3755 = vmatprep.subr.bf16.mxu0 0
    %3756 = vmatpush1.bf16.msra.mxu0 %v3720
    %3757 = vmatprep.subr.bf16.mxu0 0
    %3758 = vmatpush1.bf16.msra.mxu0 %v3721
    %3759 = vmatprep.subr.bf16.mxu0 0
    %3760 = vmatpush1.bf16.msra.mxu0 %v3722
    %3761 = vmatprep.subr.bf16.mxu0 0
    %3762 = vmatpush1.bf16.msra.mxu0 %v3723
    %3763 = vmatprep.subr.bf16.mxu0 0
    %3764 = vmatpush1.bf16.msra.mxu0 %v3724
    %3765 = vmatprep.subr.bf16.mxu0 0
    %3766 = vmatpush1.bf16.msra.mxu0 %v3725
    %3767 = vmatprep.subr.bf16.mxu0 0
    %3768 = vmatpush1.bf16.msra.mxu0 %v3726
    %3769 = vmatprep.subr.bf16.mxu0 0
    %3770 = vmatpush1.bf16.msra.mxu0 %v3727
    %3771 = vmatprep.subr.bf16.mxu0 0
    %3772 = vmatpush1.bf16.msra.mxu0 %v3728
    %3773 = vmatprep.subr.bf16.mxu0 0
    %3774 = vmatpush1.bf16.msra.mxu0 %v3729
    %3775 = vmatprep.subr.bf16.mxu0 0
    %3776 = vmatpush1.bf16.msra.mxu0 %v3730
    %3777 = vmatprep.subr.bf16.mxu0 0
    %3778 = vmatpush1.bf16.msra.mxu0 %v3731
    %3779 = vmatprep.subr.bf16.mxu0 0
    %3780 = vmatpush1.bf16.msra.mxu0 %v3732
    %3781 = vmatprep.mubr.bf16.mxu0 %v3613
    %3782 = vmatmul.mubr.bf16.gmra.mrb[0].mxu0 %v3612
    %v3783 = vpop.f32.mrb[0].mxu0
    %v3784 = vadd.f32 %v3651, %v3783
    %v3785 = vpop.f32.mrb[0].mxu0
    %v3786 = vpop.f32.mrb[0].mxu0
    %v3787 = vpop.f32.mrb[0].mxu0
    %3788 = vdwg.mxu0
    %v3789 = vmul.f32 %v3784, 0.2
    %v3790 = vmax.f32 %v3784, %v3789
    %v3791 = vpack.c.bf16 %v3790, %v3790
    %v3792 = vld [vmem:[%s25] sm:$0xf]
    %v3793 = vld [vmem:[%s25 + $0x4] sm:$0xf]
    %v3794 = vld [vmem:[%s25 + $0x8] sm:$0xf]
    %v3795 = vld [vmem:[%s25 + $0xc] sm:$0xf]
    %v3796 = vld [vmem:[#allocation26] sm:$0x1]
    %v3798 = vlaneseq
    %v3799 = vshrl.u32 %v3798, 7
    %v3800 = vsub.s32 0, %v3799
    %v3801 = vrot.slane %v3796, %v3800
    %v3807 = vunpack.c.l.b16 %v3792
    %v3808 = vunpack.c.l.b16 %v3793
    %v3809 = vunpack.c.l.b16 %v3794
    %v3810 = vunpack.c.l.b16 %v3795
    %v3811 = vpack.c.b16 %v3808, %v3807
    %v3812 = vpack.c.b16 %v3810, %v3809
    %v3816 = vsel %vm405, %v3791, 0
    %3818 = vmatprep.subr.bf16.mxu0 0
    %3819 = vmatpush1.bf16.msra.mxu0 %v3811
    %3820 = vmatprep.subr.bf16.mxu0 0
    %3821 = vmatpush1.bf16.msra.mxu0 %v3812
    %3822 = vmatprep.subr.bf16.mxu0 0
    %3823 = vmatpush1.bf16.msra.mxu0 0
    %3824 = vmatprep.subr.bf16.mxu0 0
    %3825 = vmatpush1.bf16.msra.mxu0 0
    %3826 = vmatprep.subr.bf16.mxu0 0
    %3827 = vmatpush1.bf16.msra.mxu0 0
    %3828 = vmatprep.subr.bf16.mxu0 0
    %3829 = vmatpush1.bf16.msra.mxu0 0
    %3830 = vmatprep.subr.bf16.mxu0 0
    %3831 = vmatpush1.bf16.msra.mxu0 0
    %3832 = vmatprep.subr.bf16.mxu0 0
    %3833 = vmatpush1.bf16.msra.mxu0 0
    %3834 = vmatprep.subr.bf16.mxu0 0
    %3835 = vmatpush1.bf16.msra.mxu0 0
    %3836 = vmatprep.subr.bf16.mxu0 0
    %3837 = vmatpush1.bf16.msra.mxu0 0
    %3838 = vmatprep.subr.bf16.mxu0 0
    %3839 = vmatpush1.bf16.msra.mxu0 0
    %3840 = vmatprep.subr.bf16.mxu0 0
    %3841 = vmatpush1.bf16.msra.mxu0 0
    %3842 = vmatprep.subr.bf16.mxu0 0
    %3843 = vmatpush1.bf16.msra.mxu0 0
    %3844 = vmatprep.subr.bf16.mxu0 0
    %3845 = vmatpush1.bf16.msra.mxu0 0
    %3846 = vmatprep.subr.bf16.mxu0 0
    %3847 = vmatpush1.bf16.msra.mxu0 0
    %3848 = vmatprep.subr.bf16.mxu0 0
    %3849 = vmatpush1.bf16.msra.mxu0 0
    %3850 = vmatprep.mubr.bf16.mxu0 0
    %3851 = vmatmul.mubr.bf16.gmra.mrb[0].mxu0 %v3816
    %v3852 = vpop.f32.mrb[0].mxu0
    %v3853 = vadd.f32 %v3801, %v3852
    %v3854 = vpop.f32.mrb[0].mxu0
    %v3855 = vpop.f32.mrb[0].mxu0
    %v3856 = vpop.f32.mrb[0].mxu0
    %3857 = vdwg.mxu0
    %vm3858 = vcmask 9216
    %3859 = vst.msk [vmem:[#allocation28] sm:$0x3] %vm3858, %v3853
    // Predicated region
    $region174: #{braingb_forward.1} parent=1 // pred_check
      _
    $region175: #{braingb_forward.1} parent=1 // pred_check_branch
      %3861 = sbr.rel (0) target = $region177
    $region176: #{braingb_forward.1} parent=1 // pred_region
      %s3863 = ssub.s32 32, 32
      %3864 = vsyncadd [#allocation4], %s3863
      %s3866 = sshll.u32 [#allocation28], 4
      %s3867 = int_to_ptr.vmem [resolvable:$true] %s3866
      %3869 = dma.vmem_to_hbm [thread:$0]  %s3867, 32, %s27, [#allocation4]
    $region177: #{braingb_forward.1} parent=1 // pred_fallthru
      _
    // Predicated region
    $region178: #{braingb_forward.1} parent=1 // pred_check
      _
    $region179: #{braingb_forward.1} parent=1 // pred_check_branch
      %3871 = sbr.rel (0) target = $region181
    $region180: #{braingb_forward.1} parent=1 // pred_region
      _
    $region181: #{braingb_forward.1} parent=1 // pred_fallthru
      _
    // Predicated region
    $region182: #{braingb_forward.1} parent=1 // pred_check
      _
    $region183: #{braingb_forward.1} parent=1 // pred_check_branch
      %3873 = sbr.rel (0) target = $region185
    $region184: #{braingb_forward.1} parent=1 // pred_region
      %3874 = dma.done [#allocation4], 32
    $region185: #{braingb_forward.1} parent=1 // pred_fallthru
      _
    // Predicated region
    $region186: #{braingb_forward.1} parent=1 // pred_check
      _
    $region187: #{braingb_forward.1} parent=1 // pred_check_branch
      %3876 = sbr.rel (0) target = $region189
    $region188: #{braingb_forward.1} parent=1 // pred_region
      _
    $region189: #{braingb_forward.1} parent=1 // pred_fallthru
      _
    %3877 = vsyncpa [#allocation3], 1
    %3878 = vsyncpa [#allocation6], 1
    %3879 = vsyncpa [#allocation9], 1
    %3880 = vsyncpa [#allocation12], 1
    %3881 = vsyncpa [#allocation15], 1
    %3882 = vsyncpa [#allocation18], 1
    %3883 = vsyncpa [#allocation21], 1
    %3884 = vsyncpa [#allocation24], 1
    %3885 = vsyncpa [#allocation27], 1
    %3886 = vsyncpa [#allocation4], 1

</llo_original>
